<compile_context>
chip_gen: v5e
topology: v5e:2x2
jax: 0.10.0
libtpu: 0.0.40
codegen_flags: <defaults>
</compile_context>

<pallas_src>
import math

import jax
import jax.numpy as jnp
from jax.experimental import pallas as pl
from jax.experimental.pallas import tpu as pltpu


def _round_up(x, m):
    return (x + m - 1) // m * m


# ----------------------------------------------------------------------------- kernel
def _trimodal_kernel(x1_ref, x2_ref, x3_ref,
                     wqkv_ref, bqkv_ref, wox_ref, woc_ref, bo_ref,
                     out_ref):
    Bb, S, Dp = x1_ref.shape
    M = Bb * S

    def qkv_proj(i, x_ref):
        # (Bb, S, Dp) -> (Bb*S, Dp): merging leading dims is layout-free for f32
        # when S % 8 == 0; cast to bf16 afterwards (MXU input only).
        xb = x_ref[...].reshape(M, Dp).astype(jnp.bfloat16)
        # One fused (M, Dp) @ (Dp, 3*Dp) bf16 MXU pass, f32 accumulate + f32 bias.
        qkv = (jnp.dot(xb, wqkv_ref[i], preferred_element_type=jnp.float32)
               + bqkv_ref[i][None, :])                       # (M, 3*Dp)
        # 1/sqrt(D) is pre-folded into the Q third of wqkv/bqkv by prepare_params.
        q = qkv[:, 0 * Dp:1 * Dp].reshape(Bb, S, Dp)
        k = qkv[:, 1 * Dp:2 * Dp].reshape(Bb, S, Dp)
        v = qkv[:, 2 * Dp:3 * Dp].reshape(Bb, S, Dp)
        return xb, q, k, v

    x1b, q1, k1, v1 = qkv_proj(0, x1_ref)
    x2b, q2, k2, v2 = qkv_proj(1, x2_ref)
    x3b, q3, k3, v3 = qkv_proj(2, x3_ref)

    def attend(q, k, v):
        # Transpose-free contraction over the last dims (no materialized k^T);
        # bf16 MXU inputs, f32 accumulate, f32 softmax.
        s = jnp.einsum('bqd,bkd->bqk',
                       q.astype(jnp.bfloat16), k.astype(jnp.bfloat16),
                       preferred_element_type=jnp.float32)
        m = jnp.max(s, axis=-1, keepdims=True)
        p = jnp.exp(s - m)
        p = p * pl.reciprocal(jnp.sum(p, axis=-1, keepdims=True), approx=True)
        # dropout(p) is an inference no-op.
        c = jnp.einsum('bqk,bkd->bqd',
                       p.astype(jnp.bfloat16), v.astype(jnp.bfloat16),
                       preferred_element_type=jnp.float32)
        return c.reshape(M, Dp)

    c1 = attend(q1, k2, v2)   # modality 1 attends to modality 2
    c2 = attend(q2, k3, v3)   # modality 2 attends to modality 3
    c3 = attend(q3, k1, v1)   # modality 3 attends to modality 1

    def out_proj(i, xb, c):
        # W_o(cat([x, c], -1)) == x @ Wo[:D] + c @ Wo[D:] + b  (identical algebra)
        o = (jnp.dot(xb, wox_ref[i], preferred_element_type=jnp.float32)
             + jnp.dot(c.astype(jnp.bfloat16), woc_ref[i],
                       preferred_element_type=jnp.float32)
             + bo_ref[i][None, :])
        return o.reshape(Bb, S, Dp).astype(out_ref.dtype)

    # torch `cat((o1, o2, o3), dim=1)` is materialized directly by the kernel.
    out_ref[:, 0 * S:1 * S, :] = out_proj(0, x1b, c1)
    out_ref[:, 1 * S:2 * S, :] = out_proj(1, x2b, c2)
    out_ref[:, 2 * S:3 * S, :] = out_proj(2, x3b, c3)


# ----------------------------------------------------------------------------- packing (one-time)
def _pad_last(a, target):
    pad = target - a.shape[-1]
    if pad == 0:
        return a
    cfg = [(0, 0)] * (a.ndim - 1) + [(0, pad)]
    return jnp.pad(a, cfg)


def _pad_last2(a, target):
    a = _pad_last(a, target)                       # pad feature (out) axis
    pad = target - a.shape[-2]
    if pad == 0:
        return a
    cfg = [(0, 0)] * (a.ndim - 2) + [(0, pad), (0, 0)]
    return jnp.pad(a, cfg)                         # pad feature (in) axis


def prepare_params(params):
    """One-time weight packing: pad to lane width (multiple of 128), fuse Q/K/V
    along the output axis, fold 1/sqrt(D) into the Q weights/bias, split the
    output projection, and cast all MXU operands to bf16 (biases stay f32).
    Call this ONCE; per-forward cost is then just the kernel."""
    wq, bq, wk, bk, wv, bv, wo, bo = params
    D = wq.shape[-1]
    Dp = _round_up(D, 128)
    scale = 1.0 / math.sqrt(D)

    wq_s, bq_s = wq * scale, bq * scale            # fold softmax scale into Q
    wqkv = jnp.concatenate(
        [_pad_last2(wq_s, Dp), _pad_last2(wk, Dp), _pad_last2(wv, Dp)],
        axis=-1).astype(jnp.bfloat16)                                   # (3, Dp, 3*Dp)
    bqkv = jnp.concatenate(
        [_pad_last(bq_s, Dp), _pad_last(bk, Dp), _pad_last(bv, Dp)],
        axis=-1).astype(jnp.float32)                                    # (3, 3*Dp)
    wox = _pad_last2(wo[:, :D, :], Dp).astype(jnp.bfloat16)             # (3, Dp, Dp)
    woc = _pad_last2(wo[:, D:, :], Dp).astype(jnp.bfloat16)             # (3, Dp, Dp)
    bo_p = _pad_last(bo, Dp).astype(jnp.float32)                        # (3, Dp)
    return {"wqkv": wqkv, "bqkv": bqkv, "wox": wox, "woc": woc, "bo": bo_p,
            "d": D, "d_pad": Dp}


# ----------------------------------------------------------------------------- wrapper
def _pick_block_b(B, S, target_rows=512):
    """Divisor of B for the batch block.  Keeps grid = B//Bb >= 2 whenever
    B >= 2 (megacore on v7x + DMA/compute overlap), prefers Bb*S that is a
    multiple of 256 (v6e/v7x MXU rows), then 128 (v5e), then the largest M."""
    max_bb = B if B < 2 else max(1, B // 2)
    cands = [c for c in range(1, max_bb + 1)
             if B % c == 0 and c * S <= max(target_rows, S)]
    if not cands:
        cands = [1]

    def score(c):
        m = c * S
        return (m % 256 == 0, m % 128 == 0, m)

    return max(cands, key=score)


def _vmem_limit_bytes(Bb, S, Dp, packed):
    w = ((packed["wqkv"].size + packed["wox"].size + packed["woc"].size) * 2
         + (packed["bqkv"].size + packed["bo"].size) * 4)      # single-buffered weights
    act = 3 * Bb * S * Dp * 4 * 2                              # 3 f32 inputs, double-buffered
    out = Bb * 3 * S * Dp * 4 * 2                              # f32 output, double-buffered
    live = 14 * Bb * S * Dp * 4                                # qkv slabs / q,k,v / contexts (rough)
    est = int((w + act + out + live) * 1.4)                    # ~30-40% headroom
    return max(32 << 20, min(est, 64 << 20))                   # stay <= v7x physical VMEM


def tri_modal_cross_attention(x1, x2, x3, packed, *, strip_padding=True):
    B, S, D = x1.shape
    Dp = packed["d_pad"]
    assert D == packed["d"], "feature dim mismatch with packed params"
    assert S % 8 == 0, ("seq_len must be a multiple of 8 (TPU sublane); "
                        "pad + mask keys upstream for ragged S")

    Bb = _pick_block_b(B, S)
    x1p, x2p, x3p = (_pad_last(x, Dp) for x in (x1, x2, x3))
    vmem_limit = _vmem_limit_bytes(Bb, S, Dp, packed)

    def build(single_buffer_weights):
        # Weights have a constant index_map: single-buffer them (DMA'd once).
        wmode = ({"pipeline_mode": pl.Buffered(1)} if single_buffer_weights else {})
        act_spec = pl.BlockSpec((Bb, S, Dp), lambda b: (b, 0, 0))
        in_specs = [
            act_spec, act_spec, act_spec,
            pl.BlockSpec((3, Dp, 3 * Dp), lambda b: (0, 0, 0), **wmode),
            pl.BlockSpec((3, 3 * Dp), lambda b: (0, 0), **wmode),
            pl.BlockSpec((3, Dp, Dp), lambda b: (0, 0, 0), **wmode),
            pl.BlockSpec((3, Dp, Dp), lambda b: (0, 0, 0), **wmode),
            pl.BlockSpec((3, Dp), lambda b: (0, 0), **wmode),
        ]
        out_spec = pl.BlockSpec((Bb, 3 * S, Dp), lambda b: (b, 0, 0))
        return pl.pallas_call(
            _trimodal_kernel,
            out_shape=jax.ShapeDtypeStruct((B, 3 * S, Dp), x1.dtype),
            grid_spec=pltpu.PrefetchScalarGridSpec(
                num_scalar_prefetch=0,
                grid=(B // Bb,),
                in_specs=in_specs,
                out_specs=out_spec,
            ),
            compiler_params=pltpu.CompilerParams(
                dimension_semantics=("parallel",),
                vmem_limit_bytes=vmem_limit,
            ),
        )

    args = (x1p, x2p, x3p, packed["wqkv"], packed["bqkv"],
            packed["wox"], packed["woc"], packed["bo"])
    try:
        out = build(True)(*args)
    except Exception:  # pragma: no cover -- JAX build without pipeline_mode support
        out = build(False)(*args)

    # The lane-padding strip is an extra HBM copy; skip it if the consumer can
    # take the Dp-padded slab (strip_padding=False).
    global_feature = out[:, :, :D] if (strip_padding and Dp != D) else out
    o1 = global_feature[:, 0 * S:1 * S, :]
    o2 = global_feature[:, 1 * S:2 * S, :]
    o3 = global_feature[:, 2 * S:3 * S, :]
    return o1, o2, o3, global_feature


# ----------------------------------------------------------------------------- params / reference
def init_params(key, D):
    """Deterministic synthetic init, shaped like the nn.Linear layers (weights (in,out))."""
    ks = jax.random.split(key, 8)
    bound = 1.0 / math.sqrt(D)
    bound2 = 1.0 / math.sqrt(2 * D)
    wq = jax.random.uniform(ks[0], (3, D, D), jnp.float32, -bound, bound)
    bq = jax.random.uniform(ks[1], (3, D), jnp.float32, -bound, bound)
    wk = jax.random.uniform(ks[2], (3, D, D), jnp.float32, -bound, bound)
    bk = jax.random.uniform(ks[3], (3, D), jnp.float32, -bound, bound)
    wv = jax.random.uniform(ks[4], (3, D, D), jnp.float32, -bound, bound)
    bv = jax.random.uniform(ks[5], (3, D), jnp.float32, -bound, bound)
    wo = jax.random.uniform(ks[6], (3, 2 * D, D), jnp.float32, -bound2, bound2)
    bo = jax.random.uniform(ks[7], (3, D), jnp.float32, -bound2, bound2)
    return wq, bq, wk, bk, wv, bv, wo, bo


def reference(x1, x2, x3, params):
    """Pure-JAX f32 reference mirroring the PyTorch forward (eval mode)."""
    wq, bq, wk, bk, wv, bv, wo, bo = params
    D = x1.shape[-1]

    def lin(x, w, b):
        return jnp.einsum("bsd,de->bse", x, w) + b

    def attn(q, k, v):
        s = jnp.einsum("bqd,bkd->bqk", q, k) / math.sqrt(D)
        p = jax.nn.softmax(s, axis=-1)
        return jnp.einsum("bqk,bkd->bqd", p, v)

    q1, k1, v1 = lin(x1, wq[0], bq[0]), lin(x1, wk[0], bk[0]), lin(x1, wv[0], bv[0])
    q2, k2, v2 = lin(x2, wq[1], bq[1]), lin(x2, wk[1], bk[1]), lin(x2, wv[1], bv[1])
    q3, k3, v3 = lin(x3, wq[2], bq[2]), lin(x3, wk[2], bk[2]), lin(x3, wv[2], bv[2])
    c1, c2, c3 = attn(q1, k2, v2), attn(q2, k3, v3), attn(q3, k1, v1)
    o1 = lin(jnp.concatenate([x1, c1], -1), wo[0], bo[0])
    o2 = lin(jnp.concatenate([x2, c2], -1), wo[1], bo[1])
    o3 = lin(jnp.concatenate([x3, c3], -1), wo[2], bo[2])
    return o1, o2, o3, jnp.concatenate([o1, o2, o3], axis=1)


# ----------------------------------------------------------------------------- demo
if __name__ == "__main__":
    B, S, D = 2, 8, 32
    key = jax.random.PRNGKey(0)
    kx1, kx2, kx3, kp = jax.random.split(key, 4)
    x1 = jax.random.normal(kx1, (B, S, D), jnp.float32)
    x2 = jax.random.normal(kx2, (B, S, D), jnp.float32)
    x3 = jax.random.normal(kx3, (B, S, D), jnp.float32)
    params = init_params(kp, D)

    packed = prepare_params(params)     # one-time packing, hoisted out of the forward
    outs = jax.block_until_ready(tri_modal_cross_attention(x1, x2, x3, packed))

    refs = reference(x1, x2, x3, params)
    for o, r in zip(outs, refs):
        assert o.shape == r.shape, (o.shape, r.shape)
        err = float(jnp.max(jnp.abs(o - r)))
        ref_mag = float(jnp.max(jnp.abs(r)))
        # bf16 MXU inputs + approx-reciprocal softmax vs. f32 reference:
        # ~1e-2-class absolute error expected; tolerance leaves several-x margin.
        assert err <= 2e-2 * (1.0 + ref_mag), (err, ref_mag)

    print("KERNEL_OK")
</pallas_src>

<mosaic_0001>
module attributes {stable_mosaic.version = 11 : i64} {
  func.func @_trimodal_kernel(%arg0: i32, %arg1: memref<1x8x128xf32, #tpu.memory_space<vmem>>, %arg2: memref<1x8x128xf32, #tpu.memory_space<vmem>>, %arg3: memref<1x8x128xf32, #tpu.memory_space<vmem>>, %arg4: memref<3x128x384xbf16, #tpu.memory_space<vmem>>, %arg5: memref<3x384xf32, #tpu.memory_space<vmem>>, %arg6: memref<3x128x128xbf16, #tpu.memory_space<vmem>>, %arg7: memref<3x128x128xbf16, #tpu.memory_space<vmem>>, %arg8: memref<3x128xf32, #tpu.memory_space<vmem>>, %arg9: memref<1x24x128xf32, #tpu.memory_space<vmem>>) attributes {dimension_semantics = [#tpu.dimension_semantics<parallel>], iteration_bounds = array<i64: 2>, scalar_prefetch = 0 : i64, scratch_operands = 0 : i64, tpu.core_type = #tpu.core_type<tc>, window_params = [{transform_indices = @transform_0, window_bounds = array<i64: 1, 8, 128>}, {transform_indices = @transform_1, window_bounds = array<i64: 1, 8, 128>}, {transform_indices = @transform_2, window_bounds = array<i64: 1, 8, 128>}, {pipeline_mode = #tpu.pipeline_mode<synchronous>, transform_indices = @transform_3, window_bounds = array<i64: 3, 128, 384>}, {pipeline_mode = #tpu.pipeline_mode<synchronous>, transform_indices = @transform_4, window_bounds = array<i64: 3, 384>}, {pipeline_mode = #tpu.pipeline_mode<synchronous>, transform_indices = @transform_5, window_bounds = array<i64: 3, 128, 128>}, {pipeline_mode = #tpu.pipeline_mode<synchronous>, transform_indices = @transform_6, window_bounds = array<i64: 3, 128, 128>}, {pipeline_mode = #tpu.pipeline_mode<synchronous>, transform_indices = @transform_7, window_bounds = array<i64: 3, 128>}, {transform_indices = @transform_8, window_bounds = array<i64: 1, 24, 128>}]} {
    %c0 = arith.constant 0 : index
    %c0_0 = arith.constant 0 : index
    %c0_1 = arith.constant 0 : index
    %0 = vector.load %arg1[%c0, %c0_0, %c0_1] : memref<1x8x128xf32, #tpu.memory_space<vmem>>, vector<1x8x128xf32>
    %1 = vector.shape_cast %0 : vector<1x8x128xf32> to vector<8x128xf32>
    %2 = arith.truncf %1 : vector<8x128xf32> to vector<8x128xbf16>
    %c0_2 = arith.constant 0 : index
    %c0_3 = arith.constant 0 : index
    %c0_4 = arith.constant 0 : index
    %3 = vector.load %arg4[%c0_2, %c0_3, %c0_4] : memref<3x128x384xbf16, #tpu.memory_space<vmem>>, vector<1x128x384xbf16>
    %4 = vector.shape_cast %3 : vector<1x128x384xbf16> to vector<128x384xbf16>
    %cst = arith.constant dense<0.000000e+00> : vector<8x384xf32>
    %5 = tpu.matmul %2, %4, %cst {dimension_numbers = #tpu.dot_dimension_numbers<[1], [0], [0], [1], [0, 0, 1, 1], [], []>} : vector<8x128xbf16>, vector<128x384xbf16>, vector<8x384xf32> -> vector<8x384xf32>
    %c0_5 = arith.constant 0 : index
    %c0_6 = arith.constant 0 : index
    %6 = vector.load %arg5[%c0_5, %c0_6] : memref<3x384xf32, #tpu.memory_space<vmem>>, vector<1x384xf32>
    %7 = vector.shape_cast %6 : vector<1x384xf32> to vector<384xf32>
    %8 = vector.shape_cast %7 : vector<384xf32> to vector<1x384xf32>
    %9 = vector.broadcast %8 : vector<1x384xf32> to vector<8x384xf32>
    %10 = arith.addf %5, %9 : vector<8x384xf32>
    %11 = vector.extract_strided_slice %10 {offsets = [0, 0], sizes = [8, 128], strides = [1, 1]} : vector<8x384xf32> to vector<8x128xf32>
    %12 = vector.shape_cast %11 : vector<8x128xf32> to vector<1x8x128xf32>
    %13 = vector.extract_strided_slice %10 {offsets = [0, 128], sizes = [8, 128], strides = [1, 1]} : vector<8x384xf32> to vector<8x128xf32>
    %14 = vector.shape_cast %13 : vector<8x128xf32> to vector<1x8x128xf32>
    %15 = vector.extract_strided_slice %10 {offsets = [0, 256], sizes = [8, 128], strides = [1, 1]} : vector<8x384xf32> to vector<8x128xf32>
    %16 = vector.shape_cast %15 : vector<8x128xf32> to vector<1x8x128xf32>
    %c0_7 = arith.constant 0 : index
    %c0_8 = arith.constant 0 : index
    %c0_9 = arith.constant 0 : index
    %17 = vector.load %arg2[%c0_7, %c0_8, %c0_9] : memref<1x8x128xf32, #tpu.memory_space<vmem>>, vector<1x8x128xf32>
    %18 = vector.shape_cast %17 : vector<1x8x128xf32> to vector<8x128xf32>
    %19 = arith.truncf %18 : vector<8x128xf32> to vector<8x128xbf16>
    %c1 = arith.constant 1 : index
    %c0_10 = arith.constant 0 : index
    %c0_11 = arith.constant 0 : index
    %20 = vector.load %arg4[%c1, %c0_10, %c0_11] : memref<3x128x384xbf16, #tpu.memory_space<vmem>>, vector<1x128x384xbf16>
    %21 = vector.shape_cast %20 : vector<1x128x384xbf16> to vector<128x384xbf16>
    %cst_12 = arith.constant dense<0.000000e+00> : vector<8x384xf32>
    %22 = tpu.matmul %19, %21, %cst_12 {dimension_numbers = #tpu.dot_dimension_numbers<[1], [0], [0], [1], [0, 0, 1, 1], [], []>} : vector<8x128xbf16>, vector<128x384xbf16>, vector<8x384xf32> -> vector<8x384xf32>
    %c1_13 = arith.constant 1 : index
    %c0_14 = arith.constant 0 : index
    %23 = vector.load %arg5[%c1_13, %c0_14] : memref<3x384xf32, #tpu.memory_space<vmem>>, vector<1x384xf32>
    %24 = vector.shape_cast %23 : vector<1x384xf32> to vector<384xf32>
    %25 = vector.shape_cast %24 : vector<384xf32> to vector<1x384xf32>
    %26 = vector.broadcast %25 : vector<1x384xf32> to vector<8x384xf32>
    %27 = arith.addf %22, %26 : vector<8x384xf32>
    %28 = vector.extract_strided_slice %27 {offsets = [0, 0], sizes = [8, 128], strides = [1, 1]} : vector<8x384xf32> to vector<8x128xf32>
    %29 = vector.shape_cast %28 : vector<8x128xf32> to vector<1x8x128xf32>
    %30 = vector.extract_strided_slice %27 {offsets = [0, 128], sizes = [8, 128], strides = [1, 1]} : vector<8x384xf32> to vector<8x128xf32>
    %31 = vector.shape_cast %30 : vector<8x128xf32> to vector<1x8x128xf32>
    %32 = vector.extract_strided_slice %27 {offsets = [0, 256], sizes = [8, 128], strides = [1, 1]} : vector<8x384xf32> to vector<8x128xf32>
    %33 = vector.shape_cast %32 : vector<8x128xf32> to vector<1x8x128xf32>
    %c0_15 = arith.constant 0 : index
    %c0_16 = arith.constant 0 : index
    %c0_17 = arith.constant 0 : index
    %34 = vector.load %arg3[%c0_15, %c0_16, %c0_17] : memref<1x8x128xf32, #tpu.memory_space<vmem>>, vector<1x8x128xf32>
    %35 = vector.shape_cast %34 : vector<1x8x128xf32> to vector<8x128xf32>
    %36 = arith.truncf %35 : vector<8x128xf32> to vector<8x128xbf16>
    %c2 = arith.constant 2 : index
    %c0_18 = arith.constant 0 : index
    %c0_19 = arith.constant 0 : index
    %37 = vector.load %arg4[%c2, %c0_18, %c0_19] : memref<3x128x384xbf16, #tpu.memory_space<vmem>>, vector<1x128x384xbf16>
    %38 = vector.shape_cast %37 : vector<1x128x384xbf16> to vector<128x384xbf16>
    %cst_20 = arith.constant dense<0.000000e+00> : vector<8x384xf32>
    %39 = tpu.matmul %36, %38, %cst_20 {dimension_numbers = #tpu.dot_dimension_numbers<[1], [0], [0], [1], [0, 0, 1, 1], [], []>} : vector<8x128xbf16>, vector<128x384xbf16>, vector<8x384xf32> -> vector<8x384xf32>
    %c2_21 = arith.constant 2 : index
    %c0_22 = arith.constant 0 : index
    %40 = vector.load %arg5[%c2_21, %c0_22] : memref<3x384xf32, #tpu.memory_space<vmem>>, vector<1x384xf32>
    %41 = vector.shape_cast %40 : vector<1x384xf32> to vector<384xf32>
    %42 = vector.shape_cast %41 : vector<384xf32> to vector<1x384xf32>
    %43 = vector.broadcast %42 : vector<1x384xf32> to vector<8x384xf32>
    %44 = arith.addf %39, %43 : vector<8x384xf32>
    %45 = vector.extract_strided_slice %44 {offsets = [0, 0], sizes = [8, 128], strides = [1, 1]} : vector<8x384xf32> to vector<8x128xf32>
    %46 = vector.shape_cast %45 : vector<8x128xf32> to vector<1x8x128xf32>
    %47 = vector.extract_strided_slice %44 {offsets = [0, 128], sizes = [8, 128], strides = [1, 1]} : vector<8x384xf32> to vector<8x128xf32>
    %48 = vector.shape_cast %47 : vector<8x128xf32> to vector<1x8x128xf32>
    %49 = vector.extract_strided_slice %44 {offsets = [0, 256], sizes = [8, 128], strides = [1, 1]} : vector<8x384xf32> to vector<8x128xf32>
    %50 = vector.shape_cast %49 : vector<8x128xf32> to vector<1x8x128xf32>
    %51 = arith.truncf %12 : vector<1x8x128xf32> to vector<1x8x128xbf16>
    %52 = arith.truncf %31 : vector<1x8x128xf32> to vector<1x8x128xbf16>
    "tpu.trace_start"() <{level = 10 : i32, message = "bqd,bkd->bqk"}> : () -> ()
    %cst_23 = arith.constant dense<0.000000e+00> : vector<1x8x8xf32>
    %53 = tpu.matmul %51, %52, %cst_23 {dimension_numbers = #tpu.dot_dimension_numbers<[2], [2], [1], [1], [0, 0, 0, 1, 1, 1], [0], [0]>} : vector<1x8x128xbf16>, vector<1x8x128xbf16>, vector<1x8x8xf32> -> vector<1x8x8xf32>
    "tpu.trace_stop"() : () -> ()
    %cst_24 = arith.constant dense<0xFF800000> : vector<1x8xf32>
    %54 = vector.multi_reduction <maximumf>, %53, %cst_24 [2] : vector<1x8x8xf32> to vector<1x8xf32>
    %55 = vector.shape_cast %54 : vector<1x8xf32> to vector<1x8x1xf32>
    %56 = vector.broadcast %55 : vector<1x8x1xf32> to vector<1x8x8xf32>
    %57 = arith.subf %53, %56 : vector<1x8x8xf32>
    %58 = math.exp %57 : vector<1x8x8xf32>
    %cst_25 = arith.constant dense<0.000000e+00> : vector<1x8xf32>
    %59 = vector.multi_reduction <add>, %58, %cst_25 [2] : vector<1x8x8xf32> to vector<1x8xf32>
    %60 = vector.shape_cast %59 : vector<1x8xf32> to vector<1x8x1xf32>
    %61 = tpu.reciprocal %60 {approx = true} : vector<1x8x1xf32> -> vector<1x8x1xf32>
    %62 = vector.broadcast %61 : vector<1x8x1xf32> to vector<1x8x8xf32>
    %63 = arith.mulf %58, %62 : vector<1x8x8xf32>
    %64 = arith.truncf %63 : vector<1x8x8xf32> to vector<1x8x8xbf16>
    %65 = arith.truncf %33 : vector<1x8x128xf32> to vector<1x8x128xbf16>
    "tpu.trace_start"() <{level = 10 : i32, message = "bqk,bkd->bqd"}> : () -> ()
    %cst_26 = arith.constant dense<0.000000e+00> : vector<1x8x128xf32>
    %66 = tpu.matmul %64, %65, %cst_26 {dimension_numbers = #tpu.dot_dimension_numbers<[2], [1], [1], [2], [0, 0, 0, 1, 1, 2], [0], [0]>} : vector<1x8x8xbf16>, vector<1x8x128xbf16>, vector<1x8x128xf32> -> vector<1x8x128xf32>
    "tpu.trace_stop"() : () -> ()
    %67 = vector.shape_cast %66 : vector<1x8x128xf32> to vector<8x128xf32>
    %68 = arith.truncf %29 : vector<1x8x128xf32> to vector<1x8x128xbf16>
    %69 = arith.truncf %48 : vector<1x8x128xf32> to vector<1x8x128xbf16>
    "tpu.trace_start"() <{level = 10 : i32, message = "bqd,bkd->bqk"}> : () -> ()
    %cst_27 = arith.constant dense<0.000000e+00> : vector<1x8x8xf32>
    %70 = tpu.matmul %68, %69, %cst_27 {dimension_numbers = #tpu.dot_dimension_numbers<[2], [2], [1], [1], [0, 0, 0, 1, 1, 1], [0], [0]>} : vector<1x8x128xbf16>, vector<1x8x128xbf16>, vector<1x8x8xf32> -> vector<1x8x8xf32>
    "tpu.trace_stop"() : () -> ()
    %cst_28 = arith.constant dense<0xFF800000> : vector<1x8xf32>
    %71 = vector.multi_reduction <maximumf>, %70, %cst_28 [2] : vector<1x8x8xf32> to vector<1x8xf32>
    %72 = vector.shape_cast %71 : vector<1x8xf32> to vector<1x8x1xf32>
    %73 = vector.broadcast %72 : vector<1x8x1xf32> to vector<1x8x8xf32>
    %74 = arith.subf %70, %73 : vector<1x8x8xf32>
    %75 = math.exp %74 : vector<1x8x8xf32>
    %cst_29 = arith.constant dense<0.000000e+00> : vector<1x8xf32>
    %76 = vector.multi_reduction <add>, %75, %cst_29 [2] : vector<1x8x8xf32> to vector<1x8xf32>
    %77 = vector.shape_cast %76 : vector<1x8xf32> to vector<1x8x1xf32>
    %78 = tpu.reciprocal %77 {approx = true} : vector<1x8x1xf32> -> vector<1x8x1xf32>
    %79 = vector.broadcast %78 : vector<1x8x1xf32> to vector<1x8x8xf32>
    %80 = arith.mulf %75, %79 : vector<1x8x8xf32>
    %81 = arith.truncf %80 : vector<1x8x8xf32> to vector<1x8x8xbf16>
    %82 = arith.truncf %50 : vector<1x8x128xf32> to vector<1x8x128xbf16>
    "tpu.trace_start"() <{level = 10 : i32, message = "bqk,bkd->bqd"}> : () -> ()
    %cst_30 = arith.constant dense<0.000000e+00> : vector<1x8x128xf32>
    %83 = tpu.matmul %81, %82, %cst_30 {dimension_numbers = #tpu.dot_dimension_numbers<[2], [1], [1], [2], [0, 0, 0, 1, 1, 2], [0], [0]>} : vector<1x8x8xbf16>, vector<1x8x128xbf16>, vector<1x8x128xf32> -> vector<1x8x128xf32>
    "tpu.trace_stop"() : () -> ()
    %84 = vector.shape_cast %83 : vector<1x8x128xf32> to vector<8x128xf32>
    %85 = arith.truncf %46 : vector<1x8x128xf32> to vector<1x8x128xbf16>
    %86 = arith.truncf %14 : vector<1x8x128xf32> to vector<1x8x128xbf16>
    "tpu.trace_start"() <{level = 10 : i32, message = "bqd,bkd->bqk"}> : () -> ()
    %cst_31 = arith.constant dense<0.000000e+00> : vector<1x8x8xf32>
    %87 = tpu.matmul %85, %86, %cst_31 {dimension_numbers = #tpu.dot_dimension_numbers<[2], [2], [1], [1], [0, 0, 0, 1, 1, 1], [0], [0]>} : vector<1x8x128xbf16>, vector<1x8x128xbf16>, vector<1x8x8xf32> -> vector<1x8x8xf32>
    "tpu.trace_stop"() : () -> ()
    %cst_32 = arith.constant dense<0xFF800000> : vector<1x8xf32>
    %88 = vector.multi_reduction <maximumf>, %87, %cst_32 [2] : vector<1x8x8xf32> to vector<1x8xf32>
    %89 = vector.shape_cast %88 : vector<1x8xf32> to vector<1x8x1xf32>
    %90 = vector.broadcast %89 : vector<1x8x1xf32> to vector<1x8x8xf32>
    %91 = arith.subf %87, %90 : vector<1x8x8xf32>
    %92 = math.exp %91 : vector<1x8x8xf32>
    %cst_33 = arith.constant dense<0.000000e+00> : vector<1x8xf32>
    %93 = vector.multi_reduction <add>, %92, %cst_33 [2] : vector<1x8x8xf32> to vector<1x8xf32>
    %94 = vector.shape_cast %93 : vector<1x8xf32> to vector<1x8x1xf32>
    %95 = tpu.reciprocal %94 {approx = true} : vector<1x8x1xf32> -> vector<1x8x1xf32>
    %96 = vector.broadcast %95 : vector<1x8x1xf32> to vector<1x8x8xf32>
    %97 = arith.mulf %92, %96 : vector<1x8x8xf32>
    %98 = arith.truncf %97 : vector<1x8x8xf32> to vector<1x8x8xbf16>
    %99 = arith.truncf %16 : vector<1x8x128xf32> to vector<1x8x128xbf16>
    "tpu.trace_start"() <{level = 10 : i32, message = "bqk,bkd->bqd"}> : () -> ()
    %cst_34 = arith.constant dense<0.000000e+00> : vector<1x8x128xf32>
    %100 = tpu.matmul %98, %99, %cst_34 {dimension_numbers = #tpu.dot_dimension_numbers<[2], [1], [1], [2], [0, 0, 0, 1, 1, 2], [0], [0]>} : vector<1x8x8xbf16>, vector<1x8x128xbf16>, vector<1x8x128xf32> -> vector<1x8x128xf32>
    "tpu.trace_stop"() : () -> ()
    %101 = vector.shape_cast %100 : vector<1x8x128xf32> to vector<8x128xf32>
    %c0_35 = arith.constant 0 : index
    %c0_36 = arith.constant 0 : index
    %c0_37 = arith.constant 0 : index
    %102 = vector.load %arg6[%c0_35, %c0_36, %c0_37] : memref<3x128x128xbf16, #tpu.memory_space<vmem>>, vector<1x128x128xbf16>
    %103 = vector.shape_cast %102 : vector<1x128x128xbf16> to vector<128x128xbf16>
    %cst_38 = arith.constant dense<0.000000e+00> : vector<8x128xf32>
    %104 = tpu.matmul %2, %103, %cst_38 {dimension_numbers = #tpu.dot_dimension_numbers<[1], [0], [0], [1], [0, 0, 1, 1], [], []>} : vector<8x128xbf16>, vector<128x128xbf16>, vector<8x128xf32> -> vector<8x128xf32>
    %105 = arith.truncf %67 : vector<8x128xf32> to vector<8x128xbf16>
    %c0_39 = arith.constant 0 : index
    %c0_40 = arith.constant 0 : index
    %c0_41 = arith.constant 0 : index
    %106 = vector.load %arg7[%c0_39, %c0_40, %c0_41] : memref<3x128x128xbf16, #tpu.memory_space<vmem>>, vector<1x128x128xbf16>
    %107 = vector.shape_cast %106 : vector<1x128x128xbf16> to vector<128x128xbf16>
    %cst_42 = arith.constant dense<0.000000e+00> : vector<8x128xf32>
    %108 = tpu.matmul %105, %107, %cst_42 {dimension_numbers = #tpu.dot_dimension_numbers<[1], [0], [0], [1], [0, 0, 1, 1], [], []>} : vector<8x128xbf16>, vector<128x128xbf16>, vector<8x128xf32> -> vector<8x128xf32>
    %109 = arith.addf %104, %108 : vector<8x128xf32>
    %c0_43 = arith.constant 0 : index
    %c0_44 = arith.constant 0 : index
    %110 = vector.load %arg8[%c0_43, %c0_44] : memref<3x128xf32, #tpu.memory_space<vmem>>, vector<1x128xf32>
    %111 = vector.shape_cast %110 : vector<1x128xf32> to vector<128xf32>
    %112 = vector.shape_cast %111 : vector<128xf32> to vector<1x128xf32>
    %113 = vector.broadcast %112 : vector<1x128xf32> to vector<8x128xf32>
    %114 = arith.addf %109, %113 : vector<8x128xf32>
    %115 = vector.shape_cast %114 : vector<8x128xf32> to vector<1x8x128xf32>
    %c0_45 = arith.constant 0 : index
    %c0_46 = arith.constant 0 : index
    %c0_47 = arith.constant 0 : index
    %116 = vector.load %arg9[%c0_45, %c0_46, %c0_47] : memref<1x24x128xf32, #tpu.memory_space<vmem>>, vector<1x8x128xf32>
    tpu.vector_store %arg9[%c0_45, %c0_46, %c0_47], %115 {strides = array<i32>} : memref<1x24x128xf32, #tpu.memory_space<vmem>>, vector<1x8x128xf32>,
    %c1_48 = arith.constant 1 : index
    %c0_49 = arith.constant 0 : index
    %c0_50 = arith.constant 0 : index
    %117 = vector.load %arg6[%c1_48, %c0_49, %c0_50] : memref<3x128x128xbf16, #tpu.memory_space<vmem>>, vector<1x128x128xbf16>
    %118 = vector.shape_cast %117 : vector<1x128x128xbf16> to vector<128x128xbf16>
    %cst_51 = arith.constant dense<0.000000e+00> : vector<8x128xf32>
    %119 = tpu.matmul %19, %118, %cst_51 {dimension_numbers = #tpu.dot_dimension_numbers<[1], [0], [0], [1], [0, 0, 1, 1], [], []>} : vector<8x128xbf16>, vector<128x128xbf16>, vector<8x128xf32> -> vector<8x128xf32>
    %120 = arith.truncf %84 : vector<8x128xf32> to vector<8x128xbf16>
    %c1_52 = arith.constant 1 : index
    %c0_53 = arith.constant 0 : index
    %c0_54 = arith.constant 0 : index
    %121 = vector.load %arg7[%c1_52, %c0_53, %c0_54] : memref<3x128x128xbf16, #tpu.memory_space<vmem>>, vector<1x128x128xbf16>
    %122 = vector.shape_cast %121 : vector<1x128x128xbf16> to vector<128x128xbf16>
    %cst_55 = arith.constant dense<0.000000e+00> : vector<8x128xf32>
    %123 = tpu.matmul %120, %122, %cst_55 {dimension_numbers = #tpu.dot_dimension_numbers<[1], [0], [0], [1], [0, 0, 1, 1], [], []>} : vector<8x128xbf16>, vector<128x128xbf16>, vector<8x128xf32> -> vector<8x128xf32>
    %124 = arith.addf %119, %123 : vector<8x128xf32>
    %c1_56 = arith.constant 1 : index
    %c0_57 = arith.constant 0 : index
    %125 = vector.load %arg8[%c1_56, %c0_57] : memref<3x128xf32, #tpu.memory_space<vmem>>, vector<1x128xf32>
    %126 = vector.shape_cast %125 : vector<1x128xf32> to vector<128xf32>
    %127 = vector.shape_cast %126 : vector<128xf32> to vector<1x128xf32>
    %128 = vector.broadcast %127 : vector<1x128xf32> to vector<8x128xf32>
    %129 = arith.addf %124, %128 : vector<8x128xf32>
    %130 = vector.shape_cast %129 : vector<8x128xf32> to vector<1x8x128xf32>
    %c0_58 = arith.constant 0 : index
    %c8 = arith.constant 8 : index
    %c0_59 = arith.constant 0 : index
    %131 = vector.load %arg9[%c0_58, %c8, %c0_59] : memref<1x24x128xf32, #tpu.memory_space<vmem>>, vector<1x8x128xf32>
    tpu.vector_store %arg9[%c0_58, %c8, %c0_59], %130 {strides = array<i32>} : memref<1x24x128xf32, #tpu.memory_space<vmem>>, vector<1x8x128xf32>,
    %c2_60 = arith.constant 2 : index
    %c0_61 = arith.constant 0 : index
    %c0_62 = arith.constant 0 : index
    %132 = vector.load %arg6[%c2_60, %c0_61, %c0_62] : memref<3x128x128xbf16, #tpu.memory_space<vmem>>, vector<1x128x128xbf16>
    %133 = vector.shape_cast %132 : vector<1x128x128xbf16> to vector<128x128xbf16>
    %cst_63 = arith.constant dense<0.000000e+00> : vector<8x128xf32>
    %134 = tpu.matmul %36, %133, %cst_63 {dimension_numbers = #tpu.dot_dimension_numbers<[1], [0], [0], [1], [0, 0, 1, 1], [], []>} : vector<8x128xbf16>, vector<128x128xbf16>, vector<8x128xf32> -> vector<8x128xf32>
    %135 = arith.truncf %101 : vector<8x128xf32> to vector<8x128xbf16>
    %c2_64 = arith.constant 2 : index
    %c0_65 = arith.constant 0 : index
    %c0_66 = arith.constant 0 : index
    %136 = vector.load %arg7[%c2_64, %c0_65, %c0_66] : memref<3x128x128xbf16, #tpu.memory_space<vmem>>, vector<1x128x128xbf16>
    %137 = vector.shape_cast %136 : vector<1x128x128xbf16> to vector<128x128xbf16>
    %cst_67 = arith.constant dense<0.000000e+00> : vector<8x128xf32>
    %138 = tpu.matmul %135, %137, %cst_67 {dimension_numbers = #tpu.dot_dimension_numbers<[1], [0], [0], [1], [0, 0, 1, 1], [], []>} : vector<8x128xbf16>, vector<128x128xbf16>, vector<8x128xf32> -> vector<8x128xf32>
    %139 = arith.addf %134, %138 : vector<8x128xf32>
    %c2_68 = arith.constant 2 : index
    %c0_69 = arith.constant 0 : index
    %140 = vector.load %arg8[%c2_68, %c0_69] : memref<3x128xf32, #tpu.memory_space<vmem>>, vector<1x128xf32>
    %141 = vector.shape_cast %140 : vector<1x128xf32> to vector<128xf32>
    %142 = vector.shape_cast %141 : vector<128xf32> to vector<1x128xf32>
    %143 = vector.broadcast %142 : vector<1x128xf32> to vector<8x128xf32>
    %144 = arith.addf %139, %143 : vector<8x128xf32>
    %145 = vector.shape_cast %144 : vector<8x128xf32> to vector<1x8x128xf32>
    %c0_70 = arith.constant 0 : index
    %c16 = arith.constant 16 : index
    %c0_71 = arith.constant 0 : index
    %146 = vector.load %arg9[%c0_70, %c16, %c0_71] : memref<1x24x128xf32, #tpu.memory_space<vmem>>, vector<1x8x128xf32>
    tpu.vector_store %arg9[%c0_70, %c16, %c0_71], %145 {strides = array<i32>} : memref<1x24x128xf32, #tpu.memory_space<vmem>>, vector<1x8x128xf32>,
    return
  }
  func.func @transform_0(%arg0: i32) -> (i32, i32, i32) {
    %c0_i32 = arith.constant 0 : i32
    %c0_i32_0 = arith.constant 0 : i32
    %c0_i32_1 = arith.constant 0 : i32
    return %arg0, %c0_i32, %c0_i32_0 : i32, i32, i32
  }
  func.func @transform_1(%arg0: i32) -> (i32, i32, i32) {
    %c0_i32 = arith.constant 0 : i32
    %c0_i32_0 = arith.constant 0 : i32
    %c0_i32_1 = arith.constant 0 : i32
    return %arg0, %c0_i32, %c0_i32_0 : i32, i32, i32
  }
  func.func @transform_2(%arg0: i32) -> (i32, i32, i32) {
    %c0_i32 = arith.constant 0 : i32
    %c0_i32_0 = arith.constant 0 : i32
    %c0_i32_1 = arith.constant 0 : i32
    return %arg0, %c0_i32, %c0_i32_0 : i32, i32, i32
  }
  func.func @transform_3(%arg0: i32) -> (i32, i32, i32) {
    %c0_i32 = arith.constant 0 : i32
    %c0_i32_0 = arith.constant 0 : i32
    %c0_i32_1 = arith.constant 0 : i32
    %c0_i32_2 = arith.constant 0 : i32
    return %c0_i32, %c0_i32_0, %c0_i32_1 : i32, i32, i32
  }
  func.func @transform_4(%arg0: i32) -> (i32, i32) {
    %c0_i32 = arith.constant 0 : i32
    %c0_i32_0 = arith.constant 0 : i32
    %c0_i32_1 = arith.constant 0 : i32
    return %c0_i32, %c0_i32_0 : i32, i32
  }
  func.func @transform_5(%arg0: i32) -> (i32, i32, i32) {
    %c0_i32 = arith.constant 0 : i32
    %c0_i32_0 = arith.constant 0 : i32
    %c0_i32_1 = arith.constant 0 : i32
    %c0_i32_2 = arith.constant 0 : i32
    return %c0_i32, %c0_i32_0, %c0_i32_1 : i32, i32, i32
  }
  func.func @transform_6(%arg0: i32) -> (i32, i32, i32) {
    %c0_i32 = arith.constant 0 : i32
    %c0_i32_0 = arith.constant 0 : i32
    %c0_i32_1 = arith.constant 0 : i32
    %c0_i32_2 = arith.constant 0 : i32
    return %c0_i32, %c0_i32_0, %c0_i32_1 : i32, i32, i32
  }
  func.func @transform_7(%arg0: i32) -> (i32, i32) {
    %c0_i32 = arith.constant 0 : i32
    %c0_i32_0 = arith.constant 0 : i32
    %c0_i32_1 = arith.constant 0 : i32
    return %c0_i32, %c0_i32_0 : i32, i32
  }
  func.func @transform_8(%arg0: i32) -> (i32, i32, i32) {
    %c0_i32 = arith.constant 0 : i32
    %c0_i32_0 = arith.constant 0 : i32
    %c0_i32_1 = arith.constant 0 : i32
    return %arg0, %c0_i32, %c0_i32_0 : i32, i32, i32
  }
}

module attributes {stable_mosaic.version = 11 : i64} {
  func.func @_trimodal_kernel(%arg0: i32, %arg1: memref<1x8x128xf32, #tpu.memory_space<vmem>>, %arg2: memref<1x8x128xf32, #tpu.memory_space<vmem>>, %arg3: memref<1x8x128xf32, #tpu.memory_space<vmem>>, %arg4: memref<3x128x384xbf16, #tpu.memory_space<vmem>>, %arg5: memref<3x384xf32, #tpu.memory_space<vmem>>, %arg6: memref<3x128x128xbf16, #tpu.memory_space<vmem>>, %arg7: memref<3x128x128xbf16, #tpu.memory_space<vmem>>, %arg8: memref<3x128xf32, #tpu.memory_space<vmem>>, %arg9: memref<1x24x128xf32, #tpu.memory_space<vmem>>) attributes {dimension_semantics = [#tpu.dimension_semantics<parallel>], iteration_bounds = array<i64: 2>, scalar_prefetch = 0 : i64, scratch_operands = 0 : i64, tpu.core_type = #tpu.core_type<tc>, window_params = [{transform_indices = @transform_0, window_bounds = array<i64: 1, 8, 128>}, {transform_indices = @transform_1, window_bounds = array<i64: 1, 8, 128>}, {transform_indices = @transform_2, window_bounds = array<i64: 1, 8, 128>}, {pipeline_mode = #tpu.pipeline_mode<synchronous>, transform_indices = @transform_3, window_bounds = array<i64: 3, 128, 384>}, {pipeline_mode = #tpu.pipeline_mode<synchronous>, transform_indices = @transform_4, window_bounds = array<i64: 3, 384>}, {pipeline_mode = #tpu.pipeline_mode<synchronous>, transform_indices = @transform_5, window_bounds = array<i64: 3, 128, 128>}, {pipeline_mode = #tpu.pipeline_mode<synchronous>, transform_indices = @transform_6, window_bounds = array<i64: 3, 128, 128>}, {pipeline_mode = #tpu.pipeline_mode<synchronous>, transform_indices = @transform_7, window_bounds = array<i64: 3, 128>}, {transform_indices = @transform_8, window_bounds = array<i64: 1, 24, 128>}]} {
    %c0 = arith.constant 0 : index
    %c0_0 = arith.constant 0 : index
    %c0_1 = arith.constant 0 : index
    %0 = vector.load %arg1[%c0, %c0_0, %c0_1] : memref<1x8x128xf32, #tpu.memory_space<vmem>>, vector<1x8x128xf32>
    %1 = vector.shape_cast %0 : vector<1x8x128xf32> to vector<8x128xf32>
    %2 = arith.truncf %1 : vector<8x128xf32> to vector<8x128xbf16>
    %c0_2 = arith.constant 0 : index
    %c0_3 = arith.constant 0 : index
    %c0_4 = arith.constant 0 : index
    %3 = vector.load %arg4[%c0_2, %c0_3, %c0_4] : memref<3x128x384xbf16, #tpu.memory_space<vmem>>, vector<1x128x384xbf16>
    %4 = vector.shape_cast %3 : vector<1x128x384xbf16> to vector<128x384xbf16>
    %cst = arith.constant dense<0.000000e+00> : vector<8x384xf32>
    %5 = tpu.matmul %2, %4, %cst {dimension_numbers = #tpu.dot_dimension_numbers<[1], [0], [0], [1], [0, 0, 1, 1], [], []>} : vector<8x128xbf16>, vector<128x384xbf16>, vector<8x384xf32> -> vector<8x384xf32>
    %c0_5 = arith.constant 0 : index
    %c0_6 = arith.constant 0 : index
    %6 = vector.load %arg5[%c0_5, %c0_6] : memref<3x384xf32, #tpu.memory_space<vmem>>, vector<1x384xf32>
    %7 = vector.shape_cast %6 : vector<1x384xf32> to vector<384xf32>
    %8 = vector.shape_cast %7 : vector<384xf32> to vector<1x384xf32>
    %9 = vector.broadcast %8 : vector<1x384xf32> to vector<8x384xf32>
    %10 = arith.addf %5, %9 : vector<8x384xf32>
    %11 = vector.extract_strided_slice %10 {offsets = [0, 0], sizes = [8, 128], strides = [1, 1]} : vector<8x384xf32> to vector<8x128xf32>
    %12 = vector.shape_cast %11 : vector<8x128xf32> to vector<1x8x128xf32>
    %13 = vector.extract_strided_slice %10 {offsets = [0, 128], sizes = [8, 128], strides = [1, 1]} : vector<8x384xf32> to vector<8x128xf32>
    %14 = vector.shape_cast %13 : vector<8x128xf32> to vector<1x8x128xf32>
    %15 = vector.extract_strided_slice %10 {offsets = [0, 256], sizes = [8, 128], strides = [1, 1]} : vector<8x384xf32> to vector<8x128xf32>
    %16 = vector.shape_cast %15 : vector<8x128xf32> to vector<1x8x128xf32>
    %c0_7 = arith.constant 0 : index
    %c0_8 = arith.constant 0 : index
    %c0_9 = arith.constant 0 : index
    %17 = vector.load %arg2[%c0_7, %c0_8, %c0_9] : memref<1x8x128xf32, #tpu.memory_space<vmem>>, vector<1x8x128xf32>
    %18 = vector.shape_cast %17 : vector<1x8x128xf32> to vector<8x128xf32>
    %19 = arith.truncf %18 : vector<8x128xf32> to vector<8x128xbf16>
    %c1 = arith.constant 1 : index
    %c0_10 = arith.constant 0 : index
    %c0_11 = arith.constant 0 : index
    %20 = vector.load %arg4[%c1, %c0_10, %c0_11] : memref<3x128x384xbf16, #tpu.memory_space<vmem>>, vector<1x128x384xbf16>
    %21 = vector.shape_cast %20 : vector<1x128x384xbf16> to vector<128x384xbf16>
    %cst_12 = arith.constant dense<0.000000e+00> : vector<8x384xf32>
    %22 = tpu.matmul %19, %21, %cst_12 {dimension_numbers = #tpu.dot_dimension_numbers<[1], [0], [0], [1], [0, 0, 1, 1], [], []>} : vector<8x128xbf16>, vector<128x384xbf16>, vector<8x384xf32> -> vector<8x384xf32>
    %c1_13 = arith.constant 1 : index
    %c0_14 = arith.constant 0 : index
    %23 = vector.load %arg5[%c1_13, %c0_14] : memref<3x384xf32, #tpu.memory_space<vmem>>, vector<1x384xf32>
    %24 = vector.shape_cast %23 : vector<1x384xf32> to vector<384xf32>
    %25 = vector.shape_cast %24 : vector<384xf32> to vector<1x384xf32>
    %26 = vector.broadcast %25 : vector<1x384xf32> to vector<8x384xf32>
    %27 = arith.addf %22, %26 : vector<8x384xf32>
    %28 = vector.extract_strided_slice %27 {offsets = [0, 0], sizes = [8, 128], strides = [1, 1]} : vector<8x384xf32> to vector<8x128xf32>
    %29 = vector.shape_cast %28 : vector<8x128xf32> to vector<1x8x128xf32>
    %30 = vector.extract_strided_slice %27 {offsets = [0, 128], sizes = [8, 128], strides = [1, 1]} : vector<8x384xf32> to vector<8x128xf32>
    %31 = vector.shape_cast %30 : vector<8x128xf32> to vector<1x8x128xf32>
    %32 = vector.extract_strided_slice %27 {offsets = [0, 256], sizes = [8, 128], strides = [1, 1]} : vector<8x384xf32> to vector<8x128xf32>
    %33 = vector.shape_cast %32 : vector<8x128xf32> to vector<1x8x128xf32>
    %c0_15 = arith.constant 0 : index
    %c0_16 = arith.constant 0 : index
    %c0_17 = arith.constant 0 : index
    %34 = vector.load %arg3[%c0_15, %c0_16, %c0_17] : memref<1x8x128xf32, #tpu.memory_space<vmem>>, vector<1x8x128xf32>
    %35 = vector.shape_cast %34 : vector<1x8x128xf32> to vector<8x128xf32>
    %36 = arith.truncf %35 : vector<8x128xf32> to vector<8x128xbf16>
    %c2 = arith.constant 2 : index
    %c0_18 = arith.constant 0 : index
    %c0_19 = arith.constant 0 : index
    %37 = vector.load %arg4[%c2, %c0_18, %c0_19] : memref<3x128x384xbf16, #tpu.memory_space<vmem>>, vector<1x128x384xbf16>
    %38 = vector.shape_cast %37 : vector<1x128x384xbf16> to vector<128x384xbf16>
    %cst_20 = arith.constant dense<0.000000e+00> : vector<8x384xf32>
    %39 = tpu.matmul %36, %38, %cst_20 {dimension_numbers = #tpu.dot_dimension_numbers<[1], [0], [0], [1], [0, 0, 1, 1], [], []>} : vector<8x128xbf16>, vector<128x384xbf16>, vector<8x384xf32> -> vector<8x384xf32>
    %c2_21 = arith.constant 2 : index
    %c0_22 = arith.constant 0 : index
    %40 = vector.load %arg5[%c2_21, %c0_22] : memref<3x384xf32, #tpu.memory_space<vmem>>, vector<1x384xf32>
    %41 = vector.shape_cast %40 : vector<1x384xf32> to vector<384xf32>
    %42 = vector.shape_cast %41 : vector<384xf32> to vector<1x384xf32>
    %43 = vector.broadcast %42 : vector<1x384xf32> to vector<8x384xf32>
    %44 = arith.addf %39, %43 : vector<8x384xf32>
    %45 = vector.extract_strided_slice %44 {offsets = [0, 0], sizes = [8, 128], strides = [1, 1]} : vector<8x384xf32> to vector<8x128xf32>
    %46 = vector.shape_cast %45 : vector<8x128xf32> to vector<1x8x128xf32>
    %47 = vector.extract_strided_slice %44 {offsets = [0, 128], sizes = [8, 128], strides = [1, 1]} : vector<8x384xf32> to vector<8x128xf32>
    %48 = vector.shape_cast %47 : vector<8x128xf32> to vector<1x8x128xf32>
    %49 = vector.extract_strided_slice %44 {offsets = [0, 256], sizes = [8, 128], strides = [1, 1]} : vector<8x384xf32> to vector<8x128xf32>
    %50 = vector.shape_cast %49 : vector<8x128xf32> to vector<1x8x128xf32>
    %51 = arith.truncf %12 : vector<1x8x128xf32> to vector<1x8x128xbf16>
    %52 = arith.truncf %31 : vector<1x8x128xf32> to vector<1x8x128xbf16>
    "tpu.trace_start"() <{level = 10 : i32, message = "bqd,bkd->bqk"}> : () -> ()
    %cst_23 = arith.constant dense<0.000000e+00> : vector<1x8x8xf32>
    %53 = tpu.matmul %51, %52, %cst_23 {dimension_numbers = #tpu.dot_dimension_numbers<[2], [2], [1], [1], [0, 0, 0, 1, 1, 1], [0], [0]>} : vector<1x8x128xbf16>, vector<1x8x128xbf16>, vector<1x8x8xf32> -> vector<1x8x8xf32>
    "tpu.trace_stop"() : () -> ()
    %cst_24 = arith.constant dense<0xFF800000> : vector<1x8xf32>
    %54 = vector.multi_reduction <maximumf>, %53, %cst_24 [2] : vector<1x8x8xf32> to vector<1x8xf32>
    %55 = vector.shape_cast %54 : vector<1x8xf32> to vector<1x8x1xf32>
    %56 = vector.broadcast %55 : vector<1x8x1xf32> to vector<1x8x8xf32>
    %57 = arith.subf %53, %56 : vector<1x8x8xf32>
    %58 = math.exp %57 : vector<1x8x8xf32>
    %cst_25 = arith.constant dense<0.000000e+00> : vector<1x8xf32>
    %59 = vector.multi_reduction <add>, %58, %cst_25 [2] : vector<1x8x8xf32> to vector<1x8xf32>
    %60 = vector.shape_cast %59 : vector<1x8xf32> to vector<1x8x1xf32>
    %61 = tpu.reciprocal %60 {approx = true} : vector<1x8x1xf32> -> vector<1x8x1xf32>
    %62 = vector.broadcast %61 : vector<1x8x1xf32> to vector<1x8x8xf32>
    %63 = arith.mulf %58, %62 : vector<1x8x8xf32>
    %64 = arith.truncf %63 : vector<1x8x8xf32> to vector<1x8x8xbf16>
    %65 = arith.truncf %33 : vector<1x8x128xf32> to vector<1x8x128xbf16>
    "tpu.trace_start"() <{level = 10 : i32, message = "bqk,bkd->bqd"}> : () -> ()
    %cst_26 = arith.constant dense<0.000000e+00> : vector<1x8x128xf32>
    %66 = tpu.matmul %64, %65, %cst_26 {dimension_numbers = #tpu.dot_dimension_numbers<[2], [1], [1], [2], [0, 0, 0, 1, 1, 2], [0], [0]>} : vector<1x8x8xbf16>, vector<1x8x128xbf16>, vector<1x8x128xf32> -> vector<1x8x128xf32>
    "tpu.trace_stop"() : () -> ()
    %67 = vector.shape_cast %66 : vector<1x8x128xf32> to vector<8x128xf32>
    %68 = arith.truncf %29 : vector<1x8x128xf32> to vector<1x8x128xbf16>
    %69 = arith.truncf %48 : vector<1x8x128xf32> to vector<1x8x128xbf16>
    "tpu.trace_start"() <{level = 10 : i32, message = "bqd,bkd->bqk"}> : () -> ()
    %cst_27 = arith.constant dense<0.000000e+00> : vector<1x8x8xf32>
    %70 = tpu.matmul %68, %69, %cst_27 {dimension_numbers = #tpu.dot_dimension_numbers<[2], [2], [1], [1], [0, 0, 0, 1, 1, 1], [0], [0]>} : vector<1x8x128xbf16>, vector<1x8x128xbf16>, vector<1x8x8xf32> -> vector<1x8x8xf32>
    "tpu.trace_stop"() : () -> ()
    %cst_28 = arith.constant dense<0xFF800000> : vector<1x8xf32>
    %71 = vector.multi_reduction <maximumf>, %70, %cst_28 [2] : vector<1x8x8xf32> to vector<1x8xf32>
    %72 = vector.shape_cast %71 : vector<1x8xf32> to vector<1x8x1xf32>
    %73 = vector.broadcast %72 : vector<1x8x1xf32> to vector<1x8x8xf32>
    %74 = arith.subf %70, %73 : vector<1x8x8xf32>
    %75 = math.exp %74 : vector<1x8x8xf32>
    %cst_29 = arith.constant dense<0.000000e+00> : vector<1x8xf32>
    %76 = vector.multi_reduction <add>, %75, %cst_29 [2] : vector<1x8x8xf32> to vector<1x8xf32>
    %77 = vector.shape_cast %76 : vector<1x8xf32> to vector<1x8x1xf32>
    %78 = tpu.reciprocal %77 {approx = true} : vector<1x8x1xf32> -> vector<1x8x1xf32>
    %79 = vector.broadcast %78 : vector<1x8x1xf32> to vector<1x8x8xf32>
    %80 = arith.mulf %75, %79 : vector<1x8x8xf32>
    %81 = arith.truncf %80 : vector<1x8x8xf32> to vector<1x8x8xbf16>
    %82 = arith.truncf %50 : vector<1x8x128xf32> to vector<1x8x128xbf16>
    "tpu.trace_start"() <{level = 10 : i32, message = "bqk,bkd->bqd"}> : () -> ()
    %cst_30 = arith.constant dense<0.000000e+00> : vector<1x8x128xf32>
    %83 = tpu.matmul %81, %82, %cst_30 {dimension_numbers = #tpu.dot_dimension_numbers<[2], [1], [1], [2], [0, 0, 0, 1, 1, 2], [0], [0]>} : vector<1x8x8xbf16>, vector<1x8x128xbf16>, vector<1x8x128xf32> -> vector<1x8x128xf32>
    "tpu.trace_stop"() : () -> ()
    %84 = vector.shape_cast %83 : vector<1x8x128xf32> to vector<8x128xf32>
    %85 = arith.truncf %46 : vector<1x8x128xf32> to vector<1x8x128xbf16>
    %86 = arith.truncf %14 : vector<1x8x128xf32> to vector<1x8x128xbf16>
    "tpu.trace_start"() <{level = 10 : i32, message = "bqd,bkd->bqk"}> : () -> ()
    %cst_31 = arith.constant dense<0.000000e+00> : vector<1x8x8xf32>
    %87 = tpu.matmul %85, %86, %cst_31 {dimension_numbers = #tpu.dot_dimension_numbers<[2], [2], [1], [1], [0, 0, 0, 1, 1, 1], [0], [0]>} : vector<1x8x128xbf16>, vector<1x8x128xbf16>, vector<1x8x8xf32> -> vector<1x8x8xf32>
    "tpu.trace_stop"() : () -> ()
    %cst_32 = arith.constant dense<0xFF800000> : vector<1x8xf32>
    %88 = vector.multi_reduction <maximumf>, %87, %cst_32 [2] : vector<1x8x8xf32> to vector<1x8xf32>
    %89 = vector.shape_cast %88 : vector<1x8xf32> to vector<1x8x1xf32>
    %90 = vector.broadcast %89 : vector<1x8x1xf32> to vector<1x8x8xf32>
    %91 = arith.subf %87, %90 : vector<1x8x8xf32>
    %92 = math.exp %91 : vector<1x8x8xf32>
    %cst_33 = arith.constant dense<0.000000e+00> : vector<1x8xf32>
    %93 = vector.multi_reduction <add>, %92, %cst_33 [2] : vector<1x8x8xf32> to vector<1x8xf32>
    %94 = vector.shape_cast %93 : vector<1x8xf32> to vector<1x8x1xf32>
    %95 = tpu.reciprocal %94 {approx = true} : vector<1x8x1xf32> -> vector<1x8x1xf32>
    %96 = vector.broadcast %95 : vector<1x8x1xf32> to vector<1x8x8xf32>
    %97 = arith.mulf %92, %96 : vector<1x8x8xf32>
    %98 = arith.truncf %97 : vector<1x8x8xf32> to vector<1x8x8xbf16>
    %99 = arith.truncf %16 : vector<1x8x128xf32> to vector<1x8x128xbf16>
    "tpu.trace_start"() <{level = 10 : i32, message = "bqk,bkd->bqd"}> : () -> ()
    %cst_34 = arith.constant dense<0.000000e+00> : vector<1x8x128xf32>
    %100 = tpu.matmul %98, %99, %cst_34 {dimension_numbers = #tpu.dot_dimension_numbers<[2], [1], [1], [2], [0, 0, 0, 1, 1, 2], [0], [0]>} : vector<1x8x8xbf16>, vector<1x8x128xbf16>, vector<1x8x128xf32> -> vector<1x8x128xf32>
    "tpu.trace_stop"() : () -> ()
    %101 = vector.shape_cast %100 : vector<1x8x128xf32> to vector<8x128xf32>
    %c0_35 = arith.constant 0 : index
    %c0_36 = arith.constant 0 : index
    %c0_37 = arith.constant 0 : index
    %102 = vector.load %arg6[%c0_35, %c0_36, %c0_37] : memref<3x128x128xbf16, #tpu.memory_space<vmem>>, vector<1x128x128xbf16>
    %103 = vector.shape_cast %102 : vector<1x128x128xbf16> to vector<128x128xbf16>
    %cst_38 = arith.constant dense<0.000000e+00> : vector<8x128xf32>
    %104 = tpu.matmul %2, %103, %cst_38 {dimension_numbers = #tpu.dot_dimension_numbers<[1], [0], [0], [1], [0, 0, 1, 1], [], []>} : vector<8x128xbf16>, vector<128x128xbf16>, vector<8x128xf32> -> vector<8x128xf32>
    %105 = arith.truncf %67 : vector<8x128xf32> to vector<8x128xbf16>
    %c0_39 = arith.constant 0 : index
    %c0_40 = arith.constant 0 : index
    %c0_41 = arith.constant 0 : index
    %106 = vector.load %arg7[%c0_39, %c0_40, %c0_41] : memref<3x128x128xbf16, #tpu.memory_space<vmem>>, vector<1x128x128xbf16>
    %107 = vector.shape_cast %106 : vector<1x128x128xbf16> to vector<128x128xbf16>
    %cst_42 = arith.constant dense<0.000000e+00> : vector<8x128xf32>
    %108 = tpu.matmul %105, %107, %cst_42 {dimension_numbers = #tpu.dot_dimension_numbers<[1], [0], [0], [1], [0, 0, 1, 1], [], []>} : vector<8x128xbf16>, vector<128x128xbf16>, vector<8x128xf32> -> vector<8x128xf32>
    %109 = arith.addf %104, %108 : vector<8x128xf32>
    %c0_43 = arith.constant 0 : index
    %c0_44 = arith.constant 0 : index
    %110 = vector.load %arg8[%c0_43, %c0_44] : memref<3x128xf32, #tpu.memory_space<vmem>>, vector<1x128xf32>
    %111 = vector.shape_cast %110 : vector<1x128xf32> to vector<128xf32>
    %112 = vector.shape_cast %111 : vector<128xf32> to vector<1x128xf32>
    %113 = vector.broadcast %112 : vector<1x128xf32> to vector<8x128xf32>
    %114 = arith.addf %109, %113 : vector<8x128xf32>
    %115 = vector.shape_cast %114 : vector<8x128xf32> to vector<1x8x128xf32>
    %c0_45 = arith.constant 0 : index
    %c0_46 = arith.constant 0 : index
    %c0_47 = arith.constant 0 : index
    %116 = vector.load %arg9[%c0_45, %c0_46, %c0_47] : memref<1x24x128xf32, #tpu.memory_space<vmem>>, vector<1x8x128xf32>
    tpu.vector_store %arg9[%c0_45, %c0_46, %c0_47], %115 {strides = array<i32>} : memref<1x24x128xf32, #tpu.memory_space<vmem>>, vector<1x8x128xf32>,
    %c1_48 = arith.constant 1 : index
    %c0_49 = arith.constant 0 : index
    %c0_50 = arith.constant 0 : index
    %117 = vector.load %arg6[%c1_48, %c0_49, %c0_50] : memref<3x128x128xbf16, #tpu.memory_space<vmem>>, vector<1x128x128xbf16>
    %118 = vector.shape_cast %117 : vector<1x128x128xbf16> to vector<128x128xbf16>
    %cst_51 = arith.constant dense<0.000000e+00> : vector<8x128xf32>
    %119 = tpu.matmul %19, %118, %cst_51 {dimension_numbers = #tpu.dot_dimension_numbers<[1], [0], [0], [1], [0, 0, 1, 1], [], []>} : vector<8x128xbf16>, vector<128x128xbf16>, vector<8x128xf32> -> vector<8x128xf32>
    %120 = arith.truncf %84 : vector<8x128xf32> to vector<8x128xbf16>
    %c1_52 = arith.constant 1 : index
    %c0_53 = arith.constant 0 : index
    %c0_54 = arith.constant 0 : index
    %121 = vector.load %arg7[%c1_52, %c0_53, %c0_54] : memref<3x128x128xbf16, #tpu.memory_space<vmem>>, vector<1x128x128xbf16>
    %122 = vector.shape_cast %121 : vector<1x128x128xbf16> to vector<128x128xbf16>
    %cst_55 = arith.constant dense<0.000000e+00> : vector<8x128xf32>
    %123 = tpu.matmul %120, %122, %cst_55 {dimension_numbers = #tpu.dot_dimension_numbers<[1], [0], [0], [1], [0, 0, 1, 1], [], []>} : vector<8x128xbf16>, vector<128x128xbf16>, vector<8x128xf32> -> vector<8x128xf32>
    %124 = arith.addf %119, %123 : vector<8x128xf32>
    %c1_56 = arith.constant 1 : index
    %c0_57 = arith.constant 0 : index
    %125 = vector.load %arg8[%c1_56, %c0_57] : memref<3x128xf32, #tpu.memory_space<vmem>>, vector<1x128xf32>
    %126 = vector.shape_cast %125 : vector<1x128xf32> to vector<128xf32>
    %127 = vector.shape_cast %126 : vector<128xf32> to vector<1x128xf32>
    %128 = vector.broadcast %127 : vector<1x128xf32> to vector<8x128xf32>
    %129 = arith.addf %124, %128 : vector<8x128xf32>
    %130 = vector.shape_cast %129 : vector<8x128xf32> to vector<1x8x128xf32>
    %c0_58 = arith.constant 0 : index
    %c8 = arith.constant 8 : index
    %c0_59 = arith.constant 0 : index
    %131 = vector.load %arg9[%c0_58, %c8, %c0_59] : memref<1x24x128xf32, #tpu.memory_space<vmem>>, vector<1x8x128xf32>
    tpu.vector_store %arg9[%c0_58, %c8, %c0_59], %130 {strides = array<i32>} : memref<1x24x128xf32, #tpu.memory_space<vmem>>, vector<1x8x128xf32>,
    %c2_60 = arith.constant 2 : index
    %c0_61 = arith.constant 0 : index
    %c0_62 = arith.constant 0 : index
    %132 = vector.load %arg6[%c2_60, %c0_61, %c0_62] : memref<3x128x128xbf16, #tpu.memory_space<vmem>>, vector<1x128x128xbf16>
    %133 = vector.shape_cast %132 : vector<1x128x128xbf16> to vector<128x128xbf16>
    %cst_63 = arith.constant dense<0.000000e+00> : vector<8x128xf32>
    %134 = tpu.matmul %36, %133, %cst_63 {dimension_numbers = #tpu.dot_dimension_numbers<[1], [0], [0], [1], [0, 0, 1, 1], [], []>} : vector<8x128xbf16>, vector<128x128xbf16>, vector<8x128xf32> -> vector<8x128xf32>
    %135 = arith.truncf %101 : vector<8x128xf32> to vector<8x128xbf16>
    %c2_64 = arith.constant 2 : index
    %c0_65 = arith.constant 0 : index
    %c0_66 = arith.constant 0 : index
    %136 = vector.load %arg7[%c2_64, %c0_65, %c0_66] : memref<3x128x128xbf16, #tpu.memory_space<vmem>>, vector<1x128x128xbf16>
    %137 = vector.shape_cast %136 : vector<1x128x128xbf16> to vector<128x128xbf16>
    %cst_67 = arith.constant dense<0.000000e+00> : vector<8x128xf32>
    %138 = tpu.matmul %135, %137, %cst_67 {dimension_numbers = #tpu.dot_dimension_numbers<[1], [0], [0], [1], [0, 0, 1, 1], [], []>} : vector<8x128xbf16>, vector<128x128xbf16>, vector<8x128xf32> -> vector<8x128xf32>
    %139 = arith.addf %134, %138 : vector<8x128xf32>
    %c2_68 = arith.constant 2 : index
    %c0_69 = arith.constant 0 : index
    %140 = vector.load %arg8[%c2_68, %c0_69] : memref<3x128xf32, #tpu.memory_space<vmem>>, vector<1x128xf32>
    %141 = vector.shape_cast %140 : vector<1x128xf32> to vector<128xf32>
    %142 = vector.shape_cast %141 : vector<128xf32> to vector<1x128xf32>
    %143 = vector.broadcast %142 : vector<1x128xf32> to vector<8x128xf32>
    %144 = arith.addf %139, %143 : vector<8x128xf32>
    %145 = vector.shape_cast %144 : vector<8x128xf32> to vector<1x8x128xf32>
    %c0_70 = arith.constant 0 : index
    %c16 = arith.constant 16 : index
    %c0_71 = arith.constant 0 : index
    %146 = vector.load %arg9[%c0_70, %c16, %c0_71] : memref<1x24x128xf32, #tpu.memory_space<vmem>>, vector<1x8x128xf32>
    tpu.vector_store %arg9[%c0_70, %c16, %c0_71], %145 {strides = array<i32>} : memref<1x24x128xf32, #tpu.memory_space<vmem>>, vector<1x8x128xf32>,
    return
  }
  func.func @transform_0(%arg0: i32) -> (i32, i32, i32) {
    %c0_i32 = arith.constant 0 : i32
    %c0_i32_0 = arith.constant 0 : i32
    %c0_i32_1 = arith.constant 0 : i32
    return %arg0, %c0_i32, %c0_i32_0 : i32, i32, i32
  }
  func.func @transform_1(%arg0: i32) -> (i32, i32, i32) {
    %c0_i32 = arith.constant 0 : i32
    %c0_i32_0 = arith.constant 0 : i32
    %c0_i32_1 = arith.constant 0 : i32
    return %arg0, %c0_i32, %c0_i32_0 : i32, i32, i32
  }
  func.func @transform_2(%arg0: i32) -> (i32, i32, i32) {
    %c0_i32 = arith.constant 0 : i32
    %c0_i32_0 = arith.constant 0 : i32
    %c0_i32_1 = arith.constant 0 : i32
    return %arg0, %c0_i32, %c0_i32_0 : i32, i32, i32
  }
  func.func @transform_3(%arg0: i32) -> (i32, i32, i32) {
    %c0_i32 = arith.constant 0 : i32
    %c0_i32_0 = arith.constant 0 : i32
    %c0_i32_1 = arith.constant 0 : i32
    %c0_i32_2 = arith.constant 0 : i32
    return %c0_i32, %c0_i32_0, %c0_i32_1 : i32, i32, i32
  }
  func.func @transform_4(%arg0: i32) -> (i32, i32) {
    %c0_i32 = arith.constant 0 : i32
    %c0_i32_0 = arith.constant 0 : i32
    %c0_i32_1 = arith.constant 0 : i32
    return %c0_i32, %c0_i32_0 : i32, i32
  }
  func.func @transform_5(%arg0: i32) -> (i32, i32, i32) {
    %c0_i32 = arith.constant 0 : i32
    %c0_i32_0 = arith.constant 0 : i32
    %c0_i32_1 = arith.constant 0 : i32
    %c0_i32_2 = arith.constant 0 : i32
    return %c0_i32, %c0_i32_0, %c0_i32_1 : i32, i32, i32
  }
  func.func @transform_6(%arg0: i32) -> (i32, i32, i32) {
    %c0_i32 = arith.constant 0 : i32
    %c0_i32_0 = arith.constant 0 : i32
    %c0_i32_1 = arith.constant 0 : i32
    %c0_i32_2 = arith.constant 0 : i32
    return %c0_i32, %c0_i32_0, %c0_i32_1 : i32, i32, i32
  }
  func.func @transform_7(%arg0: i32) -> (i32, i32) {
    %c0_i32 = arith.constant 0 : i32
    %c0_i32_0 = arith.constant 0 : i32
    %c0_i32_1 = arith.constant 0 : i32
    return %c0_i32, %c0_i32_0 : i32, i32
  }
  func.func @transform_8(%arg0: i32) -> (i32, i32, i32) {
    %c0_i32 = arith.constant 0 : i32
    %c0_i32_0 = arith.constant 0 : i32
    %c0_i32_1 = arith.constant 0 : i32
    return %arg0, %c0_i32, %c0_i32_0 : i32, i32, i32
  }
}

</mosaic_0001>

<llo_original>
// kernel: tpu_custom_call.1
$region0: #{tpu_custom_call.1}
  #allocation0 [shape = 'u32[]', space=smem, size = 0x4, offset = 0x4, fixed_abs, tag = 'smem constant byte address 0x4 - core index']
  #allocation1 [shape = 'u32[72,128]{1,0:T(1,128)}', space=vmem, size = 0x9000, scoped, tag = 'internal scratch']
  %s0 = inlined_call_operand.hbm [shape: f32[2,8,128], index: 0, kind: input, shape index: {}]
  %s1 = inlined_call_operand.hbm [shape: f32[2,8,128], index: 1, kind: input, shape index: {}]
  %s2 = inlined_call_operand.hbm [shape: f32[2,8,128], index: 2, kind: input, shape index: {}]
  %s3 = inlined_call_operand.hbm [shape: bf16[3,128,384], index: 3, kind: input, shape index: {}]
  %s4 = inlined_call_operand.hbm [shape: f32[3,384], index: 4, kind: input, shape index: {}]
  %s5 = inlined_call_operand.hbm [shape: bf16[3,128,128], index: 5, kind: input, shape index: {}]
  %s6 = inlined_call_operand.hbm [shape: bf16[3,128,128], index: 6, kind: input, shape index: {}]
  %s7 = inlined_call_operand.vmem [shape: f32[3,128], index: 7, kind: input, shape index: {}]
  %s8 = inlined_call_operand.hbm [shape: f32[2,24,128], index: 8, kind: output, shape index: {}]
  %s9 = sld [smem:[#allocation0]]
  $region93: #{tpu_custom_call.1} parent=0
    _
  %s11 = ssub.s32 1, %s9
  %s12 = scalar_select 0, %s11, %s9
  $region1: #{tpu_custom_call.1} parent=0
    #allocation2 [shape = 'u8[8192]{0}', space=vmem, size = 0x2000, scoped, tag = 'input window, operand 0']
    #allocation3 [shape = 's32[2]{0}', space=sflag, size = 0x8, scoped, tag = 'scoped memory for tpu_custom_call.1']
    #allocation4 [shape = 's32[2]{0}', space=sflag, size = 0x8, scoped, tag = 'scoped memory for tpu_custom_call.1']
    #allocation5 [shape = 'u8[8192]{0}', space=vmem, size = 0x2000, scoped, tag = 'input window, operand 1']
    #allocation6 [shape = 's32[2]{0}', space=sflag, size = 0x8, scoped, tag = 'scoped memory for tpu_custom_call.1']
    #allocation7 [shape = 'u8[8192]{0}', space=vmem, size = 0x2000, scoped, tag = 'input window, operand 2']
    #allocation8 [shape = 'u8[294912]{0}', space=vmem, size = 0x48000, scoped, tag = 'input window, operand 3, single buffered']
    #allocation9 [shape = 's32[1]{0}', space=sflag, size = 0x4, scoped, tag = 'scoped memory for tpu_custom_call.1']
    #allocation10 [shape = 'u8[6144]{0}', space=vmem, size = 0x1800, scoped, tag = 'input window, operand 4, single buffered']
    #allocation11 [shape = 'u8[98304]{0}', space=vmem, size = 0x18000, scoped, tag = 'input window, operand 5, single buffered']
    #allocation12 [shape = 's32[1]{0}', space=sflag, size = 0x4, scoped, tag = 'scoped memory for tpu_custom_call.1']
    #allocation13 [shape = 'u8[98304]{0}', space=vmem, size = 0x18000, scoped, tag = 'input window, operand 6, single buffered']
    #allocation14 [shape = 'u8[24576]{0}', space=vmem, size = 0x6000, scoped, tag = 'output window, operand 0']
    %13 = vsyncpa [#allocation3], 0
    %s14 = scalar_lea.sflag [#allocation3], 1
    %15 = vsyncpa %s14, 0
    %16 = vsyncpa [#allocation6], 0
    %s17 = scalar_lea.sflag [#allocation6], 1
    %18 = vsyncpa %s17, 0
    %19 = vsyncpa [#allocation9], 0
    %20 = vsyncpa [#allocation12], 0
    %21 = vsyncpa [#allocation4], 0
    %s22 = scalar_lea.sflag [#allocation4], 1
    %23 = vsyncpa %s22, 0
    loop: start=0, step=1, limit=4
    $region2: #{tpu_custom_call.1} parent=1 // loop_pre_header
      _
    $region3: #{tpu_custom_call.1} parent=1 // loop_header
      %s25 = sphi 0, %s29
      %p26 = scmp.ge.s32.totalorder %s25, 4
      %s35 = sphi 0, %s37
      %s38 = sphi 0, %s35
      %s39 = sphi 0, %s38
      %s55 = sphi 0, %s39
      %s61 = sphi 0, %s63
      %s64 = sphi 0, %s61
      %s65 = sphi 0, %s64
      %s81 = sphi 0, %s65
      %s87 = sphi 0, %s89
      %s90 = sphi 0, %s87
      %s91 = sphi 0, %s90
      %s107 = sphi 0, %s91
      %s111 = sphi 0, %s111
      %s113 = sphi 0, %s111
      %s114 = sphi 0, %s113
      %s128 = sphi 0, %s114
      %s132 = sphi 0, %s132
      %s134 = sphi 0, %s132
      %s135 = sphi 0, %s134
      %s149 = sphi 0, %s135
      %s153 = sphi 0, %s153
      %s155 = sphi 0, %s153
      %s156 = sphi 0, %s155
      %s170 = sphi 0, %s156
      %s174 = sphi 0, %s174
      %s176 = sphi 0, %s174
      %s177 = sphi 0, %s176
      %s191 = sphi 0, %s177
      %s195 = sphi 0, %s195
      %s197 = sphi 0, %s195
      %s198 = sphi 0, %s197
      %s212 = sphi 0, %s198
      %s218 = sphi 0, %s220
      %s221 = sphi 0, %s218
      %s222 = sphi 0, %s221
      %s238 = sphi 0, %s222
    $region4: #{tpu_custom_call.1} parent=1 // loop_header_branch
      %28 = sbr.rel (%p26) target = $region8
    $region5: #{tpu_custom_call.1} parent=1 // loop_body
      %s30 = ssub.s32 %s25, 1
      %s31 = ssub.s32 %s25, 2
      %s32 = sadd.s32 %s25, 1
      %s33 = ssub.s32 %s25, %s32
      %p34 = scmp.eq.s32.totalorder %s33, 0
      %s36 = sadd.s32 %s35, 1
      %s37 = scalar_select %p34, %s35, %s36
      %p40 = pneg %p34
      %p41 = scmp.eq.s32.totalorder %s25, 1
      %p42 = por %p40, %p41
      %p43 = scmp.ne.s32.totalorder %s35, %s38
      %p44 = scmp.eq.s32.totalorder %s25, 0
      %p45 = por %p43, %p44
      %p46 = scmp.ne.s32.totalorder %s35, %s38
      %p47 = scmp.eq.s32.totalorder %s30, 1
      %p48 = por %p46, %p47
      %p49 = scmp.ne.s32.totalorder %s38, %s39
      %p50 = scmp.eq.s32.totalorder %s30, 0
      %p51 = por %p49, %p50
      %p52 = scmp.ne.s32.totalorder %s38, %s39
      %p53 = scmp.eq.s32.totalorder %s31, 1
      %p54 = por %p52, %p53
      %p56 = scmp.ne.s32.totalorder %s39, %s55
      %p57 = scmp.eq.s32.totalorder %s31, 0
      %p58 = por %p56, %p57
      %s59 = ssub.s32 %s25, %s32
      %p60 = scmp.eq.s32.totalorder %s59, 0
      %s62 = sadd.s32 %s61, 1
      %s63 = scalar_select %p60, %s61, %s62
      %p66 = pneg %p60
      %p67 = scmp.eq.s32.totalorder %s25, 1
      %p68 = por %p66, %p67
      %p69 = scmp.ne.s32.totalorder %s61, %s64
      %p70 = scmp.eq.s32.totalorder %s25, 0
      %p71 = por %p69, %p70
      %p72 = scmp.ne.s32.totalorder %s61, %s64
      %p73 = scmp.eq.s32.totalorder %s30, 1
      %p74 = por %p72, %p73
      %p75 = scmp.ne.s32.totalorder %s64, %s65
      %p76 = scmp.eq.s32.totalorder %s30, 0
      %p77 = por %p75, %p76
      %p78 = scmp.ne.s32.totalorder %s64, %s65
      %p79 = scmp.eq.s32.totalorder %s31, 1
      %p80 = por %p78, %p79
      %p82 = scmp.ne.s32.totalorder %s65, %s81
      %p83 = scmp.eq.s32.totalorder %s31, 0
      %p84 = por %p82, %p83
      %s85 = ssub.s32 %s25, %s32
      %p86 = scmp.eq.s32.totalorder %s85, 0
      %s88 = sadd.s32 %s87, 1
      %s89 = scalar_select %p86, %s87, %s88
      %p92 = pneg %p86
      %p93 = scmp.eq.s32.totalorder %s25, 1
      %p94 = por %p92, %p93
      %p95 = scmp.ne.s32.totalorder %s87, %s90
      %p96 = scmp.eq.s32.totalorder %s25, 0
      %p97 = por %p95, %p96
      %p98 = scmp.ne.s32.totalorder %s87, %s90
      %p99 = scmp.eq.s32.totalorder %s30, 1
      %p100 = por %p98, %p99
      %p101 = scmp.ne.s32.totalorder %s90, %s91
      %p102 = scmp.eq.s32.totalorder %s30, 0
      %p103 = por %p101, %p102
      %p104 = scmp.ne.s32.totalorder %s90, %s91
      %p105 = scmp.eq.s32.totalorder %s31, 1
      %p106 = por %p104, %p105
      %p108 = scmp.ne.s32.totalorder %s91, %s107
      %p109 = scmp.eq.s32.totalorder %s31, 0
      %p110 = por %p108, %p109
      %s112 = sadd.s32 %s111, 1
      %p115 = scmp.eq.s32.totalorder %s25, 1
      %p116 = scmp.ne.s32.totalorder %s111, %s113
      %p117 = scmp.eq.s32.totalorder %s25, 0
      %p118 = por %p116, %p117
      %p119 = scmp.ne.s32.totalorder %s111, %s113
      %p120 = scmp.eq.s32.totalorder %s30, 1
      %p121 = por %p119, %p120
      %p122 = scmp.ne.s32.totalorder %s113, %s114
      %p123 = scmp.eq.s32.totalorder %s30, 0
      %p124 = por %p122, %p123
      %p125 = scmp.ne.s32.totalorder %s113, %s114
      %p126 = scmp.eq.s32.totalorder %s31, 1
      %p127 = por %p125, %p126
      %p129 = scmp.ne.s32.totalorder %s114, %s128
      %p130 = scmp.eq.s32.totalorder %s31, 0
      %p131 = por %p129, %p130
      %s133 = sadd.s32 %s132, 1
      %p136 = scmp.eq.s32.totalorder %s25, 1
      %p137 = scmp.ne.s32.totalorder %s132, %s134
      %p138 = scmp.eq.s32.totalorder %s25, 0
      %p139 = por %p137, %p138
      %p140 = scmp.ne.s32.totalorder %s132, %s134
      %p141 = scmp.eq.s32.totalorder %s30, 1
      %p142 = por %p140, %p141
      %p143 = scmp.ne.s32.totalorder %s134, %s135
      %p144 = scmp.eq.s32.totalorder %s30, 0
      %p145 = por %p143, %p144
      %p146 = scmp.ne.s32.totalorder %s134, %s135
      %p147 = scmp.eq.s32.totalorder %s31, 1
      %p148 = por %p146, %p147
      %p150 = scmp.ne.s32.totalorder %s135, %s149
      %p151 = scmp.eq.s32.totalorder %s31, 0
      %p152 = por %p150, %p151
      %s154 = sadd.s32 %s153, 1
      %p157 = scmp.eq.s32.totalorder %s25, 1
      %p158 = scmp.ne.s32.totalorder %s153, %s155
      %p159 = scmp.eq.s32.totalorder %s25, 0
      %p160 = por %p158, %p159
      %p161 = scmp.ne.s32.totalorder %s153, %s155
      %p162 = scmp.eq.s32.totalorder %s30, 1
      %p163 = por %p161, %p162
      %p164 = scmp.ne.s32.totalorder %s155, %s156
      %p165 = scmp.eq.s32.totalorder %s30, 0
      %p166 = por %p164, %p165
      %p167 = scmp.ne.s32.totalorder %s155, %s156
      %p168 = scmp.eq.s32.totalorder %s31, 1
      %p169 = por %p167, %p168
      %p171 = scmp.ne.s32.totalorder %s156, %s170
      %p172 = scmp.eq.s32.totalorder %s31, 0
      %p173 = por %p171, %p172
      %s175 = sadd.s32 %s174, 1
      %p178 = scmp.eq.s32.totalorder %s25, 1
      %p179 = scmp.ne.s32.totalorder %s174, %s176
      %p180 = scmp.eq.s32.totalorder %s25, 0
      %p181 = por %p179, %p180
      %p182 = scmp.ne.s32.totalorder %s174, %s176
      %p183 = scmp.eq.s32.totalorder %s30, 1
      %p184 = por %p182, %p183
      %p185 = scmp.ne.s32.totalorder %s176, %s177
      %p186 = scmp.eq.s32.totalorder %s30, 0
      %p187 = por %p185, %p186
      %p188 = scmp.ne.s32.totalorder %s176, %s177
      %p189 = scmp.eq.s32.totalorder %s31, 1
      %p190 = por %p188, %p189
      %p192 = scmp.ne.s32.totalorder %s177, %s191
      %p193 = scmp.eq.s32.totalorder %s31, 0
      %p194 = por %p192, %p193
      %s196 = sadd.s32 %s195, 1
      %p199 = scmp.eq.s32.totalorder %s25, 1
      %p200 = scmp.ne.s32.totalorder %s195, %s197
      %p201 = scmp.eq.s32.totalorder %s25, 0
      %p202 = por %p200, %p201
      %p203 = scmp.ne.s32.totalorder %s195, %s197
      %p204 = scmp.eq.s32.totalorder %s30, 1
      %p205 = por %p203, %p204
      %p206 = scmp.ne.s32.totalorder %s197, %s198
      %p207 = scmp.eq.s32.totalorder %s30, 0
      %p208 = por %p206, %p207
      %p209 = scmp.ne.s32.totalorder %s197, %s198
      %p210 = scmp.eq.s32.totalorder %s31, 1
      %p211 = por %p209, %p210
      %p213 = scmp.ne.s32.totalorder %s198, %s212
      %p214 = scmp.eq.s32.totalorder %s31, 0
      %p215 = por %p213, %p214
      %s216 = ssub.s32 %s25, %s32
      %p217 = scmp.eq.s32.totalorder %s216, 0
      %s219 = sadd.s32 %s218, 1
      %s220 = scalar_select %p217, %s218, %s219
      %p223 = pneg %p217
      %p224 = scmp.eq.s32.totalorder %s25, 1
      %p225 = por %p223, %p224
      %p226 = scmp.ne.s32.totalorder %s218, %s221
      %p227 = scmp.eq.s32.totalorder %s25, 0
      %p228 = por %p226, %p227
      %p229 = scmp.ne.s32.totalorder %s218, %s221
      %p230 = scmp.eq.s32.totalorder %s30, 1
      %p231 = por %p229, %p230
      %p232 = scmp.ne.s32.totalorder %s221, %s222
      %p233 = scmp.eq.s32.totalorder %s30, 0
      %p234 = por %p232, %p233
      %p235 = scmp.ne.s32.totalorder %s221, %s222
      %p236 = scmp.eq.s32.totalorder %s31, 1
      %p237 = por %p235, %p236
      %p239 = scmp.ne.s32.totalorder %s222, %s238
      %p240 = scmp.eq.s32.totalorder %s31, 0
      %p241 = por %p239, %p240
      %p242 = scmp.le.s32.totalorder 1, %s25
      %p243 = scmp.lt.s32.totalorder %s25, 3
      %p244 = pnand %p242, %p243
      %p245 = pneg %p244
      // Predicated region
      $region9: #{tpu_custom_call.1} parent=5 // pred_check
        _
      $region10: #{tpu_custom_call.1} parent=5 // pred_check_branch
        %247 = sbr.rel (%p244) target = $region12
      $region11: #{tpu_custom_call.1} parent=5 // pred_region
        %s248 = ssub.s32 %s25, 1
        // Predicated region
        $region13: #{tpu_custom_call.1} parent=11 // pred_check
          %p249 = pneg %p124
        $region14: #{tpu_custom_call.1} parent=11 // pred_check_branch
          %251 = sbr.rel (%p249) target = $region16
        $region15: #{tpu_custom_call.1} parent=11 // pred_region
          %253 = vsyncadd [#allocation9], 0
          %s254 = sshll.u32 %s3, 4
          %s255 = int_to_ptr.hbm [resolvable:$true] %s254
          %s256 = sshll.u32 [#allocation8], 4
          %s257 = int_to_ptr.vmem [resolvable:$true] %s256
          %262 = dma.hbm_to_vmem [thread:$0]  %s255, 9216, %s257, [#allocation9], 192, 192, 12
        $region16: #{tpu_custom_call.1} parent=11 // pred_fallthru
          _
        // Predicated region
        $region17: #{tpu_custom_call.1} parent=11 // pred_check
          %p263 = pneg %p145
        $region18: #{tpu_custom_call.1} parent=11 // pred_check_branch
          %265 = sbr.rel (%p263) target = $region20
        $region19: #{tpu_custom_call.1} parent=11 // pred_region
          %267 = vsyncadd [#allocation9], 0
          %s269 = sshll.u32 %s4, 4
          %s270 = int_to_ptr.hbm [resolvable:$true] %s269
          %s271 = sshll.u32 [#allocation10], 4
          %s272 = int_to_ptr.vmem [resolvable:$true] %s271
          %274 = dma.hbm_to_vmem [thread:$0]  %s270, 192, %s272, [#allocation9]
        $region20: #{tpu_custom_call.1} parent=11 // pred_fallthru
          _
        // Predicated region
        $region21: #{tpu_custom_call.1} parent=11 // pred_check
          %p275 = pneg %p166
        $region22: #{tpu_custom_call.1} parent=11 // pred_check_branch
          %277 = sbr.rel (%p275) target = $region24
        $region23: #{tpu_custom_call.1} parent=11 // pred_region
          %279 = vsyncadd [#allocation12], 0
          %s280 = sshll.u32 %s5, 4
          %s281 = int_to_ptr.hbm [resolvable:$true] %s280
          %s282 = sshll.u32 [#allocation11], 4
          %s283 = int_to_ptr.vmem [resolvable:$true] %s282
          %288 = dma.hbm_to_vmem [thread:$0]  %s281, 3072, %s283, [#allocation12], 64, 64, 4
        $region24: #{tpu_custom_call.1} parent=11 // pred_fallthru
          _
        // Predicated region
        $region25: #{tpu_custom_call.1} parent=11 // pred_check
          %p289 = pneg %p187
        $region26: #{tpu_custom_call.1} parent=11 // pred_check_branch
          %291 = sbr.rel (%p289) target = $region28
        $region27: #{tpu_custom_call.1} parent=11 // pred_region
          %293 = vsyncadd [#allocation12], 0
          %s294 = sshll.u32 %s6, 4
          %s295 = int_to_ptr.hbm [resolvable:$true] %s294
          %s296 = sshll.u32 [#allocation13], 4
          %s297 = int_to_ptr.vmem [resolvable:$true] %s296
          %302 = dma.hbm_to_vmem [thread:$0]  %s295, 3072, %s297, [#allocation12], 64, 64, 4
        $region28: #{tpu_custom_call.1} parent=11 // pred_fallthru
          _
        // Predicated region
        $region29: #{tpu_custom_call.1} parent=11 // pred_check
          %p303 = pneg %p208
        $region30: #{tpu_custom_call.1} parent=11 // pred_check_branch
          %305 = sbr.rel (%p303) target = $region32
        $region31: #{tpu_custom_call.1} parent=11 // pred_region
          _
        $region32: #{tpu_custom_call.1} parent=11 // pred_fallthru
          _
      $region12: #{tpu_custom_call.1} parent=5 // pred_fallthru
        _
      %p306 = scmp.lt.s32.totalorder %s25, 2
      // Predicated region
      $region33: #{tpu_custom_call.1} parent=5 // pred_check
        %p307 = pneg %p306
      $region34: #{tpu_custom_call.1} parent=5 // pred_check_branch
        %309 = sbr.rel (%p307) target = $region36
      $region35: #{tpu_custom_call.1} parent=5 // pred_region
        // Predicated region
        $region37: #{tpu_custom_call.1} parent=35 // pred_check
          %p310 = pneg %p45
        $region38: #{tpu_custom_call.1} parent=35 // pred_check_branch
          %312 = sbr.rel (%p310) target = $region40
        $region39: #{tpu_custom_call.1} parent=35 // pred_region
          %s313 = sand.u32 %s35, 1
          %s314 = scalar_lea.sflag [#allocation3], %s313
          %s315 = sand.u32 %s35, 1
          %s316 = smul.addr %s315, 8
          %s317 = scalar_lea.vmem [#allocation2], %s316
          %319 = vsyncadd %s314, 0
          %s320 = smul.addr %s25, 8
          %s321 = scalar_lea.hbm %s0, %s320
          %s323 = sshll.u32 %s321, 4
          %s324 = int_to_ptr.hbm [resolvable:$true] %s323
          %s325 = sshll.u32 %s317, 4
          %s326 = int_to_ptr.vmem [resolvable:$true] %s325
          %328 = dma.hbm_to_vmem [thread:$0]  %s324, 128, %s326, %s314
        $region40: #{tpu_custom_call.1} parent=35 // pred_fallthru
          _
        // Predicated region
        $region41: #{tpu_custom_call.1} parent=35 // pred_check
          %p329 = pneg %p71
        $region42: #{tpu_custom_call.1} parent=35 // pred_check_branch
          %331 = sbr.rel (%p329) target = $region44
        $region43: #{tpu_custom_call.1} parent=35 // pred_region
          %s332 = sand.u32 %s25, 1
          %s333 = scalar_lea.sflag [#allocation6], %s332
          %s334 = sand.u32 %s61, 1
          %s335 = smul.addr %s334, 8
          %s336 = scalar_lea.vmem [#allocation5], %s335
          %338 = vsyncadd %s333, 0
          %s339 = smul.addr %s25, 8
          %s340 = scalar_lea.hbm %s1, %s339
          %s342 = sshll.u32 %s340, 4
          %s343 = int_to_ptr.hbm [resolvable:$true] %s342
          %s344 = sshll.u32 %s336, 4
          %s345 = int_to_ptr.vmem [resolvable:$true] %s344
          %347 = dma.hbm_to_vmem [thread:$0]  %s343, 128, %s345, %s333
        $region44: #{tpu_custom_call.1} parent=35 // pred_fallthru
          _
        // Predicated region
        $region45: #{tpu_custom_call.1} parent=35 // pred_check
          %p348 = pneg %p97
        $region46: #{tpu_custom_call.1} parent=35 // pred_check_branch
          %350 = sbr.rel (%p348) target = $region48
        $region47: #{tpu_custom_call.1} parent=35 // pred_region
          %s351 = sand.u32 %s25, 1
          %s352 = scalar_lea.sflag [#allocation6], %s351
          %s353 = sand.u32 %s87, 1
          %s354 = smul.addr %s353, 8
          %s355 = scalar_lea.vmem [#allocation7], %s354
          %357 = vsyncadd %s352, 0
          %s358 = smul.addr %s25, 8
          %s359 = scalar_lea.hbm %s2, %s358
          %s361 = sshll.u32 %s359, 4
          %s362 = int_to_ptr.hbm [resolvable:$true] %s361
          %s363 = sshll.u32 %s355, 4
          %s364 = int_to_ptr.vmem [resolvable:$true] %s363
          %366 = dma.hbm_to_vmem [thread:$0]  %s362, 128, %s364, %s352
        $region48: #{tpu_custom_call.1} parent=35 // pred_fallthru
          _
      $region36: #{tpu_custom_call.1} parent=5 // pred_fallthru
        _
      %p367 = scmp.le.s32.totalorder 1, %s25
      %p368 = scmp.lt.s32.totalorder %s25, 3
      %p369 = pnand %p367, %p368
      %p370 = pneg %p369
      // Predicated region
      $region49: #{tpu_custom_call.1} parent=5 // pred_check
        _
      $region50: #{tpu_custom_call.1} parent=5 // pred_check_branch
        %372 = sbr.rel (%p369) target = $region52
      $region51: #{tpu_custom_call.1} parent=5 // pred_region
        %s373 = ssub.s32 %s25, 1
        %s374 = sand.u32 %s38, 1
        %s375 = scalar_lea.sflag [#allocation3], %s374
        %s376 = sand.u32 %s38, 1
        %s377 = smul.addr %s376, 8
        %s378 = scalar_lea.vmem [#allocation2], %s377
        // Predicated region
        $region53: #{tpu_custom_call.1} parent=51 // pred_check
          %p379 = pneg %p51
        $region54: #{tpu_custom_call.1} parent=51 // pred_check_branch
          %381 = sbr.rel (%p379) target = $region56
        $region55: #{tpu_custom_call.1} parent=51 // pred_region
          %383 = dma.done %s375, 128
        $region56: #{tpu_custom_call.1} parent=51 // pred_fallthru
          _
        %s384 = sand.u32 %s30, 1
        %s385 = scalar_lea.sflag [#allocation6], %s384
        %s386 = sand.u32 %s64, 1
        %s387 = smul.addr %s386, 8
        %s388 = scalar_lea.vmem [#allocation5], %s387
        // Predicated region
        $region57: #{tpu_custom_call.1} parent=51 // pred_check
          %p389 = pneg %p77
        $region58: #{tpu_custom_call.1} parent=51 // pred_check_branch
          %391 = sbr.rel (%p389) target = $region60
        $region59: #{tpu_custom_call.1} parent=51 // pred_region
          %393 = dma.done %s385, 128
        $region60: #{tpu_custom_call.1} parent=51 // pred_fallthru
          _
        %s394 = sand.u32 %s30, 1
        %s395 = scalar_lea.sflag [#allocation6], %s394
        %s396 = sand.u32 %s90, 1
        %s397 = smul.addr %s396, 8
        %s398 = scalar_lea.vmem [#allocation7], %s397
        // Predicated region
        $region61: #{tpu_custom_call.1} parent=51 // pred_check
          %p399 = pneg %p103
        $region62: #{tpu_custom_call.1} parent=51 // pred_check_branch
          %401 = sbr.rel (%p399) target = $region64
        $region63: #{tpu_custom_call.1} parent=51 // pred_region
          %403 = dma.done %s395, 128
        $region64: #{tpu_custom_call.1} parent=51 // pred_fallthru
          _
        // Predicated region
        $region65: #{tpu_custom_call.1} parent=51 // pred_check
          %p404 = pneg %p124
        $region66: #{tpu_custom_call.1} parent=51 // pred_check_branch
          %406 = sbr.rel (%p404) target = $region68
        $region67: #{tpu_custom_call.1} parent=51 // pred_region
          %408 = dma.done [#allocation9], 9216
        $region68: #{tpu_custom_call.1} parent=51 // pred_fallthru
          _
        // Predicated region
        $region69: #{tpu_custom_call.1} parent=51 // pred_check
          %p409 = pneg %p145
        $region70: #{tpu_custom_call.1} parent=51 // pred_check_branch
          %411 = sbr.rel (%p409) target = $region72
        $region71: #{tpu_custom_call.1} parent=51 // pred_region
          %413 = dma.done [#allocation9], 192
        $region72: #{tpu_custom_call.1} parent=51 // pred_fallthru
          _
        // Predicated region
        $region73: #{tpu_custom_call.1} parent=51 // pred_check
          %p414 = pneg %p166
        $region74: #{tpu_custom_call.1} parent=51 // pred_check_branch
          %416 = sbr.rel (%p414) target = $region76
        $region75: #{tpu_custom_call.1} parent=51 // pred_region
          %418 = dma.done [#allocation12], 3072
        $region76: #{tpu_custom_call.1} parent=51 // pred_fallthru
          _
        // Predicated region
        $region77: #{tpu_custom_call.1} parent=51 // pred_check
          %p419 = pneg %p187
        $region78: #{tpu_custom_call.1} parent=51 // pred_check_branch
          %421 = sbr.rel (%p419) target = $region80
        $region79: #{tpu_custom_call.1} parent=51 // pred_region
          %423 = dma.done [#allocation12], 3072
        $region80: #{tpu_custom_call.1} parent=51 // pred_fallthru
          _
        %s424 = sand.u32 %s38, 1
        %s425 = scalar_lea.sflag [#allocation3], %s424
        %s426 = sand.u32 %s38, 1
        %s427 = smul.addr %s426, 8
        %s428 = scalar_lea.vmem [#allocation2], %s427
        %p429 = pneg %p51
        %p430 = pneg %p48
        %s431 = sand.u32 %s30, 1
        %s432 = scalar_lea.sflag [#allocation6], %s431
        %s433 = sand.u32 %s64, 1
        %s434 = smul.addr %s433, 8
        %s435 = scalar_lea.vmem [#allocation5], %s434
        %p436 = pneg %p77
        %p437 = pneg %p74
        %s438 = sand.u32 %s30, 1
        %s439 = scalar_lea.sflag [#allocation6], %s438
        %s440 = sand.u32 %s90, 1
        %s441 = smul.addr %s440, 8
        %s442 = scalar_lea.vmem [#allocation7], %s441
        %p443 = pneg %p103
        %p444 = pneg %p100
        %p445 = pneg %p124
        %p446 = pneg %p121
        %p447 = pneg %p145
        %p448 = pneg %p142
        %p449 = pneg %p166
        %p450 = pneg %p163
        %p451 = pneg %p187
        %p452 = pneg %p184
        %p453 = pneg %p208
        %p454 = pneg %p205
        %p455 = pneg %p234
        %p456 = pneg %p231
        %s457 = sand.u32 %s221, 1
        %s458 = scalar_lea.sflag [#allocation4], %s457
        %s459 = sand.u32 %s221, 1
        %s460 = smul.addr %s459, 24
        %s461 = scalar_lea.vmem [#allocation14], %s460
        %v463 = vld [vmem:[%s378] sm:$0xff]
        %v464 = vpack.c.bf16 %v463, %v463
        %v465 = vld [vmem:[#allocation8] sm:$0xff]
        %v466 = vld [vmem:[#allocation8 + $0x8] sm:$0xf]
        %v467 = vld [vmem:[#allocation8 + $0xc] sm:$0xff]
        %v468 = vld [vmem:[#allocation8 + $0x14] sm:$0xf]
        %v469 = vld [vmem:[#allocation8 + $0x18] sm:$0xff]
        %v470 = vld [vmem:[#allocation8 + $0x20] sm:$0xf]
        %v471 = vld [vmem:[#allocation8 + $0x24] sm:$0xff]
        %v472 = vld [vmem:[#allocation8 + $0x2c] sm:$0xf]
        %v473 = vld [vmem:[#allocation8 + $0x30] sm:$0xff]
        %v474 = vld [vmem:[#allocation8 + $0x38] sm:$0xf]
        %v475 = vld [vmem:[#allocation8 + $0x3c] sm:$0xff]
        %v476 = vld [vmem:[#allocation8 + $0x44] sm:$0xf]
        %v477 = vld [vmem:[#allocation8 + $0x48] sm:$0xff]
        %v478 = vld [vmem:[#allocation8 + $0x50] sm:$0xf]
        %v479 = vld [vmem:[#allocation8 + $0x54] sm:$0xff]
        %v480 = vld [vmem:[#allocation8 + $0x5c] sm:$0xf]
        %v481 = vld [vmem:[#allocation8 + $0x60] sm:$0xff]
        %v482 = vld [vmem:[#allocation8 + $0x68] sm:$0xf]
        %v483 = vld [vmem:[#allocation8 + $0x6c] sm:$0xff]
        %v484 = vld [vmem:[#allocation8 + $0x74] sm:$0xf]
        %v485 = vld [vmem:[#allocation8 + $0x78] sm:$0xff]
        %v486 = vld [vmem:[#allocation8 + $0x80] sm:$0xf]
        %v487 = vld [vmem:[#allocation8 + $0x84] sm:$0xff]
        %v488 = vld [vmem:[#allocation8 + $0x8c] sm:$0xf]
        %v489 = vld [vmem:[#allocation8 + $0x90] sm:$0xff]
        %v490 = vld [vmem:[#allocation8 + $0x98] sm:$0xf]
        %v491 = vld [vmem:[#allocation8 + $0x9c] sm:$0xff]
        %v492 = vld [vmem:[#allocation8 + $0xa4] sm:$0xf]
        %v493 = vld [vmem:[#allocation8 + $0xa8] sm:$0xff]
        %v494 = vld [vmem:[#allocation8 + $0xb0] sm:$0xf]
        %v495 = vld [vmem:[#allocation8 + $0xb4] sm:$0xff]
        %v496 = vld [vmem:[#allocation8 + $0xbc] sm:$0xf]
        %v497 = vld [vmem:[#allocation10] ss:$4 sm:$0x7]
        %v499 = vperm.slane %v497, 0
        %v500 = vperm.slane %v497, 1
        %v501 = vperm.slane %v497, 2
        %v537 = vunpack.c.l.b16 %v465
        %v538 = vunpack.c.h.b16 %v465
        %v539 = vunpack.c.l.b16 %v466
        %v540 = vunpack.c.l.b16 %v467
        %v541 = vunpack.c.h.b16 %v467
        %v542 = vunpack.c.l.b16 %v468
        %v543 = vunpack.c.l.b16 %v469
        %v544 = vunpack.c.h.b16 %v469
        %v545 = vunpack.c.l.b16 %v470
        %v546 = vunpack.c.l.b16 %v471
        %v547 = vunpack.c.h.b16 %v471
        %v548 = vunpack.c.l.b16 %v472
        %v549 = vunpack.c.l.b16 %v473
        %v550 = vunpack.c.h.b16 %v473
        %v551 = vunpack.c.l.b16 %v474
        %v552 = vunpack.c.l.b16 %v475
        %v553 = vunpack.c.h.b16 %v475
        %v554 = vunpack.c.l.b16 %v476
        %v555 = vunpack.c.l.b16 %v477
        %v556 = vunpack.c.h.b16 %v477
        %v557 = vunpack.c.l.b16 %v478
        %v558 = vunpack.c.l.b16 %v479
        %v559 = vunpack.c.h.b16 %v479
        %v560 = vunpack.c.l.b16 %v480
        %v561 = vunpack.c.l.b16 %v481
        %v562 = vunpack.c.h.b16 %v481
        %v563 = vunpack.c.l.b16 %v482
        %v564 = vunpack.c.l.b16 %v483
        %v565 = vunpack.c.h.b16 %v483
        %v566 = vunpack.c.l.b16 %v484
        %v567 = vunpack.c.l.b16 %v485
        %v568 = vunpack.c.h.b16 %v485
        %v569 = vunpack.c.l.b16 %v486
        %v570 = vunpack.c.l.b16 %v487
        %v571 = vunpack.c.h.b16 %v487
        %v572 = vunpack.c.l.b16 %v488
        %v573 = vunpack.c.l.b16 %v489
        %v574 = vunpack.c.h.b16 %v489
        %v575 = vunpack.c.l.b16 %v490
        %v576 = vunpack.c.l.b16 %v491
        %v577 = vunpack.c.h.b16 %v491
        %v578 = vunpack.c.l.b16 %v492
        %v579 = vunpack.c.l.b16 %v493
        %v580 = vunpack.c.h.b16 %v493
        %v581 = vunpack.c.l.b16 %v494
        %v582 = vunpack.c.l.b16 %v495
        %v583 = vunpack.c.h.b16 %v495
        %v584 = vunpack.c.l.b16 %v496
        %v585 = vpack.c.b16 %v540, %v537
        %v586 = vpack.c.b16 %v541, %v538
        %v587 = vpack.c.b16 %v542, %v539
        %v588 = vpack.c.b16 %v546, %v543
        %v589 = vpack.c.b16 %v547, %v544
        %v590 = vpack.c.b16 %v548, %v545
        %v591 = vpack.c.b16 %v552, %v549
        %v592 = vpack.c.b16 %v553, %v550
        %v593 = vpack.c.b16 %v554, %v551
        %v594 = vpack.c.b16 %v558, %v555
        %v595 = vpack.c.b16 %v559, %v556
        %v596 = vpack.c.b16 %v560, %v557
        %v597 = vpack.c.b16 %v564, %v561
        %v598 = vpack.c.b16 %v565, %v562
        %v599 = vpack.c.b16 %v566, %v563
        %v600 = vpack.c.b16 %v570, %v567
        %v601 = vpack.c.b16 %v571, %v568
        %v602 = vpack.c.b16 %v572, %v569
        %v603 = vpack.c.b16 %v576, %v573
        %v604 = vpack.c.b16 %v577, %v574
        %v605 = vpack.c.b16 %v578, %v575
        %v606 = vpack.c.b16 %v582, %v579
        %v607 = vpack.c.b16 %v583, %v580
        %v608 = vpack.c.b16 %v584, %v581
        %633 = vmatpush.bf16.msra.mxu0 %v606
        %634 = vmatpush.bf16.msra.mxu0 %v603
        %635 = vmatpush.bf16.msra.mxu0 %v600
        %636 = vmatpush.bf16.msra.mxu0 %v597
        %637 = vmatpush.bf16.msra.mxu0 %v594
        %638 = vmatpush.bf16.msra.mxu0 %v591
        %639 = vmatpush.bf16.msra.mxu0 %v588
        %640 = vmatpush.bf16.msra.mxu0 %v585
        %641 = vmatmul.bf16.gmra.mxu0 %v464
        %v642 = vpop.f32.mrf.mxu0
        %v643 = vadd.f32 %v499, %v642
        %v644 = vpop.f32.mrf.mxu0
        %645 = vdwg.mxu0
        %646 = vmatpush.bf16.msra.mxu0 %v607
        %647 = vmatpush.bf16.msra.mxu0 %v604
        %648 = vmatpush.bf16.msra.mxu0 %v601
        %649 = vmatpush.bf16.msra.mxu0 %v598
        %650 = vmatpush.bf16.msra.mxu0 %v595
        %651 = vmatpush.bf16.msra.mxu0 %v592
        %652 = vmatpush.bf16.msra.mxu0 %v589
        %653 = vmatpush.bf16.msra.mxu0 %v586
        %654 = vmatmul.bf16.gmra.mxu0 %v464
        %v655 = vpop.f32.mrf.mxu0
        %v656 = vadd.f32 %v500, %v655
        %v657 = vpop.f32.mrf.mxu0
        %658 = vdwg.mxu0
        %659 = vmatpush.bf16.msra.mxu0 %v608
        %660 = vmatpush.bf16.msra.mxu0 %v605
        %661 = vmatpush.bf16.msra.mxu0 %v602
        %662 = vmatpush.bf16.msra.mxu0 %v599
        %663 = vmatpush.bf16.msra.mxu0 %v596
        %664 = vmatpush.bf16.msra.mxu0 %v593
        %665 = vmatpush.bf16.msra.mxu0 %v590
        %666 = vmatpush.bf16.msra.mxu0 %v587
        %667 = vmatmul.bf16.gmra.mxu0 %v464
        %v668 = vpop.f32.mrf.mxu0
        %v669 = vadd.f32 %v501, %v668
        %v670 = vpop.f32.mrf.mxu0
        %671 = vdwg.mxu0
        %v672 = vld [vmem:[%s388] sm:$0xff]
        %v673 = vpack.c.bf16 %v672, %v672
        %s674 = scalar_lea.vmem [#allocation8], 192
        %v675 = vld [vmem:[%s674] sm:$0xff]
        %v676 = vld [vmem:[%s674 + $0x8] sm:$0xf]
        %v677 = vld [vmem:[%s674 + $0xc] sm:$0xff]
        %v678 = vld [vmem:[%s674 + $0x14] sm:$0xf]
        %v679 = vld [vmem:[%s674 + $0x18] sm:$0xff]
        %v680 = vld [vmem:[%s674 + $0x20] sm:$0xf]
        %v681 = vld [vmem:[%s674 + $0x24] sm:$0xff]
        %v682 = vld [vmem:[%s674 + $0x2c] sm:$0xf]
        %v683 = vld [vmem:[%s674 + $0x30] sm:$0xff]
        %v684 = vld [vmem:[%s674 + $0x38] sm:$0xf]
        %v685 = vld [vmem:[%s674 + $0x3c] sm:$0xff]
        %v686 = vld [vmem:[%s674 + $0x44] sm:$0xf]
        %v687 = vld [vmem:[%s674 + $0x48] sm:$0xff]
        %v688 = vld [vmem:[%s674 + $0x50] sm:$0xf]
        %v689 = vld [vmem:[%s674 + $0x54] sm:$0xff]
        %v690 = vld [vmem:[%s674 + $0x5c] sm:$0xf]
        %v691 = vld [vmem:[%s674 + $0x60] sm:$0xff]
        %v692 = vld [vmem:[%s674 + $0x68] sm:$0xf]
        %v693 = vld [vmem:[%s674 + $0x6c] sm:$0xff]
        %v694 = vld [vmem:[%s674 + $0x74] sm:$0xf]
        %v695 = vld [vmem:[%s674 + $0x78] sm:$0xff]
        %v696 = vld [vmem:[%s674 + $0x80] sm:$0xf]
        %v697 = vld [vmem:[%s674 + $0x84] sm:$0xff]
        %v698 = vld [vmem:[%s674 + $0x8c] sm:$0xf]
        %v699 = vld [vmem:[%s674 + $0x90] sm:$0xff]
        %v700 = vld [vmem:[%s674 + $0x98] sm:$0xf]
        %v701 = vld [vmem:[%s674 + $0x9c] sm:$0xff]
        %v702 = vld [vmem:[%s674 + $0xa4] sm:$0xf]
        %v703 = vld [vmem:[%s674 + $0xa8] sm:$0xff]
        %v704 = vld [vmem:[%s674 + $0xb0] sm:$0xf]
        %v705 = vld [vmem:[%s674 + $0xb4] sm:$0xff]
        %v706 = vld [vmem:[%s674 + $0xbc] sm:$0xf]
        %s707 = scalar_lea.vmem [#allocation10], 1
        %v708 = vld [vmem:[%s707] ss:$4 sm:$0x7]
        %v710 = vperm.slane %v708, 0
        %v711 = vperm.slane %v708, 1
        %v712 = vperm.slane %v708, 2
        %v748 = vunpack.c.l.b16 %v675
        %v749 = vunpack.c.h.b16 %v675
        %v750 = vunpack.c.l.b16 %v676
        %v751 = vunpack.c.l.b16 %v677
        %v752 = vunpack.c.h.b16 %v677
        %v753 = vunpack.c.l.b16 %v678
        %v754 = vunpack.c.l.b16 %v679
        %v755 = vunpack.c.h.b16 %v679
        %v756 = vunpack.c.l.b16 %v680
        %v757 = vunpack.c.l.b16 %v681
        %v758 = vunpack.c.h.b16 %v681
        %v759 = vunpack.c.l.b16 %v682
        %v760 = vunpack.c.l.b16 %v683
        %v761 = vunpack.c.h.b16 %v683
        %v762 = vunpack.c.l.b16 %v684
        %v763 = vunpack.c.l.b16 %v685
        %v764 = vunpack.c.h.b16 %v685
        %v765 = vunpack.c.l.b16 %v686
        %v766 = vunpack.c.l.b16 %v687
        %v767 = vunpack.c.h.b16 %v687
        %v768 = vunpack.c.l.b16 %v688
        %v769 = vunpack.c.l.b16 %v689
        %v770 = vunpack.c.h.b16 %v689
        %v771 = vunpack.c.l.b16 %v690
        %v772 = vunpack.c.l.b16 %v691
        %v773 = vunpack.c.h.b16 %v691
        %v774 = vunpack.c.l.b16 %v692
        %v775 = vunpack.c.l.b16 %v693
        %v776 = vunpack.c.h.b16 %v693
        %v777 = vunpack.c.l.b16 %v694
        %v778 = vunpack.c.l.b16 %v695
        %v779 = vunpack.c.h.b16 %v695
        %v780 = vunpack.c.l.b16 %v696
        %v781 = vunpack.c.l.b16 %v697
        %v782 = vunpack.c.h.b16 %v697
        %v783 = vunpack.c.l.b16 %v698
        %v784 = vunpack.c.l.b16 %v699
        %v785 = vunpack.c.h.b16 %v699
        %v786 = vunpack.c.l.b16 %v700
        %v787 = vunpack.c.l.b16 %v701
        %v788 = vunpack.c.h.b16 %v701
        %v789 = vunpack.c.l.b16 %v702
        %v790 = vunpack.c.l.b16 %v703
        %v791 = vunpack.c.h.b16 %v703
        %v792 = vunpack.c.l.b16 %v704
        %v793 = vunpack.c.l.b16 %v705
        %v794 = vunpack.c.h.b16 %v705
        %v795 = vunpack.c.l.b16 %v706
        %v796 = vpack.c.b16 %v751, %v748
        %v797 = vpack.c.b16 %v752, %v749
        %v798 = vpack.c.b16 %v753, %v750
        %v799 = vpack.c.b16 %v757, %v754
        %v800 = vpack.c.b16 %v758, %v755
        %v801 = vpack.c.b16 %v759, %v756
        %v802 = vpack.c.b16 %v763, %v760
        %v803 = vpack.c.b16 %v764, %v761
        %v804 = vpack.c.b16 %v765, %v762
        %v805 = vpack.c.b16 %v769, %v766
        %v806 = vpack.c.b16 %v770, %v767
        %v807 = vpack.c.b16 %v771, %v768
        %v808 = vpack.c.b16 %v775, %v772
        %v809 = vpack.c.b16 %v776, %v773
        %v810 = vpack.c.b16 %v777, %v774
        %v811 = vpack.c.b16 %v781, %v778
        %v812 = vpack.c.b16 %v782, %v779
        %v813 = vpack.c.b16 %v783, %v780
        %v814 = vpack.c.b16 %v787, %v784
        %v815 = vpack.c.b16 %v788, %v785
        %v816 = vpack.c.b16 %v789, %v786
        %v817 = vpack.c.b16 %v793, %v790
        %v818 = vpack.c.b16 %v794, %v791
        %v819 = vpack.c.b16 %v795, %v792
        %844 = vmatpush.bf16.msra.mxu0 %v817
        %845 = vmatpush.bf16.msra.mxu0 %v814
        %846 = vmatpush.bf16.msra.mxu0 %v811
        %847 = vmatpush.bf16.msra.mxu0 %v808
        %848 = vmatpush.bf16.msra.mxu0 %v805
        %849 = vmatpush.bf16.msra.mxu0 %v802
        %850 = vmatpush.bf16.msra.mxu0 %v799
        %851 = vmatpush.bf16.msra.mxu0 %v796
        %852 = vmatmul.bf16.gmra.mxu0 %v673
        %v853 = vpop.f32.mrf.mxu0
        %v854 = vadd.f32 %v710, %v853
        %v855 = vpop.f32.mrf.mxu0
        %856 = vdwg.mxu0
        %857 = vmatpush.bf16.msra.mxu0 %v818
        %858 = vmatpush.bf16.msra.mxu0 %v815
        %859 = vmatpush.bf16.msra.mxu0 %v812
        %860 = vmatpush.bf16.msra.mxu0 %v809
        %861 = vmatpush.bf16.msra.mxu0 %v806
        %862 = vmatpush.bf16.msra.mxu0 %v803
        %863 = vmatpush.bf16.msra.mxu0 %v800
        %864 = vmatpush.bf16.msra.mxu0 %v797
        %865 = vmatmul.bf16.gmra.mxu0 %v673
        %v866 = vpop.f32.mrf.mxu0
        %v867 = vadd.f32 %v711, %v866
        %v868 = vpop.f32.mrf.mxu0
        %869 = vdwg.mxu0
        %870 = vmatpush.bf16.msra.mxu0 %v819
        %871 = vmatpush.bf16.msra.mxu0 %v816
        %872 = vmatpush.bf16.msra.mxu0 %v813
        %873 = vmatpush.bf16.msra.mxu0 %v810
        %874 = vmatpush.bf16.msra.mxu0 %v807
        %875 = vmatpush.bf16.msra.mxu0 %v804
        %876 = vmatpush.bf16.msra.mxu0 %v801
        %877 = vmatpush.bf16.msra.mxu0 %v798
        %878 = vmatmul.bf16.gmra.mxu0 %v673
        %v879 = vpop.f32.mrf.mxu0
        %v880 = vadd.f32 %v712, %v879
        %v881 = vpop.f32.mrf.mxu0
        %882 = vdwg.mxu0
        %v883 = vld [vmem:[%s398] sm:$0xff]
        %v884 = vpack.c.bf16 %v883, %v883
        %s885 = scalar_lea.vmem [#allocation8], 384
        %v886 = vld [vmem:[%s885] sm:$0xff]
        %v887 = vld [vmem:[%s885 + $0x8] sm:$0xf]
        %v888 = vld [vmem:[%s885 + $0xc] sm:$0xff]
        %v889 = vld [vmem:[%s885 + $0x14] sm:$0xf]
        %v890 = vld [vmem:[%s885 + $0x18] sm:$0xff]
        %v891 = vld [vmem:[%s885 + $0x20] sm:$0xf]
        %v892 = vld [vmem:[%s885 + $0x24] sm:$0xff]
        %v893 = vld [vmem:[%s885 + $0x2c] sm:$0xf]
        %v894 = vld [vmem:[%s885 + $0x30] sm:$0xff]
        %v895 = vld [vmem:[%s885 + $0x38] sm:$0xf]
        %v896 = vld [vmem:[%s885 + $0x3c] sm:$0xff]
        %v897 = vld [vmem:[%s885 + $0x44] sm:$0xf]
        %v898 = vld [vmem:[%s885 + $0x48] sm:$0xff]
        %v899 = vld [vmem:[%s885 + $0x50] sm:$0xf]
        %v900 = vld [vmem:[%s885 + $0x54] sm:$0xff]
        %v901 = vld [vmem:[%s885 + $0x5c] sm:$0xf]
        %v902 = vld [vmem:[%s885 + $0x60] sm:$0xff]
        %v903 = vld [vmem:[%s885 + $0x68] sm:$0xf]
        %v904 = vld [vmem:[%s885 + $0x6c] sm:$0xff]
        %v905 = vld [vmem:[%s885 + $0x74] sm:$0xf]
        %v906 = vld [vmem:[%s885 + $0x78] sm:$0xff]
        %v907 = vld [vmem:[%s885 + $0x80] sm:$0xf]
        %v908 = vld [vmem:[%s885 + $0x84] sm:$0xff]
        %v909 = vld [vmem:[%s885 + $0x8c] sm:$0xf]
        %v910 = vld [vmem:[%s885 + $0x90] sm:$0xff]
        %v911 = vld [vmem:[%s885 + $0x98] sm:$0xf]
        %v912 = vld [vmem:[%s885 + $0x9c] sm:$0xff]
        %v913 = vld [vmem:[%s885 + $0xa4] sm:$0xf]
        %v914 = vld [vmem:[%s885 + $0xa8] sm:$0xff]
        %v915 = vld [vmem:[%s885 + $0xb0] sm:$0xf]
        %v916 = vld [vmem:[%s885 + $0xb4] sm:$0xff]
        %v917 = vld [vmem:[%s885 + $0xbc] sm:$0xf]
        %s918 = scalar_lea.vmem [#allocation10], 2
        %v919 = vld [vmem:[%s918] ss:$4 sm:$0x7]
        %v921 = vperm.slane %v919, 0
        %v922 = vperm.slane %v919, 1
        %v923 = vperm.slane %v919, 2
        %v959 = vunpack.c.l.b16 %v886
        %v960 = vunpack.c.h.b16 %v886
        %v961 = vunpack.c.l.b16 %v887
        %v962 = vunpack.c.l.b16 %v888
        %v963 = vunpack.c.h.b16 %v888
        %v964 = vunpack.c.l.b16 %v889
        %v965 = vunpack.c.l.b16 %v890
        %v966 = vunpack.c.h.b16 %v890
        %v967 = vunpack.c.l.b16 %v891
        %v968 = vunpack.c.l.b16 %v892
        %v969 = vunpack.c.h.b16 %v892
        %v970 = vunpack.c.l.b16 %v893
        %v971 = vunpack.c.l.b16 %v894
        %v972 = vunpack.c.h.b16 %v894
        %v973 = vunpack.c.l.b16 %v895
        %v974 = vunpack.c.l.b16 %v896
        %v975 = vunpack.c.h.b16 %v896
        %v976 = vunpack.c.l.b16 %v897
        %v977 = vunpack.c.l.b16 %v898
        %v978 = vunpack.c.h.b16 %v898
        %v979 = vunpack.c.l.b16 %v899
        %v980 = vunpack.c.l.b16 %v900
        %v981 = vunpack.c.h.b16 %v900
        %v982 = vunpack.c.l.b16 %v901
        %v983 = vunpack.c.l.b16 %v902
        %v984 = vunpack.c.h.b16 %v902
        %v985 = vunpack.c.l.b16 %v903
        %v986 = vunpack.c.l.b16 %v904
        %v987 = vunpack.c.h.b16 %v904
        %v988 = vunpack.c.l.b16 %v905
        %v989 = vunpack.c.l.b16 %v906
        %v990 = vunpack.c.h.b16 %v906
        %v991 = vunpack.c.l.b16 %v907
        %v992 = vunpack.c.l.b16 %v908
        %v993 = vunpack.c.h.b16 %v908
        %v994 = vunpack.c.l.b16 %v909
        %v995 = vunpack.c.l.b16 %v910
        %v996 = vunpack.c.h.b16 %v910
        %v997 = vunpack.c.l.b16 %v911
        %v998 = vunpack.c.l.b16 %v912
        %v999 = vunpack.c.h.b16 %v912
        %v1000 = vunpack.c.l.b16 %v913
        %v1001 = vunpack.c.l.b16 %v914
        %v1002 = vunpack.c.h.b16 %v914
        %v1003 = vunpack.c.l.b16 %v915
        %v1004 = vunpack.c.l.b16 %v916
        %v1005 = vunpack.c.h.b16 %v916
        %v1006 = vunpack.c.l.b16 %v917
        %v1007 = vpack.c.b16 %v962, %v959
        %v1008 = vpack.c.b16 %v963, %v960
        %v1009 = vpack.c.b16 %v964, %v961
        %v1010 = vpack.c.b16 %v968, %v965
        %v1011 = vpack.c.b16 %v969, %v966
        %v1012 = vpack.c.b16 %v970, %v967
        %v1013 = vpack.c.b16 %v974, %v971
        %v1014 = vpack.c.b16 %v975, %v972
        %v1015 = vpack.c.b16 %v976, %v973
        %v1016 = vpack.c.b16 %v980, %v977
        %v1017 = vpack.c.b16 %v981, %v978
        %v1018 = vpack.c.b16 %v982, %v979
        %v1019 = vpack.c.b16 %v986, %v983
        %v1020 = vpack.c.b16 %v987, %v984
        %v1021 = vpack.c.b16 %v988, %v985
        %v1022 = vpack.c.b16 %v992, %v989
        %v1023 = vpack.c.b16 %v993, %v990
        %v1024 = vpack.c.b16 %v994, %v991
        %v1025 = vpack.c.b16 %v998, %v995
        %v1026 = vpack.c.b16 %v999, %v996
        %v1027 = vpack.c.b16 %v1000, %v997
        %v1028 = vpack.c.b16 %v1004, %v1001
        %v1029 = vpack.c.b16 %v1005, %v1002
        %v1030 = vpack.c.b16 %v1006, %v1003
        %1055 = vmatpush.bf16.msra.mxu0 %v1028
        %1056 = vmatpush.bf16.msra.mxu0 %v1025
        %1057 = vmatpush.bf16.msra.mxu0 %v1022
        %1058 = vmatpush.bf16.msra.mxu0 %v1019
        %1059 = vmatpush.bf16.msra.mxu0 %v1016
        %1060 = vmatpush.bf16.msra.mxu0 %v1013
        %1061 = vmatpush.bf16.msra.mxu0 %v1010
        %1062 = vmatpush.bf16.msra.mxu0 %v1007
        %1063 = vmatmul.bf16.gmra.mxu0 %v884
        %v1064 = vpop.f32.mrf.mxu0
        %v1065 = vadd.f32 %v921, %v1064
        %v1066 = vpop.f32.mrf.mxu0
        %1067 = vdwg.mxu0
        %1068 = vmatpush.bf16.msra.mxu0 %v1029
        %1069 = vmatpush.bf16.msra.mxu0 %v1026
        %1070 = vmatpush.bf16.msra.mxu0 %v1023
        %1071 = vmatpush.bf16.msra.mxu0 %v1020
        %1072 = vmatpush.bf16.msra.mxu0 %v1017
        %1073 = vmatpush.bf16.msra.mxu0 %v1014
        %1074 = vmatpush.bf16.msra.mxu0 %v1011
        %1075 = vmatpush.bf16.msra.mxu0 %v1008
        %1076 = vmatmul.bf16.gmra.mxu0 %v884
        %v1077 = vpop.f32.mrf.mxu0
        %v1078 = vadd.f32 %v922, %v1077
        %v1079 = vpop.f32.mrf.mxu0
        %1080 = vdwg.mxu0
        %1081 = vmatpush.bf16.msra.mxu0 %v1030
        %1082 = vmatpush.bf16.msra.mxu0 %v1027
        %1083 = vmatpush.bf16.msra.mxu0 %v1024
        %1084 = vmatpush.bf16.msra.mxu0 %v1021
        %1085 = vmatpush.bf16.msra.mxu0 %v1018
        %1086 = vmatpush.bf16.msra.mxu0 %v1015
        %1087 = vmatpush.bf16.msra.mxu0 %v1012
        %1088 = vmatpush.bf16.msra.mxu0 %v1009
        %1089 = vmatmul.bf16.gmra.mxu0 %v884
        %v1090 = vpop.f32.mrf.mxu0
        %v1091 = vadd.f32 %v923, %v1090
        %v1092 = vpop.f32.mrf.mxu0
        %1093 = vdwg.mxu0
        %v1094 = vpack.c.bf16 %v643, %v643
        %v1095 = vpack.c.bf16 %v867, %v867
        %1096 = vmatpush.bf16.xpose.msra.mxu0 0
        %1097 = vmatpush.bf16.xpose.msra.mxu0 0
        %1098 = vmatpush.bf16.xpose.msra.mxu0 0
        %1099 = vmatpush.bf16.xpose.msra.mxu0 0
        %1100 = vmatpush.bf16.xpose.msra.mxu0 0
        %1101 = vmatpush.bf16.xpose.msra.mxu0 0
        %1102 = vmatpush.bf16.xpose.msra.mxu0 0
        %1103 = vmatpush.bf16.xpose.msra.mxu0 %v1095
        %1104 = vmatmul.bf16.gmra.mxu0 %v1094
        %v1105 = vpop.f32.mrf.mxu0
        %v1106 = vadd.f32 0.0, %v1105
        %v1107 = vpop.f32.mrf.mxu0
        %1108 = vdwg.mxu0
        %vm1109 = vcmask 64512
        %v1110 = vsel %vm1109, %v1106, -inf
        %1111 = vmax.xlane.f32.xlu0 %v1110
        %v1112 = vpop.xlane.xlu0 %1111
        %v1113 = vsub.f32 %v1106, %v1112
        %v1114 = vmul.f32 %v1113, 1.442695
        %v1115 = vpow.pop %v1114
        %v1116 = vsel %vm1109, %v1115, 0.0
        %1117 = vadd.xlane.f32.xlu0 %v1116
        %v1118 = vpop.xlane.xlu0 %1117
        %v1119 = vrcp.pop %v1118
        %v1120 = vmul.f32 %v1115, %v1119
        %v1121 = vpack.c.bf16 %v1120, %v1120
        %v1122 = vpack.c.bf16 %v880, %v880
        %v1124 = vsel %vm1109, %v1121, 0
        %vm1126 = vcmask 1043456
        %v1128 = vsel %vm1126, %v1122, 0
        %1130 = vmatpush.bf16.msra.mxu0 0
        %1131 = vmatpush.bf16.msra.mxu0 0
        %1132 = vmatpush.bf16.msra.mxu0 0
        %1133 = vmatpush.bf16.msra.mxu0 0
        %1134 = vmatpush.bf16.msra.mxu0 0
        %1135 = vmatpush.bf16.msra.mxu0 0
        %1136 = vmatpush.bf16.msra.mxu0 0
        %1137 = vmatpush.bf16.msra.mxu0 %v1128
        %1138 = vmatmul.bf16.gmra.mxu0 %v1124
        %v1139 = vpop.f32.mrf.mxu0
        %v1140 = vadd.f32 0.0, %v1139
        %v1141 = vpop.f32.mrf.mxu0
        %1142 = vdwg.mxu0
        %v1143 = vpack.c.bf16 %v854, %v854
        %v1144 = vpack.c.bf16 %v1078, %v1078
        %1145 = vmatpush.bf16.xpose.msra.mxu0 0
        %1146 = vmatpush.bf16.xpose.msra.mxu0 0
        %1147 = vmatpush.bf16.xpose.msra.mxu0 0
        %1148 = vmatpush.bf16.xpose.msra.mxu0 0
        %1149 = vmatpush.bf16.xpose.msra.mxu0 0
        %1150 = vmatpush.bf16.xpose.msra.mxu0 0
        %1151 = vmatpush.bf16.xpose.msra.mxu0 0
        %1152 = vmatpush.bf16.xpose.msra.mxu0 %v1144
        %1153 = vmatmul.bf16.gmra.mxu0 %v1143
        %v1154 = vpop.f32.mrf.mxu0
        %v1155 = vadd.f32 0.0, %v1154
        %v1156 = vpop.f32.mrf.mxu0
        %1157 = vdwg.mxu0
        %v1158 = vsel %vm1109, %v1155, -inf
        %1159 = vmax.xlane.f32.xlu0 %v1158
        %v1160 = vpop.xlane.xlu0 %1159
        %v1161 = vsub.f32 %v1155, %v1160
        %v1162 = vmul.f32 %v1161, 1.442695
        %v1163 = vpow.pop %v1162
        %v1164 = vsel %vm1109, %v1163, 0.0
        %1165 = vadd.xlane.f32.xlu0 %v1164
        %v1166 = vpop.xlane.xlu0 %1165
        %v1167 = vrcp.pop %v1166
        %v1168 = vmul.f32 %v1163, %v1167
        %v1169 = vpack.c.bf16 %v1168, %v1168
        %v1170 = vpack.c.bf16 %v1091, %v1091
        %v1172 = vsel %vm1109, %v1169, 0
        %v1175 = vsel %vm1126, %v1170, 0
        %1177 = vmatpush.bf16.msra.mxu0 0
        %1178 = vmatpush.bf16.msra.mxu0 0
        %1179 = vmatpush.bf16.msra.mxu0 0
        %1180 = vmatpush.bf16.msra.mxu0 0
        %1181 = vmatpush.bf16.msra.mxu0 0
        %1182 = vmatpush.bf16.msra.mxu0 0
        %1183 = vmatpush.bf16.msra.mxu0 0
        %1184 = vmatpush.bf16.msra.mxu0 %v1175
        %1185 = vmatmul.bf16.gmra.mxu0 %v1172
        %v1186 = vpop.f32.mrf.mxu0
        %v1187 = vadd.f32 0.0, %v1186
        %v1188 = vpop.f32.mrf.mxu0
        %1189 = vdwg.mxu0
        %v1190 = vpack.c.bf16 %v1065, %v1065
        %v1191 = vpack.c.bf16 %v656, %v656
        %1192 = vmatpush.bf16.xpose.msra.mxu0 0
        %1193 = vmatpush.bf16.xpose.msra.mxu0 0
        %1194 = vmatpush.bf16.xpose.msra.mxu0 0
        %1195 = vmatpush.bf16.xpose.msra.mxu0 0
        %1196 = vmatpush.bf16.xpose.msra.mxu0 0
        %1197 = vmatpush.bf16.xpose.msra.mxu0 0
        %1198 = vmatpush.bf16.xpose.msra.mxu0 0
        %1199 = vmatpush.bf16.xpose.msra.mxu0 %v1191
        %1200 = vmatmul.bf16.gmra.mxu0 %v1190
        %v1201 = vpop.f32.mrf.mxu0
        %v1202 = vadd.f32 0.0, %v1201
        %v1203 = vpop.f32.mrf.mxu0
        %1204 = vdwg.mxu0
        %v1205 = vsel %vm1109, %v1202, -inf
        %1206 = vmax.xlane.f32.xlu0 %v1205
        %v1207 = vpop.xlane.xlu0 %1206
        %v1208 = vsub.f32 %v1202, %v1207
        %v1209 = vmul.f32 %v1208, 1.442695
        %v1210 = vpow.pop %v1209
        %v1211 = vsel %vm1109, %v1210, 0.0
        %1212 = vadd.xlane.f32.xlu0 %v1211
        %v1213 = vpop.xlane.xlu0 %1212
        %v1214 = vrcp.pop %v1213
        %v1215 = vmul.f32 %v1210, %v1214
        %v1216 = vpack.c.bf16 %v1215, %v1215
        %v1217 = vpack.c.bf16 %v669, %v669
        %v1219 = vsel %vm1109, %v1216, 0
        %v1222 = vsel %vm1126, %v1217, 0
        %1224 = vmatpush.bf16.msra.mxu0 0
        %1225 = vmatpush.bf16.msra.mxu0 0
        %1226 = vmatpush.bf16.msra.mxu0 0
        %1227 = vmatpush.bf16.msra.mxu0 0
        %1228 = vmatpush.bf16.msra.mxu0 0
        %1229 = vmatpush.bf16.msra.mxu0 0
        %1230 = vmatpush.bf16.msra.mxu0 0
        %1231 = vmatpush.bf16.msra.mxu0 %v1222
        %1232 = vmatmul.bf16.gmra.mxu0 %v1219
        %v1233 = vpop.f32.mrf.mxu0
        %v1234 = vadd.f32 0.0, %v1233
        %v1235 = vpop.f32.mrf.mxu0
        %1236 = vdwg.mxu0
        %v1237 = vld [vmem:[#allocation11] sm:$0xf]
        %v1238 = vld [vmem:[#allocation11 + $0x4] sm:$0xf]
        %v1239 = vld [vmem:[#allocation11 + $0x8] sm:$0xf]
        %v1240 = vld [vmem:[#allocation11 + $0xc] sm:$0xf]
        %v1241 = vld [vmem:[#allocation11 + $0x10] sm:$0xf]
        %v1242 = vld [vmem:[#allocation11 + $0x14] sm:$0xf]
        %v1243 = vld [vmem:[#allocation11 + $0x18] sm:$0xf]
        %v1244 = vld [vmem:[#allocation11 + $0x1c] sm:$0xf]
        %v1245 = vld [vmem:[#allocation11 + $0x20] sm:$0xf]
        %v1246 = vld [vmem:[#allocation11 + $0x24] sm:$0xf]
        %v1247 = vld [vmem:[#allocation11 + $0x28] sm:$0xf]
        %v1248 = vld [vmem:[#allocation11 + $0x2c] sm:$0xf]
        %v1249 = vld [vmem:[#allocation11 + $0x30] sm:$0xf]
        %v1250 = vld [vmem:[#allocation11 + $0x34] sm:$0xf]
        %v1251 = vld [vmem:[#allocation11 + $0x38] sm:$0xf]
        %v1252 = vld [vmem:[#allocation11 + $0x3c] sm:$0xf]
        %v1253 = vpack.c.bf16 %v1140, %v1140
        %v1254 = vld [vmem:[#allocation13] sm:$0xf]
        %v1255 = vld [vmem:[#allocation13 + $0x4] sm:$0xf]
        %v1256 = vld [vmem:[#allocation13 + $0x8] sm:$0xf]
        %v1257 = vld [vmem:[#allocation13 + $0xc] sm:$0xf]
        %v1258 = vld [vmem:[#allocation13 + $0x10] sm:$0xf]
        %v1259 = vld [vmem:[#allocation13 + $0x14] sm:$0xf]
        %v1260 = vld [vmem:[#allocation13 + $0x18] sm:$0xf]
        %v1261 = vld [vmem:[#allocation13 + $0x1c] sm:$0xf]
        %v1262 = vld [vmem:[#allocation13 + $0x20] sm:$0xf]
        %v1263 = vld [vmem:[#allocation13 + $0x24] sm:$0xf]
        %v1264 = vld [vmem:[#allocation13 + $0x28] sm:$0xf]
        %v1265 = vld [vmem:[#allocation13 + $0x2c] sm:$0xf]
        %v1266 = vld [vmem:[#allocation13 + $0x30] sm:$0xf]
        %v1267 = vld [vmem:[#allocation13 + $0x34] sm:$0xf]
        %v1268 = vld [vmem:[#allocation13 + $0x38] sm:$0xf]
        %v1269 = vld [vmem:[#allocation13 + $0x3c] sm:$0xf]
        %v1286 = vunpack.c.l.b16 %v1254
        %v1287 = vunpack.c.l.b16 %v1255
        %v1288 = vunpack.c.l.b16 %v1256
        %v1289 = vunpack.c.l.b16 %v1257
        %v1290 = vunpack.c.l.b16 %v1258
        %v1291 = vunpack.c.l.b16 %v1259
        %v1292 = vunpack.c.l.b16 %v1260
        %v1293 = vunpack.c.l.b16 %v1261
        %v1294 = vunpack.c.l.b16 %v1262
        %v1295 = vunpack.c.l.b16 %v1263
        %v1296 = vunpack.c.l.b16 %v1264
        %v1297 = vunpack.c.l.b16 %v1265
        %v1298 = vunpack.c.l.b16 %v1266
        %v1299 = vunpack.c.l.b16 %v1267
        %v1300 = vunpack.c.l.b16 %v1268
        %v1301 = vunpack.c.l.b16 %v1269
        %v1302 = vpack.c.b16 %v1287, %v1286
        %v1303 = vpack.c.b16 %v1289, %v1288
        %v1304 = vpack.c.b16 %v1291, %v1290
        %v1305 = vpack.c.b16 %v1293, %v1292
        %v1306 = vpack.c.b16 %v1295, %v1294
        %v1307 = vpack.c.b16 %v1297, %v1296
        %v1308 = vpack.c.b16 %v1299, %v1298
        %v1309 = vpack.c.b16 %v1301, %v1300
        %1318 = vmatpush.bf16.msra.mxu0 %v1309
        %1319 = vmatpush.bf16.msra.mxu0 %v1308
        %1320 = vmatpush.bf16.msra.mxu0 %v1307
        %1321 = vmatpush.bf16.msra.mxu0 %v1306
        %1322 = vmatpush.bf16.msra.mxu0 %v1305
        %1323 = vmatpush.bf16.msra.mxu0 %v1304
        %1324 = vmatpush.bf16.msra.mxu0 %v1303
        %1325 = vmatpush.bf16.msra.mxu0 %v1302
        %1326 = vmatmul.bf16.gmra.mxu0 %v1253
        %v1327 = vpop.f32.mrf.mxu0
        %v1328 = vadd.f32 0.0, %v1327
        %v1329 = vpop.f32.mrf.mxu0
        %1330 = vdwg.mxu0
        %v1347 = vunpack.c.l.b16 %v1237
        %v1348 = vunpack.c.l.b16 %v1238
        %v1349 = vunpack.c.l.b16 %v1239
        %v1350 = vunpack.c.l.b16 %v1240
        %v1351 = vunpack.c.l.b16 %v1241
        %v1352 = vunpack.c.l.b16 %v1242
        %v1353 = vunpack.c.l.b16 %v1243
        %v1354 = vunpack.c.l.b16 %v1244
        %v1355 = vunpack.c.l.b16 %v1245
        %v1356 = vunpack.c.l.b16 %v1246
        %v1357 = vunpack.c.l.b16 %v1247
        %v1358 = vunpack.c.l.b16 %v1248
        %v1359 = vunpack.c.l.b16 %v1249
        %v1360 = vunpack.c.l.b16 %v1250
        %v1361 = vunpack.c.l.b16 %v1251
        %v1362 = vunpack.c.l.b16 %v1252
        %v1363 = vpack.c.b16 %v1348, %v1347
        %v1364 = vpack.c.b16 %v1350, %v1349
        %v1365 = vpack.c.b16 %v1352, %v1351
        %v1366 = vpack.c.b16 %v1354, %v1353
        %v1367 = vpack.c.b16 %v1356, %v1355
        %v1368 = vpack.c.b16 %v1358, %v1357
        %v1369 = vpack.c.b16 %v1360, %v1359
        %v1370 = vpack.c.b16 %v1362, %v1361
        %1379 = vmatpush.bf16.msra.mxu0 %v1370
        %1380 = vmatpush.bf16.msra.mxu0 %v1369
        %1381 = vmatpush.bf16.msra.mxu0 %v1368
        %1382 = vmatpush.bf16.msra.mxu0 %v1367
        %1383 = vmatpush.bf16.msra.mxu0 %v1366
        %1384 = vmatpush.bf16.msra.mxu0 %v1365
        %1385 = vmatpush.bf16.msra.mxu0 %v1364
        %1386 = vmatpush.bf16.msra.mxu0 %v1363
        %1387 = vmatmul.bf16.gmra.mxu0 %v464
        %v1388 = vpop.f32.mrf.mxu0
        %v1389 = vadd.f32 %v1328, %v1388
        %v1390 = vpop.f32.mrf.mxu0
        %1391 = vdwg.mxu0
        %v1392 = vld [vmem:[%s7] sm:$0x1]
        %v1393 = vperm.slane %v1392, 0
        %v1394 = vadd.f32 %v1389, %v1393
        %1395 = vst [vmem:[%s461] sm:$0xff] %v1394
        %s1396 = scalar_lea.vmem [#allocation11], 64
        %v1397 = vld [vmem:[%s1396] sm:$0xf]
        %v1398 = vld [vmem:[%s1396 + $0x4] sm:$0xf]
        %v1399 = vld [vmem:[%s1396 + $0x8] sm:$0xf]
        %v1400 = vld [vmem:[%s1396 + $0xc] sm:$0xf]
        %v1401 = vld [vmem:[%s1396 + $0x10] sm:$0xf]
        %v1402 = vld [vmem:[%s1396 + $0x14] sm:$0xf]
        %v1403 = vld [vmem:[%s1396 + $0x18] sm:$0xf]
        %v1404 = vld [vmem:[%s1396 + $0x1c] sm:$0xf]
        %v1405 = vld [vmem:[%s1396 + $0x20] sm:$0xf]
        %v1406 = vld [vmem:[%s1396 + $0x24] sm:$0xf]
        %v1407 = vld [vmem:[%s1396 + $0x28] sm:$0xf]
        %v1408 = vld [vmem:[%s1396 + $0x2c] sm:$0xf]
        %v1409 = vld [vmem:[%s1396 + $0x30] sm:$0xf]
        %v1410 = vld [vmem:[%s1396 + $0x34] sm:$0xf]
        %v1411 = vld [vmem:[%s1396 + $0x38] sm:$0xf]
        %v1412 = vld [vmem:[%s1396 + $0x3c] sm:$0xf]
        %v1413 = vpack.c.bf16 %v1187, %v1187
        %s1414 = scalar_lea.vmem [#allocation13], 64
        %v1415 = vld [vmem:[%s1414] sm:$0xf]
        %v1416 = vld [vmem:[%s1414 + $0x4] sm:$0xf]
        %v1417 = vld [vmem:[%s1414 + $0x8] sm:$0xf]
        %v1418 = vld [vmem:[%s1414 + $0xc] sm:$0xf]
        %v1419 = vld [vmem:[%s1414 + $0x10] sm:$0xf]
        %v1420 = vld [vmem:[%s1414 + $0x14] sm:$0xf]
        %v1421 = vld [vmem:[%s1414 + $0x18] sm:$0xf]
        %v1422 = vld [vmem:[%s1414 + $0x1c] sm:$0xf]
        %v1423 = vld [vmem:[%s1414 + $0x20] sm:$0xf]
        %v1424 = vld [vmem:[%s1414 + $0x24] sm:$0xf]
        %v1425 = vld [vmem:[%s1414 + $0x28] sm:$0xf]
        %v1426 = vld [vmem:[%s1414 + $0x2c] sm:$0xf]
        %v1427 = vld [vmem:[%s1414 + $0x30] sm:$0xf]
        %v1428 = vld [vmem:[%s1414 + $0x34] sm:$0xf]
        %v1429 = vld [vmem:[%s1414 + $0x38] sm:$0xf]
        %v1430 = vld [vmem:[%s1414 + $0x3c] sm:$0xf]
        %v1447 = vunpack.c.l.b16 %v1415
        %v1448 = vunpack.c.l.b16 %v1416
        %v1449 = vunpack.c.l.b16 %v1417
        %v1450 = vunpack.c.l.b16 %v1418
        %v1451 = vunpack.c.l.b16 %v1419
        %v1452 = vunpack.c.l.b16 %v1420
        %v1453 = vunpack.c.l.b16 %v1421
        %v1454 = vunpack.c.l.b16 %v1422
        %v1455 = vunpack.c.l.b16 %v1423
        %v1456 = vunpack.c.l.b16 %v1424
        %v1457 = vunpack.c.l.b16 %v1425
        %v1458 = vunpack.c.l.b16 %v1426
        %v1459 = vunpack.c.l.b16 %v1427
        %v1460 = vunpack.c.l.b16 %v1428
        %v1461 = vunpack.c.l.b16 %v1429
        %v1462 = vunpack.c.l.b16 %v1430
        %v1463 = vpack.c.b16 %v1448, %v1447
        %v1464 = vpack.c.b16 %v1450, %v1449
        %v1465 = vpack.c.b16 %v1452, %v1451
        %v1466 = vpack.c.b16 %v1454, %v1453
        %v1467 = vpack.c.b16 %v1456, %v1455
        %v1468 = vpack.c.b16 %v1458, %v1457
        %v1469 = vpack.c.b16 %v1460, %v1459
        %v1470 = vpack.c.b16 %v1462, %v1461
        %1479 = vmatpush.bf16.msra.mxu0 %v1470
        %1480 = vmatpush.bf16.msra.mxu0 %v1469
        %1481 = vmatpush.bf16.msra.mxu0 %v1468
        %1482 = vmatpush.bf16.msra.mxu0 %v1467
        %1483 = vmatpush.bf16.msra.mxu0 %v1466
        %1484 = vmatpush.bf16.msra.mxu0 %v1465
        %1485 = vmatpush.bf16.msra.mxu0 %v1464
        %1486 = vmatpush.bf16.msra.mxu0 %v1463
        %1487 = vmatmul.bf16.gmra.mxu0 %v1413
        %v1488 = vpop.f32.mrf.mxu0
        %v1489 = vadd.f32 0.0, %v1488
        %v1490 = vpop.f32.mrf.mxu0
        %1491 = vdwg.mxu0
        %v1508 = vunpack.c.l.b16 %v1397
        %v1509 = vunpack.c.l.b16 %v1398
        %v1510 = vunpack.c.l.b16 %v1399
        %v1511 = vunpack.c.l.b16 %v1400
        %v1512 = vunpack.c.l.b16 %v1401
        %v1513 = vunpack.c.l.b16 %v1402
        %v1514 = vunpack.c.l.b16 %v1403
        %v1515 = vunpack.c.l.b16 %v1404
        %v1516 = vunpack.c.l.b16 %v1405
        %v1517 = vunpack.c.l.b16 %v1406
        %v1518 = vunpack.c.l.b16 %v1407
        %v1519 = vunpack.c.l.b16 %v1408
        %v1520 = vunpack.c.l.b16 %v1409
        %v1521 = vunpack.c.l.b16 %v1410
        %v1522 = vunpack.c.l.b16 %v1411
        %v1523 = vunpack.c.l.b16 %v1412
        %v1524 = vpack.c.b16 %v1509, %v1508
        %v1525 = vpack.c.b16 %v1511, %v1510
        %v1526 = vpack.c.b16 %v1513, %v1512
        %v1527 = vpack.c.b16 %v1515, %v1514
        %v1528 = vpack.c.b16 %v1517, %v1516
        %v1529 = vpack.c.b16 %v1519, %v1518
        %v1530 = vpack.c.b16 %v1521, %v1520
        %v1531 = vpack.c.b16 %v1523, %v1522
        %1540 = vmatpush.bf16.msra.mxu0 %v1531
        %1541 = vmatpush.bf16.msra.mxu0 %v1530
        %1542 = vmatpush.bf16.msra.mxu0 %v1529
        %1543 = vmatpush.bf16.msra.mxu0 %v1528
        %1544 = vmatpush.bf16.msra.mxu0 %v1527
        %1545 = vmatpush.bf16.msra.mxu0 %v1526
        %1546 = vmatpush.bf16.msra.mxu0 %v1525
        %1547 = vmatpush.bf16.msra.mxu0 %v1524
        %1548 = vmatmul.bf16.gmra.mxu0 %v673
        %v1549 = vpop.f32.mrf.mxu0
        %v1550 = vadd.f32 %v1489, %v1549
        %v1551 = vpop.f32.mrf.mxu0
        %1552 = vdwg.mxu0
        %v1553 = vld [vmem:[%s7 + $0x1] sm:$0x1]
        %v1554 = vperm.slane %v1553, 0
        %v1555 = vadd.f32 %v1550, %v1554
        %1556 = vst [vmem:[%s461 + $0x8] sm:$0xff] %v1555
        %s1557 = scalar_lea.vmem [#allocation11], 128
        %v1558 = vld [vmem:[%s1557] sm:$0xf]
        %v1559 = vld [vmem:[%s1557 + $0x4] sm:$0xf]
        %v1560 = vld [vmem:[%s1557 + $0x8] sm:$0xf]
        %v1561 = vld [vmem:[%s1557 + $0xc] sm:$0xf]
        %v1562 = vld [vmem:[%s1557 + $0x10] sm:$0xf]
        %v1563 = vld [vmem:[%s1557 + $0x14] sm:$0xf]
        %v1564 = vld [vmem:[%s1557 + $0x18] sm:$0xf]
        %v1565 = vld [vmem:[%s1557 + $0x1c] sm:$0xf]
        %v1566 = vld [vmem:[%s1557 + $0x20] sm:$0xf]
        %v1567 = vld [vmem:[%s1557 + $0x24] sm:$0xf]
        %v1568 = vld [vmem:[%s1557 + $0x28] sm:$0xf]
        %v1569 = vld [vmem:[%s1557 + $0x2c] sm:$0xf]
        %v1570 = vld [vmem:[%s1557 + $0x30] sm:$0xf]
        %v1571 = vld [vmem:[%s1557 + $0x34] sm:$0xf]
        %v1572 = vld [vmem:[%s1557 + $0x38] sm:$0xf]
        %v1573 = vld [vmem:[%s1557 + $0x3c] sm:$0xf]
        %v1574 = vpack.c.bf16 %v1234, %v1234
        %s1575 = scalar_lea.vmem [#allocation13], 128
        %v1576 = vld [vmem:[%s1575] sm:$0xf]
        %v1577 = vld [vmem:[%s1575 + $0x4] sm:$0xf]
        %v1578 = vld [vmem:[%s1575 + $0x8] sm:$0xf]
        %v1579 = vld [vmem:[%s1575 + $0xc] sm:$0xf]
        %v1580 = vld [vmem:[%s1575 + $0x10] sm:$0xf]
        %v1581 = vld [vmem:[%s1575 + $0x14] sm:$0xf]
        %v1582 = vld [vmem:[%s1575 + $0x18] sm:$0xf]
        %v1583 = vld [vmem:[%s1575 + $0x1c] sm:$0xf]
        %v1584 = vld [vmem:[%s1575 + $0x20] sm:$0xf]
        %v1585 = vld [vmem:[%s1575 + $0x24] sm:$0xf]
        %v1586 = vld [vmem:[%s1575 + $0x28] sm:$0xf]
        %v1587 = vld [vmem:[%s1575 + $0x2c] sm:$0xf]
        %v1588 = vld [vmem:[%s1575 + $0x30] sm:$0xf]
        %v1589 = vld [vmem:[%s1575 + $0x34] sm:$0xf]
        %v1590 = vld [vmem:[%s1575 + $0x38] sm:$0xf]
        %v1591 = vld [vmem:[%s1575 + $0x3c] sm:$0xf]
        %v1608 = vunpack.c.l.b16 %v1576
        %v1609 = vunpack.c.l.b16 %v1577
        %v1610 = vunpack.c.l.b16 %v1578
        %v1611 = vunpack.c.l.b16 %v1579
        %v1612 = vunpack.c.l.b16 %v1580
        %v1613 = vunpack.c.l.b16 %v1581
        %v1614 = vunpack.c.l.b16 %v1582
        %v1615 = vunpack.c.l.b16 %v1583
        %v1616 = vunpack.c.l.b16 %v1584
        %v1617 = vunpack.c.l.b16 %v1585
        %v1618 = vunpack.c.l.b16 %v1586
        %v1619 = vunpack.c.l.b16 %v1587
        %v1620 = vunpack.c.l.b16 %v1588
        %v1621 = vunpack.c.l.b16 %v1589
        %v1622 = vunpack.c.l.b16 %v1590
        %v1623 = vunpack.c.l.b16 %v1591
        %v1624 = vpack.c.b16 %v1609, %v1608
        %v1625 = vpack.c.b16 %v1611, %v1610
        %v1626 = vpack.c.b16 %v1613, %v1612
        %v1627 = vpack.c.b16 %v1615, %v1614
        %v1628 = vpack.c.b16 %v1617, %v1616
        %v1629 = vpack.c.b16 %v1619, %v1618
        %v1630 = vpack.c.b16 %v1621, %v1620
        %v1631 = vpack.c.b16 %v1623, %v1622
        %1640 = vmatpush.bf16.msra.mxu0 %v1631
        %1641 = vmatpush.bf16.msra.mxu0 %v1630
        %1642 = vmatpush.bf16.msra.mxu0 %v1629
        %1643 = vmatpush.bf16.msra.mxu0 %v1628
        %1644 = vmatpush.bf16.msra.mxu0 %v1627
        %1645 = vmatpush.bf16.msra.mxu0 %v1626
        %1646 = vmatpush.bf16.msra.mxu0 %v1625
        %1647 = vmatpush.bf16.msra.mxu0 %v1624
        %1648 = vmatmul.bf16.gmra.mxu0 %v1574
        %v1649 = vpop.f32.mrf.mxu0
        %v1650 = vadd.f32 0.0, %v1649
        %v1651 = vpop.f32.mrf.mxu0
        %1652 = vdwg.mxu0
        %v1669 = vunpack.c.l.b16 %v1558
        %v1670 = vunpack.c.l.b16 %v1559
        %v1671 = vunpack.c.l.b16 %v1560
        %v1672 = vunpack.c.l.b16 %v1561
        %v1673 = vunpack.c.l.b16 %v1562
        %v1674 = vunpack.c.l.b16 %v1563
        %v1675 = vunpack.c.l.b16 %v1564
        %v1676 = vunpack.c.l.b16 %v1565
        %v1677 = vunpack.c.l.b16 %v1566
        %v1678 = vunpack.c.l.b16 %v1567
        %v1679 = vunpack.c.l.b16 %v1568
        %v1680 = vunpack.c.l.b16 %v1569
        %v1681 = vunpack.c.l.b16 %v1570
        %v1682 = vunpack.c.l.b16 %v1571
        %v1683 = vunpack.c.l.b16 %v1572
        %v1684 = vunpack.c.l.b16 %v1573
        %v1685 = vpack.c.b16 %v1670, %v1669
        %v1686 = vpack.c.b16 %v1672, %v1671
        %v1687 = vpack.c.b16 %v1674, %v1673
        %v1688 = vpack.c.b16 %v1676, %v1675
        %v1689 = vpack.c.b16 %v1678, %v1677
        %v1690 = vpack.c.b16 %v1680, %v1679
        %v1691 = vpack.c.b16 %v1682, %v1681
        %v1692 = vpack.c.b16 %v1684, %v1683
        %1701 = vmatpush.bf16.msra.mxu0 %v1692
        %1702 = vmatpush.bf16.msra.mxu0 %v1691
        %1703 = vmatpush.bf16.msra.mxu0 %v1690
        %1704 = vmatpush.bf16.msra.mxu0 %v1689
        %1705 = vmatpush.bf16.msra.mxu0 %v1688
        %1706 = vmatpush.bf16.msra.mxu0 %v1687
        %1707 = vmatpush.bf16.msra.mxu0 %v1686
        %1708 = vmatpush.bf16.msra.mxu0 %v1685
        %1709 = vmatmul.bf16.gmra.mxu0 %v884
        %v1710 = vpop.f32.mrf.mxu0
        %v1711 = vadd.f32 %v1650, %v1710
        %v1712 = vpop.f32.mrf.mxu0
        %1713 = vdwg.mxu0
        %v1714 = vld [vmem:[%s7 + $0x2] sm:$0x1]
        %v1715 = vperm.slane %v1714, 0
        %v1716 = vadd.f32 %v1711, %v1715
        %1717 = vst [vmem:[%s461 + $0x10] sm:$0xff] %v1716
        %s1718 = sand.u32 %s221, 1
        %s1719 = scalar_lea.sflag [#allocation4], %s1718
        %s1720 = sand.u32 %s221, 1
        %s1721 = smul.addr %s1720, 24
        %s1722 = scalar_lea.vmem [#allocation14], %s1721
        // Predicated region
        $region81: #{tpu_custom_call.1} parent=51 // pred_check
          %p1723 = pneg %p231
        $region82: #{tpu_custom_call.1} parent=51 // pred_check_branch
          %1725 = sbr.rel (%p1723) target = $region84
        $region83: #{tpu_custom_call.1} parent=51 // pred_region
          %1727 = vsyncadd %s1719, 0
          %s1728 = smul.addr %s30, 3
          %s1729 = smul.addr %s1728, 8
          %s1730 = scalar_lea.hbm %s8, %s1729
          %s1731 = sshll.u32 %s1722, 4
          %s1732 = int_to_ptr.vmem [resolvable:$true] %s1731
          %s1733 = sshll.u32 %s1730, 4
          %s1734 = int_to_ptr.hbm [resolvable:$true] %s1733
          %1739 = dma.vmem_to_hbm [thread:$0]  %s1732, 384, %s1734, %s1719, 128, 128, 8
        $region84: #{tpu_custom_call.1} parent=51 // pred_fallthru
          _
      $region52: #{tpu_custom_call.1} parent=5 // pred_fallthru
        _
      %p1740 = scmp.le.s32.totalorder 2, %s25
      // Predicated region
      $region85: #{tpu_custom_call.1} parent=5 // pred_check
        %p1741 = pneg %p1740
      $region86: #{tpu_custom_call.1} parent=5 // pred_check_branch
        %1743 = sbr.rel (%p1741) target = $region88
      $region87: #{tpu_custom_call.1} parent=5 // pred_region
        %s1744 = ssub.s32 %s25, 2
        // Predicated region
        $region89: #{tpu_custom_call.1} parent=87 // pred_check
          %p1745 = pneg %p237
        $region90: #{tpu_custom_call.1} parent=87 // pred_check_branch
          %1747 = sbr.rel (%p1745) target = $region92
        $region91: #{tpu_custom_call.1} parent=87 // pred_region
          %s1748 = sand.u32 %s222, 1
          %s1749 = scalar_lea.sflag [#allocation4], %s1748
          %s1750 = sand.u32 %s222, 1
          %s1751 = smul.addr %s1750, 24
          %s1752 = scalar_lea.vmem [#allocation14], %s1751
          %1754 = dma.done %s1749, 384
        $region92: #{tpu_custom_call.1} parent=87 // pred_fallthru
          _
      $region88: #{tpu_custom_call.1} parent=5 // pred_fallthru
        _
    $region6: #{tpu_custom_call.1} parent=1 // loop_footer
      %s29 = sadd.s32 1, %s25
    $region7: #{tpu_custom_call.1} parent=1 // loop_footer_branch
      %24 = sbr.rel target = $region3
    $region8: #{tpu_custom_call.1} parent=1 // loop_exit
      _
    %1755 = vsyncpa [#allocation3], 1
    %s1756 = scalar_lea.sflag [#allocation3], 1
    %1757 = vsyncpa %s1756, 1
    %1758 = vsyncpa [#allocation6], 1
    %s1759 = scalar_lea.sflag [#allocation6], 1
    %1760 = vsyncpa %s1759, 1
    %1761 = vsyncpa [#allocation9], 1
    %1762 = vsyncpa [#allocation12], 1
    %1763 = vsyncpa [#allocation4], 1
    %s1764 = scalar_lea.sflag [#allocation4], 1
    %1765 = vsyncpa %s1764, 1

// kernel: tpu_custom_call.1
$region0: #{tpu_custom_call.1}
  #allocation0 [shape = 'u32[]', space=smem, size = 0x4, offset = 0x4, fixed_abs, tag = 'smem constant byte address 0x4 - core index']
  #allocation1 [shape = 'u32[72,128]{1,0:T(1,128)}', space=vmem, size = 0x9000, scoped, tag = 'internal scratch']
  %s0 = inlined_call_operand.hbm [shape: f32[2,8,128], index: 0, kind: input, shape index: {}]
  %s1 = inlined_call_operand.hbm [shape: f32[2,8,128], index: 1, kind: input, shape index: {}]
  %s2 = inlined_call_operand.hbm [shape: f32[2,8,128], index: 2, kind: input, shape index: {}]
  %s3 = inlined_call_operand.hbm [shape: bf16[3,128,384], index: 3, kind: input, shape index: {}]
  %s4 = inlined_call_operand.hbm [shape: f32[3,384], index: 4, kind: input, shape index: {}]
  %s5 = inlined_call_operand.hbm [shape: bf16[3,128,128], index: 5, kind: input, shape index: {}]
  %s6 = inlined_call_operand.hbm [shape: bf16[3,128,128], index: 6, kind: input, shape index: {}]
  %s7 = inlined_call_operand.vmem [shape: f32[3,128], index: 7, kind: input, shape index: {}]
  %s8 = inlined_call_operand.hbm [shape: f32[2,24,128], index: 8, kind: output, shape index: {}]
  %s9 = sld [smem:[#allocation0]]
  $region93: #{tpu_custom_call.1} parent=0
    _
  %s11 = ssub.s32 1, %s9
  %s12 = scalar_select 0, %s11, %s9
  $region1: #{tpu_custom_call.1} parent=0
    #allocation2 [shape = 'u8[8192]{0}', space=vmem, size = 0x2000, scoped, tag = 'input window, operand 0']
    #allocation3 [shape = 's32[2]{0}', space=sflag, size = 0x8, scoped, tag = 'scoped memory for tpu_custom_call.1']
    #allocation4 [shape = 's32[2]{0}', space=sflag, size = 0x8, scoped, tag = 'scoped memory for tpu_custom_call.1']
    #allocation5 [shape = 'u8[8192]{0}', space=vmem, size = 0x2000, scoped, tag = 'input window, operand 1']
    #allocation6 [shape = 's32[2]{0}', space=sflag, size = 0x8, scoped, tag = 'scoped memory for tpu_custom_call.1']
    #allocation7 [shape = 'u8[8192]{0}', space=vmem, size = 0x2000, scoped, tag = 'input window, operand 2']
    #allocation8 [shape = 'u8[294912]{0}', space=vmem, size = 0x48000, scoped, tag = 'input window, operand 3, single buffered']
    #allocation9 [shape = 's32[1]{0}', space=sflag, size = 0x4, scoped, tag = 'scoped memory for tpu_custom_call.1']
    #allocation10 [shape = 'u8[6144]{0}', space=vmem, size = 0x1800, scoped, tag = 'input window, operand 4, single buffered']
    #allocation11 [shape = 'u8[98304]{0}', space=vmem, size = 0x18000, scoped, tag = 'input window, operand 5, single buffered']
    #allocation12 [shape = 's32[1]{0}', space=sflag, size = 0x4, scoped, tag = 'scoped memory for tpu_custom_call.1']
    #allocation13 [shape = 'u8[98304]{0}', space=vmem, size = 0x18000, scoped, tag = 'input window, operand 6, single buffered']
    #allocation14 [shape = 'u8[24576]{0}', space=vmem, size = 0x6000, scoped, tag = 'output window, operand 0']
    %13 = vsyncpa [#allocation3], 0
    %s14 = scalar_lea.sflag [#allocation3], 1
    %15 = vsyncpa %s14, 0
    %16 = vsyncpa [#allocation6], 0
    %s17 = scalar_lea.sflag [#allocation6], 1
    %18 = vsyncpa %s17, 0
    %19 = vsyncpa [#allocation9], 0
    %20 = vsyncpa [#allocation12], 0
    %21 = vsyncpa [#allocation4], 0
    %s22 = scalar_lea.sflag [#allocation4], 1
    %23 = vsyncpa %s22, 0
    loop: start=0, step=1, limit=4
    $region2: #{tpu_custom_call.1} parent=1 // loop_pre_header
      _
    $region3: #{tpu_custom_call.1} parent=1 // loop_header
      %s25 = sphi 0, %s29
      %p26 = scmp.ge.s32.totalorder %s25, 4
      %s35 = sphi 0, %s37
      %s38 = sphi 0, %s35
      %s39 = sphi 0, %s38
      %s55 = sphi 0, %s39
      %s61 = sphi 0, %s63
      %s64 = sphi 0, %s61
      %s65 = sphi 0, %s64
      %s81 = sphi 0, %s65
      %s87 = sphi 0, %s89
      %s90 = sphi 0, %s87
      %s91 = sphi 0, %s90
      %s107 = sphi 0, %s91
      %s111 = sphi 0, %s111
      %s113 = sphi 0, %s111
      %s114 = sphi 0, %s113
      %s128 = sphi 0, %s114
      %s132 = sphi 0, %s132
      %s134 = sphi 0, %s132
      %s135 = sphi 0, %s134
      %s149 = sphi 0, %s135
      %s153 = sphi 0, %s153
      %s155 = sphi 0, %s153
      %s156 = sphi 0, %s155
      %s170 = sphi 0, %s156
      %s174 = sphi 0, %s174
      %s176 = sphi 0, %s174
      %s177 = sphi 0, %s176
      %s191 = sphi 0, %s177
      %s195 = sphi 0, %s195
      %s197 = sphi 0, %s195
      %s198 = sphi 0, %s197
      %s212 = sphi 0, %s198
      %s218 = sphi 0, %s220
      %s221 = sphi 0, %s218
      %s222 = sphi 0, %s221
      %s238 = sphi 0, %s222
    $region4: #{tpu_custom_call.1} parent=1 // loop_header_branch
      %28 = sbr.rel (%p26) target = $region8
    $region5: #{tpu_custom_call.1} parent=1 // loop_body
      %s30 = ssub.s32 %s25, 1
      %s31 = ssub.s32 %s25, 2
      %s32 = sadd.s32 %s25, 1
      %s33 = ssub.s32 %s25, %s32
      %p34 = scmp.eq.s32.totalorder %s33, 0
      %s36 = sadd.s32 %s35, 1
      %s37 = scalar_select %p34, %s35, %s36
      %p40 = pneg %p34
      %p41 = scmp.eq.s32.totalorder %s25, 1
      %p42 = por %p40, %p41
      %p43 = scmp.ne.s32.totalorder %s35, %s38
      %p44 = scmp.eq.s32.totalorder %s25, 0
      %p45 = por %p43, %p44
      %p46 = scmp.ne.s32.totalorder %s35, %s38
      %p47 = scmp.eq.s32.totalorder %s30, 1
      %p48 = por %p46, %p47
      %p49 = scmp.ne.s32.totalorder %s38, %s39
      %p50 = scmp.eq.s32.totalorder %s30, 0
      %p51 = por %p49, %p50
      %p52 = scmp.ne.s32.totalorder %s38, %s39
      %p53 = scmp.eq.s32.totalorder %s31, 1
      %p54 = por %p52, %p53
      %p56 = scmp.ne.s32.totalorder %s39, %s55
      %p57 = scmp.eq.s32.totalorder %s31, 0
      %p58 = por %p56, %p57
      %s59 = ssub.s32 %s25, %s32
      %p60 = scmp.eq.s32.totalorder %s59, 0
      %s62 = sadd.s32 %s61, 1
      %s63 = scalar_select %p60, %s61, %s62
      %p66 = pneg %p60
      %p67 = scmp.eq.s32.totalorder %s25, 1
      %p68 = por %p66, %p67
      %p69 = scmp.ne.s32.totalorder %s61, %s64
      %p70 = scmp.eq.s32.totalorder %s25, 0
      %p71 = por %p69, %p70
      %p72 = scmp.ne.s32.totalorder %s61, %s64
      %p73 = scmp.eq.s32.totalorder %s30, 1
      %p74 = por %p72, %p73
      %p75 = scmp.ne.s32.totalorder %s64, %s65
      %p76 = scmp.eq.s32.totalorder %s30, 0
      %p77 = por %p75, %p76
      %p78 = scmp.ne.s32.totalorder %s64, %s65
      %p79 = scmp.eq.s32.totalorder %s31, 1
      %p80 = por %p78, %p79
      %p82 = scmp.ne.s32.totalorder %s65, %s81
      %p83 = scmp.eq.s32.totalorder %s31, 0
      %p84 = por %p82, %p83
      %s85 = ssub.s32 %s25, %s32
      %p86 = scmp.eq.s32.totalorder %s85, 0
      %s88 = sadd.s32 %s87, 1
      %s89 = scalar_select %p86, %s87, %s88
      %p92 = pneg %p86
      %p93 = scmp.eq.s32.totalorder %s25, 1
      %p94 = por %p92, %p93
      %p95 = scmp.ne.s32.totalorder %s87, %s90
      %p96 = scmp.eq.s32.totalorder %s25, 0
      %p97 = por %p95, %p96
      %p98 = scmp.ne.s32.totalorder %s87, %s90
      %p99 = scmp.eq.s32.totalorder %s30, 1
      %p100 = por %p98, %p99
      %p101 = scmp.ne.s32.totalorder %s90, %s91
      %p102 = scmp.eq.s32.totalorder %s30, 0
      %p103 = por %p101, %p102
      %p104 = scmp.ne.s32.totalorder %s90, %s91
      %p105 = scmp.eq.s32.totalorder %s31, 1
      %p106 = por %p104, %p105
      %p108 = scmp.ne.s32.totalorder %s91, %s107
      %p109 = scmp.eq.s32.totalorder %s31, 0
      %p110 = por %p108, %p109
      %s112 = sadd.s32 %s111, 1
      %p115 = scmp.eq.s32.totalorder %s25, 1
      %p116 = scmp.ne.s32.totalorder %s111, %s113
      %p117 = scmp.eq.s32.totalorder %s25, 0
      %p118 = por %p116, %p117
      %p119 = scmp.ne.s32.totalorder %s111, %s113
      %p120 = scmp.eq.s32.totalorder %s30, 1
      %p121 = por %p119, %p120
      %p122 = scmp.ne.s32.totalorder %s113, %s114
      %p123 = scmp.eq.s32.totalorder %s30, 0
      %p124 = por %p122, %p123
      %p125 = scmp.ne.s32.totalorder %s113, %s114
      %p126 = scmp.eq.s32.totalorder %s31, 1
      %p127 = por %p125, %p126
      %p129 = scmp.ne.s32.totalorder %s114, %s128
      %p130 = scmp.eq.s32.totalorder %s31, 0
      %p131 = por %p129, %p130
      %s133 = sadd.s32 %s132, 1
      %p136 = scmp.eq.s32.totalorder %s25, 1
      %p137 = scmp.ne.s32.totalorder %s132, %s134
      %p138 = scmp.eq.s32.totalorder %s25, 0
      %p139 = por %p137, %p138
      %p140 = scmp.ne.s32.totalorder %s132, %s134
      %p141 = scmp.eq.s32.totalorder %s30, 1
      %p142 = por %p140, %p141
      %p143 = scmp.ne.s32.totalorder %s134, %s135
      %p144 = scmp.eq.s32.totalorder %s30, 0
      %p145 = por %p143, %p144
      %p146 = scmp.ne.s32.totalorder %s134, %s135
      %p147 = scmp.eq.s32.totalorder %s31, 1
      %p148 = por %p146, %p147
      %p150 = scmp.ne.s32.totalorder %s135, %s149
      %p151 = scmp.eq.s32.totalorder %s31, 0
      %p152 = por %p150, %p151
      %s154 = sadd.s32 %s153, 1
      %p157 = scmp.eq.s32.totalorder %s25, 1
      %p158 = scmp.ne.s32.totalorder %s153, %s155
      %p159 = scmp.eq.s32.totalorder %s25, 0
      %p160 = por %p158, %p159
      %p161 = scmp.ne.s32.totalorder %s153, %s155
      %p162 = scmp.eq.s32.totalorder %s30, 1
      %p163 = por %p161, %p162
      %p164 = scmp.ne.s32.totalorder %s155, %s156
      %p165 = scmp.eq.s32.totalorder %s30, 0
      %p166 = por %p164, %p165
      %p167 = scmp.ne.s32.totalorder %s155, %s156
      %p168 = scmp.eq.s32.totalorder %s31, 1
      %p169 = por %p167, %p168
      %p171 = scmp.ne.s32.totalorder %s156, %s170
      %p172 = scmp.eq.s32.totalorder %s31, 0
      %p173 = por %p171, %p172
      %s175 = sadd.s32 %s174, 1
      %p178 = scmp.eq.s32.totalorder %s25, 1
      %p179 = scmp.ne.s32.totalorder %s174, %s176
      %p180 = scmp.eq.s32.totalorder %s25, 0
      %p181 = por %p179, %p180
      %p182 = scmp.ne.s32.totalorder %s174, %s176
      %p183 = scmp.eq.s32.totalorder %s30, 1
      %p184 = por %p182, %p183
      %p185 = scmp.ne.s32.totalorder %s176, %s177
      %p186 = scmp.eq.s32.totalorder %s30, 0
      %p187 = por %p185, %p186
      %p188 = scmp.ne.s32.totalorder %s176, %s177
      %p189 = scmp.eq.s32.totalorder %s31, 1
      %p190 = por %p188, %p189
      %p192 = scmp.ne.s32.totalorder %s177, %s191
      %p193 = scmp.eq.s32.totalorder %s31, 0
      %p194 = por %p192, %p193
      %s196 = sadd.s32 %s195, 1
      %p199 = scmp.eq.s32.totalorder %s25, 1
      %p200 = scmp.ne.s32.totalorder %s195, %s197
      %p201 = scmp.eq.s32.totalorder %s25, 0
      %p202 = por %p200, %p201
      %p203 = scmp.ne.s32.totalorder %s195, %s197
      %p204 = scmp.eq.s32.totalorder %s30, 1
      %p205 = por %p203, %p204
      %p206 = scmp.ne.s32.totalorder %s197, %s198
      %p207 = scmp.eq.s32.totalorder %s30, 0
      %p208 = por %p206, %p207
      %p209 = scmp.ne.s32.totalorder %s197, %s198
      %p210 = scmp.eq.s32.totalorder %s31, 1
      %p211 = por %p209, %p210
      %p213 = scmp.ne.s32.totalorder %s198, %s212
      %p214 = scmp.eq.s32.totalorder %s31, 0
      %p215 = por %p213, %p214
      %s216 = ssub.s32 %s25, %s32
      %p217 = scmp.eq.s32.totalorder %s216, 0
      %s219 = sadd.s32 %s218, 1
      %s220 = scalar_select %p217, %s218, %s219
      %p223 = pneg %p217
      %p224 = scmp.eq.s32.totalorder %s25, 1
      %p225 = por %p223, %p224
      %p226 = scmp.ne.s32.totalorder %s218, %s221
      %p227 = scmp.eq.s32.totalorder %s25, 0
      %p228 = por %p226, %p227
      %p229 = scmp.ne.s32.totalorder %s218, %s221
      %p230 = scmp.eq.s32.totalorder %s30, 1
      %p231 = por %p229, %p230
      %p232 = scmp.ne.s32.totalorder %s221, %s222
      %p233 = scmp.eq.s32.totalorder %s30, 0
      %p234 = por %p232, %p233
      %p235 = scmp.ne.s32.totalorder %s221, %s222
      %p236 = scmp.eq.s32.totalorder %s31, 1
      %p237 = por %p235, %p236
      %p239 = scmp.ne.s32.totalorder %s222, %s238
      %p240 = scmp.eq.s32.totalorder %s31, 0
      %p241 = por %p239, %p240
      %p242 = scmp.le.s32.totalorder 1, %s25
      %p243 = scmp.lt.s32.totalorder %s25, 3
      %p244 = pnand %p242, %p243
      %p245 = pneg %p244
      // Predicated region
      $region9: #{tpu_custom_call.1} parent=5 // pred_check
        _
      $region10: #{tpu_custom_call.1} parent=5 // pred_check_branch
        %247 = sbr.rel (%p244) target = $region12
      $region11: #{tpu_custom_call.1} parent=5 // pred_region
        %s248 = ssub.s32 %s25, 1
        // Predicated region
        $region13: #{tpu_custom_call.1} parent=11 // pred_check
          %p249 = pneg %p124
        $region14: #{tpu_custom_call.1} parent=11 // pred_check_branch
          %251 = sbr.rel (%p249) target = $region16
        $region15: #{tpu_custom_call.1} parent=11 // pred_region
          %253 = vsyncadd [#allocation9], 0
          %s254 = sshll.u32 %s3, 4
          %s255 = int_to_ptr.hbm [resolvable:$true] %s254
          %s256 = sshll.u32 [#allocation8], 4
          %s257 = int_to_ptr.vmem [resolvable:$true] %s256
          %262 = dma.hbm_to_vmem [thread:$0]  %s255, 9216, %s257, [#allocation9], 192, 192, 12
        $region16: #{tpu_custom_call.1} parent=11 // pred_fallthru
          _
        // Predicated region
        $region17: #{tpu_custom_call.1} parent=11 // pred_check
          %p263 = pneg %p145
        $region18: #{tpu_custom_call.1} parent=11 // pred_check_branch
          %265 = sbr.rel (%p263) target = $region20
        $region19: #{tpu_custom_call.1} parent=11 // pred_region
          %267 = vsyncadd [#allocation9], 0
          %s269 = sshll.u32 %s4, 4
          %s270 = int_to_ptr.hbm [resolvable:$true] %s269
          %s271 = sshll.u32 [#allocation10], 4
          %s272 = int_to_ptr.vmem [resolvable:$true] %s271
          %274 = dma.hbm_to_vmem [thread:$0]  %s270, 192, %s272, [#allocation9]
        $region20: #{tpu_custom_call.1} parent=11 // pred_fallthru
          _
        // Predicated region
        $region21: #{tpu_custom_call.1} parent=11 // pred_check
          %p275 = pneg %p166
        $region22: #{tpu_custom_call.1} parent=11 // pred_check_branch
          %277 = sbr.rel (%p275) target = $region24
        $region23: #{tpu_custom_call.1} parent=11 // pred_region
          %279 = vsyncadd [#allocation12], 0
          %s280 = sshll.u32 %s5, 4
          %s281 = int_to_ptr.hbm [resolvable:$true] %s280
          %s282 = sshll.u32 [#allocation11], 4
          %s283 = int_to_ptr.vmem [resolvable:$true] %s282
          %288 = dma.hbm_to_vmem [thread:$0]  %s281, 3072, %s283, [#allocation12], 64, 64, 4
        $region24: #{tpu_custom_call.1} parent=11 // pred_fallthru
          _
        // Predicated region
        $region25: #{tpu_custom_call.1} parent=11 // pred_check
          %p289 = pneg %p187
        $region26: #{tpu_custom_call.1} parent=11 // pred_check_branch
          %291 = sbr.rel (%p289) target = $region28
        $region27: #{tpu_custom_call.1} parent=11 // pred_region
          %293 = vsyncadd [#allocation12], 0
          %s294 = sshll.u32 %s6, 4
          %s295 = int_to_ptr.hbm [resolvable:$true] %s294
          %s296 = sshll.u32 [#allocation13], 4
          %s297 = int_to_ptr.vmem [resolvable:$true] %s296
          %302 = dma.hbm_to_vmem [thread:$0]  %s295, 3072, %s297, [#allocation12], 64, 64, 4
        $region28: #{tpu_custom_call.1} parent=11 // pred_fallthru
          _
        // Predicated region
        $region29: #{tpu_custom_call.1} parent=11 // pred_check
          %p303 = pneg %p208
        $region30: #{tpu_custom_call.1} parent=11 // pred_check_branch
          %305 = sbr.rel (%p303) target = $region32
        $region31: #{tpu_custom_call.1} parent=11 // pred_region
          _
        $region32: #{tpu_custom_call.1} parent=11 // pred_fallthru
          _
      $region12: #{tpu_custom_call.1} parent=5 // pred_fallthru
        _
      %p306 = scmp.lt.s32.totalorder %s25, 2
      // Predicated region
      $region33: #{tpu_custom_call.1} parent=5 // pred_check
        %p307 = pneg %p306
      $region34: #{tpu_custom_call.1} parent=5 // pred_check_branch
        %309 = sbr.rel (%p307) target = $region36
      $region35: #{tpu_custom_call.1} parent=5 // pred_region
        // Predicated region
        $region37: #{tpu_custom_call.1} parent=35 // pred_check
          %p310 = pneg %p45
        $region38: #{tpu_custom_call.1} parent=35 // pred_check_branch
          %312 = sbr.rel (%p310) target = $region40
        $region39: #{tpu_custom_call.1} parent=35 // pred_region
          %s313 = sand.u32 %s35, 1
          %s314 = scalar_lea.sflag [#allocation3], %s313
          %s315 = sand.u32 %s35, 1
          %s316 = smul.addr %s315, 8
          %s317 = scalar_lea.vmem [#allocation2], %s316
          %319 = vsyncadd %s314, 0
          %s320 = smul.addr %s25, 8
          %s321 = scalar_lea.hbm %s0, %s320
          %s323 = sshll.u32 %s321, 4
          %s324 = int_to_ptr.hbm [resolvable:$true] %s323
          %s325 = sshll.u32 %s317, 4
          %s326 = int_to_ptr.vmem [resolvable:$true] %s325
          %328 = dma.hbm_to_vmem [thread:$0]  %s324, 128, %s326, %s314
        $region40: #{tpu_custom_call.1} parent=35 // pred_fallthru
          _
        // Predicated region
        $region41: #{tpu_custom_call.1} parent=35 // pred_check
          %p329 = pneg %p71
        $region42: #{tpu_custom_call.1} parent=35 // pred_check_branch
          %331 = sbr.rel (%p329) target = $region44
        $region43: #{tpu_custom_call.1} parent=35 // pred_region
          %s332 = sand.u32 %s25, 1
          %s333 = scalar_lea.sflag [#allocation6], %s332
          %s334 = sand.u32 %s61, 1
          %s335 = smul.addr %s334, 8
          %s336 = scalar_lea.vmem [#allocation5], %s335
          %338 = vsyncadd %s333, 0
          %s339 = smul.addr %s25, 8
          %s340 = scalar_lea.hbm %s1, %s339
          %s342 = sshll.u32 %s340, 4
          %s343 = int_to_ptr.hbm [resolvable:$true] %s342
          %s344 = sshll.u32 %s336, 4
          %s345 = int_to_ptr.vmem [resolvable:$true] %s344
          %347 = dma.hbm_to_vmem [thread:$0]  %s343, 128, %s345, %s333
        $region44: #{tpu_custom_call.1} parent=35 // pred_fallthru
          _
        // Predicated region
        $region45: #{tpu_custom_call.1} parent=35 // pred_check
          %p348 = pneg %p97
        $region46: #{tpu_custom_call.1} parent=35 // pred_check_branch
          %350 = sbr.rel (%p348) target = $region48
        $region47: #{tpu_custom_call.1} parent=35 // pred_region
          %s351 = sand.u32 %s25, 1
          %s352 = scalar_lea.sflag [#allocation6], %s351
          %s353 = sand.u32 %s87, 1
          %s354 = smul.addr %s353, 8
          %s355 = scalar_lea.vmem [#allocation7], %s354
          %357 = vsyncadd %s352, 0
          %s358 = smul.addr %s25, 8
          %s359 = scalar_lea.hbm %s2, %s358
          %s361 = sshll.u32 %s359, 4
          %s362 = int_to_ptr.hbm [resolvable:$true] %s361
          %s363 = sshll.u32 %s355, 4
          %s364 = int_to_ptr.vmem [resolvable:$true] %s363
          %366 = dma.hbm_to_vmem [thread:$0]  %s362, 128, %s364, %s352
        $region48: #{tpu_custom_call.1} parent=35 // pred_fallthru
          _
      $region36: #{tpu_custom_call.1} parent=5 // pred_fallthru
        _
      %p367 = scmp.le.s32.totalorder 1, %s25
      %p368 = scmp.lt.s32.totalorder %s25, 3
      %p369 = pnand %p367, %p368
      %p370 = pneg %p369
      // Predicated region
      $region49: #{tpu_custom_call.1} parent=5 // pred_check
        _
      $region50: #{tpu_custom_call.1} parent=5 // pred_check_branch
        %372 = sbr.rel (%p369) target = $region52
      $region51: #{tpu_custom_call.1} parent=5 // pred_region
        %s373 = ssub.s32 %s25, 1
        %s374 = sand.u32 %s38, 1
        %s375 = scalar_lea.sflag [#allocation3], %s374
        %s376 = sand.u32 %s38, 1
        %s377 = smul.addr %s376, 8
        %s378 = scalar_lea.vmem [#allocation2], %s377
        // Predicated region
        $region53: #{tpu_custom_call.1} parent=51 // pred_check
          %p379 = pneg %p51
        $region54: #{tpu_custom_call.1} parent=51 // pred_check_branch
          %381 = sbr.rel (%p379) target = $region56
        $region55: #{tpu_custom_call.1} parent=51 // pred_region
          %383 = dma.done %s375, 128
        $region56: #{tpu_custom_call.1} parent=51 // pred_fallthru
          _
        %s384 = sand.u32 %s30, 1
        %s385 = scalar_lea.sflag [#allocation6], %s384
        %s386 = sand.u32 %s64, 1
        %s387 = smul.addr %s386, 8
        %s388 = scalar_lea.vmem [#allocation5], %s387
        // Predicated region
        $region57: #{tpu_custom_call.1} parent=51 // pred_check
          %p389 = pneg %p77
        $region58: #{tpu_custom_call.1} parent=51 // pred_check_branch
          %391 = sbr.rel (%p389) target = $region60
        $region59: #{tpu_custom_call.1} parent=51 // pred_region
          %393 = dma.done %s385, 128
        $region60: #{tpu_custom_call.1} parent=51 // pred_fallthru
          _
        %s394 = sand.u32 %s30, 1
        %s395 = scalar_lea.sflag [#allocation6], %s394
        %s396 = sand.u32 %s90, 1
        %s397 = smul.addr %s396, 8
        %s398 = scalar_lea.vmem [#allocation7], %s397
        // Predicated region
        $region61: #{tpu_custom_call.1} parent=51 // pred_check
          %p399 = pneg %p103
        $region62: #{tpu_custom_call.1} parent=51 // pred_check_branch
          %401 = sbr.rel (%p399) target = $region64
        $region63: #{tpu_custom_call.1} parent=51 // pred_region
          %403 = dma.done %s395, 128
        $region64: #{tpu_custom_call.1} parent=51 // pred_fallthru
          _
        // Predicated region
        $region65: #{tpu_custom_call.1} parent=51 // pred_check
          %p404 = pneg %p124
        $region66: #{tpu_custom_call.1} parent=51 // pred_check_branch
          %406 = sbr.rel (%p404) target = $region68
        $region67: #{tpu_custom_call.1} parent=51 // pred_region
          %408 = dma.done [#allocation9], 9216
        $region68: #{tpu_custom_call.1} parent=51 // pred_fallthru
          _
        // Predicated region
        $region69: #{tpu_custom_call.1} parent=51 // pred_check
          %p409 = pneg %p145
        $region70: #{tpu_custom_call.1} parent=51 // pred_check_branch
          %411 = sbr.rel (%p409) target = $region72
        $region71: #{tpu_custom_call.1} parent=51 // pred_region
          %413 = dma.done [#allocation9], 192
        $region72: #{tpu_custom_call.1} parent=51 // pred_fallthru
          _
        // Predicated region
        $region73: #{tpu_custom_call.1} parent=51 // pred_check
          %p414 = pneg %p166
        $region74: #{tpu_custom_call.1} parent=51 // pred_check_branch
          %416 = sbr.rel (%p414) target = $region76
        $region75: #{tpu_custom_call.1} parent=51 // pred_region
          %418 = dma.done [#allocation12], 3072
        $region76: #{tpu_custom_call.1} parent=51 // pred_fallthru
          _
        // Predicated region
        $region77: #{tpu_custom_call.1} parent=51 // pred_check
          %p419 = pneg %p187
        $region78: #{tpu_custom_call.1} parent=51 // pred_check_branch
          %421 = sbr.rel (%p419) target = $region80
        $region79: #{tpu_custom_call.1} parent=51 // pred_region
          %423 = dma.done [#allocation12], 3072
        $region80: #{tpu_custom_call.1} parent=51 // pred_fallthru
          _
        %s424 = sand.u32 %s38, 1
        %s425 = scalar_lea.sflag [#allocation3], %s424
        %s426 = sand.u32 %s38, 1
        %s427 = smul.addr %s426, 8
        %s428 = scalar_lea.vmem [#allocation2], %s427
        %p429 = pneg %p51
        %p430 = pneg %p48
        %s431 = sand.u32 %s30, 1
        %s432 = scalar_lea.sflag [#allocation6], %s431
        %s433 = sand.u32 %s64, 1
        %s434 = smul.addr %s433, 8
        %s435 = scalar_lea.vmem [#allocation5], %s434
        %p436 = pneg %p77
        %p437 = pneg %p74
        %s438 = sand.u32 %s30, 1
        %s439 = scalar_lea.sflag [#allocation6], %s438
        %s440 = sand.u32 %s90, 1
        %s441 = smul.addr %s440, 8
        %s442 = scalar_lea.vmem [#allocation7], %s441
        %p443 = pneg %p103
        %p444 = pneg %p100
        %p445 = pneg %p124
        %p446 = pneg %p121
        %p447 = pneg %p145
        %p448 = pneg %p142
        %p449 = pneg %p166
        %p450 = pneg %p163
        %p451 = pneg %p187
        %p452 = pneg %p184
        %p453 = pneg %p208
        %p454 = pneg %p205
        %p455 = pneg %p234
        %p456 = pneg %p231
        %s457 = sand.u32 %s221, 1
        %s458 = scalar_lea.sflag [#allocation4], %s457
        %s459 = sand.u32 %s221, 1
        %s460 = smul.addr %s459, 24
        %s461 = scalar_lea.vmem [#allocation14], %s460
        %v463 = vld [vmem:[%s378] sm:$0xff]
        %v464 = vpack.c.bf16 %v463, %v463
        %v465 = vld [vmem:[#allocation8] sm:$0xff]
        %v466 = vld [vmem:[#allocation8 + $0x8] sm:$0xf]
        %v467 = vld [vmem:[#allocation8 + $0xc] sm:$0xff]
        %v468 = vld [vmem:[#allocation8 + $0x14] sm:$0xf]
        %v469 = vld [vmem:[#allocation8 + $0x18] sm:$0xff]
        %v470 = vld [vmem:[#allocation8 + $0x20] sm:$0xf]
        %v471 = vld [vmem:[#allocation8 + $0x24] sm:$0xff]
        %v472 = vld [vmem:[#allocation8 + $0x2c] sm:$0xf]
        %v473 = vld [vmem:[#allocation8 + $0x30] sm:$0xff]
        %v474 = vld [vmem:[#allocation8 + $0x38] sm:$0xf]
        %v475 = vld [vmem:[#allocation8 + $0x3c] sm:$0xff]
        %v476 = vld [vmem:[#allocation8 + $0x44] sm:$0xf]
        %v477 = vld [vmem:[#allocation8 + $0x48] sm:$0xff]
        %v478 = vld [vmem:[#allocation8 + $0x50] sm:$0xf]
        %v479 = vld [vmem:[#allocation8 + $0x54] sm:$0xff]
        %v480 = vld [vmem:[#allocation8 + $0x5c] sm:$0xf]
        %v481 = vld [vmem:[#allocation8 + $0x60] sm:$0xff]
        %v482 = vld [vmem:[#allocation8 + $0x68] sm:$0xf]
        %v483 = vld [vmem:[#allocation8 + $0x6c] sm:$0xff]
        %v484 = vld [vmem:[#allocation8 + $0x74] sm:$0xf]
        %v485 = vld [vmem:[#allocation8 + $0x78] sm:$0xff]
        %v486 = vld [vmem:[#allocation8 + $0x80] sm:$0xf]
        %v487 = vld [vmem:[#allocation8 + $0x84] sm:$0xff]
        %v488 = vld [vmem:[#allocation8 + $0x8c] sm:$0xf]
        %v489 = vld [vmem:[#allocation8 + $0x90] sm:$0xff]
        %v490 = vld [vmem:[#allocation8 + $0x98] sm:$0xf]
        %v491 = vld [vmem:[#allocation8 + $0x9c] sm:$0xff]
        %v492 = vld [vmem:[#allocation8 + $0xa4] sm:$0xf]
        %v493 = vld [vmem:[#allocation8 + $0xa8] sm:$0xff]
        %v494 = vld [vmem:[#allocation8 + $0xb0] sm:$0xf]
        %v495 = vld [vmem:[#allocation8 + $0xb4] sm:$0xff]
        %v496 = vld [vmem:[#allocation8 + $0xbc] sm:$0xf]
        %v497 = vld [vmem:[#allocation10] ss:$4 sm:$0x7]
        %v499 = vperm.slane %v497, 0
        %v500 = vperm.slane %v497, 1
        %v501 = vperm.slane %v497, 2
        %v537 = vunpack.c.l.b16 %v465
        %v538 = vunpack.c.h.b16 %v465
        %v539 = vunpack.c.l.b16 %v466
        %v540 = vunpack.c.l.b16 %v467
        %v541 = vunpack.c.h.b16 %v467
        %v542 = vunpack.c.l.b16 %v468
        %v543 = vunpack.c.l.b16 %v469
        %v544 = vunpack.c.h.b16 %v469
        %v545 = vunpack.c.l.b16 %v470
        %v546 = vunpack.c.l.b16 %v471
        %v547 = vunpack.c.h.b16 %v471
        %v548 = vunpack.c.l.b16 %v472
        %v549 = vunpack.c.l.b16 %v473
        %v550 = vunpack.c.h.b16 %v473
        %v551 = vunpack.c.l.b16 %v474
        %v552 = vunpack.c.l.b16 %v475
        %v553 = vunpack.c.h.b16 %v475
        %v554 = vunpack.c.l.b16 %v476
        %v555 = vunpack.c.l.b16 %v477
        %v556 = vunpack.c.h.b16 %v477
        %v557 = vunpack.c.l.b16 %v478
        %v558 = vunpack.c.l.b16 %v479
        %v559 = vunpack.c.h.b16 %v479
        %v560 = vunpack.c.l.b16 %v480
        %v561 = vunpack.c.l.b16 %v481
        %v562 = vunpack.c.h.b16 %v481
        %v563 = vunpack.c.l.b16 %v482
        %v564 = vunpack.c.l.b16 %v483
        %v565 = vunpack.c.h.b16 %v483
        %v566 = vunpack.c.l.b16 %v484
        %v567 = vunpack.c.l.b16 %v485
        %v568 = vunpack.c.h.b16 %v485
        %v569 = vunpack.c.l.b16 %v486
        %v570 = vunpack.c.l.b16 %v487
        %v571 = vunpack.c.h.b16 %v487
        %v572 = vunpack.c.l.b16 %v488
        %v573 = vunpack.c.l.b16 %v489
        %v574 = vunpack.c.h.b16 %v489
        %v575 = vunpack.c.l.b16 %v490
        %v576 = vunpack.c.l.b16 %v491
        %v577 = vunpack.c.h.b16 %v491
        %v578 = vunpack.c.l.b16 %v492
        %v579 = vunpack.c.l.b16 %v493
        %v580 = vunpack.c.h.b16 %v493
        %v581 = vunpack.c.l.b16 %v494
        %v582 = vunpack.c.l.b16 %v495
        %v583 = vunpack.c.h.b16 %v495
        %v584 = vunpack.c.l.b16 %v496
        %v585 = vpack.c.b16 %v540, %v537
        %v586 = vpack.c.b16 %v541, %v538
        %v587 = vpack.c.b16 %v542, %v539
        %v588 = vpack.c.b16 %v546, %v543
        %v589 = vpack.c.b16 %v547, %v544
        %v590 = vpack.c.b16 %v548, %v545
        %v591 = vpack.c.b16 %v552, %v549
        %v592 = vpack.c.b16 %v553, %v550
        %v593 = vpack.c.b16 %v554, %v551
        %v594 = vpack.c.b16 %v558, %v555
        %v595 = vpack.c.b16 %v559, %v556
        %v596 = vpack.c.b16 %v560, %v557
        %v597 = vpack.c.b16 %v564, %v561
        %v598 = vpack.c.b16 %v565, %v562
        %v599 = vpack.c.b16 %v566, %v563
        %v600 = vpack.c.b16 %v570, %v567
        %v601 = vpack.c.b16 %v571, %v568
        %v602 = vpack.c.b16 %v572, %v569
        %v603 = vpack.c.b16 %v576, %v573
        %v604 = vpack.c.b16 %v577, %v574
        %v605 = vpack.c.b16 %v578, %v575
        %v606 = vpack.c.b16 %v582, %v579
        %v607 = vpack.c.b16 %v583, %v580
        %v608 = vpack.c.b16 %v584, %v581
        %633 = vmatpush.bf16.msra.mxu0 %v606
        %634 = vmatpush.bf16.msra.mxu0 %v603
        %635 = vmatpush.bf16.msra.mxu0 %v600
        %636 = vmatpush.bf16.msra.mxu0 %v597
        %637 = vmatpush.bf16.msra.mxu0 %v594
        %638 = vmatpush.bf16.msra.mxu0 %v591
        %639 = vmatpush.bf16.msra.mxu0 %v588
        %640 = vmatpush.bf16.msra.mxu0 %v585
        %641 = vmatmul.bf16.gmra.mxu0 %v464
        %v642 = vpop.f32.mrf.mxu0
        %v643 = vadd.f32 %v499, %v642
        %v644 = vpop.f32.mrf.mxu0
        %645 = vdwg.mxu0
        %646 = vmatpush.bf16.msra.mxu0 %v607
        %647 = vmatpush.bf16.msra.mxu0 %v604
        %648 = vmatpush.bf16.msra.mxu0 %v601
        %649 = vmatpush.bf16.msra.mxu0 %v598
        %650 = vmatpush.bf16.msra.mxu0 %v595
        %651 = vmatpush.bf16.msra.mxu0 %v592
        %652 = vmatpush.bf16.msra.mxu0 %v589
        %653 = vmatpush.bf16.msra.mxu0 %v586
        %654 = vmatmul.bf16.gmra.mxu0 %v464
        %v655 = vpop.f32.mrf.mxu0
        %v656 = vadd.f32 %v500, %v655
        %v657 = vpop.f32.mrf.mxu0
        %658 = vdwg.mxu0
        %659 = vmatpush.bf16.msra.mxu0 %v608
        %660 = vmatpush.bf16.msra.mxu0 %v605
        %661 = vmatpush.bf16.msra.mxu0 %v602
        %662 = vmatpush.bf16.msra.mxu0 %v599
        %663 = vmatpush.bf16.msra.mxu0 %v596
        %664 = vmatpush.bf16.msra.mxu0 %v593
        %665 = vmatpush.bf16.msra.mxu0 %v590
        %666 = vmatpush.bf16.msra.mxu0 %v587
        %667 = vmatmul.bf16.gmra.mxu0 %v464
        %v668 = vpop.f32.mrf.mxu0
        %v669 = vadd.f32 %v501, %v668
        %v670 = vpop.f32.mrf.mxu0
        %671 = vdwg.mxu0
        %v672 = vld [vmem:[%s388] sm:$0xff]
        %v673 = vpack.c.bf16 %v672, %v672
        %s674 = scalar_lea.vmem [#allocation8], 192
        %v675 = vld [vmem:[%s674] sm:$0xff]
        %v676 = vld [vmem:[%s674 + $0x8] sm:$0xf]
        %v677 = vld [vmem:[%s674 + $0xc] sm:$0xff]
        %v678 = vld [vmem:[%s674 + $0x14] sm:$0xf]
        %v679 = vld [vmem:[%s674 + $0x18] sm:$0xff]
        %v680 = vld [vmem:[%s674 + $0x20] sm:$0xf]
        %v681 = vld [vmem:[%s674 + $0x24] sm:$0xff]
        %v682 = vld [vmem:[%s674 + $0x2c] sm:$0xf]
        %v683 = vld [vmem:[%s674 + $0x30] sm:$0xff]
        %v684 = vld [vmem:[%s674 + $0x38] sm:$0xf]
        %v685 = vld [vmem:[%s674 + $0x3c] sm:$0xff]
        %v686 = vld [vmem:[%s674 + $0x44] sm:$0xf]
        %v687 = vld [vmem:[%s674 + $0x48] sm:$0xff]
        %v688 = vld [vmem:[%s674 + $0x50] sm:$0xf]
        %v689 = vld [vmem:[%s674 + $0x54] sm:$0xff]
        %v690 = vld [vmem:[%s674 + $0x5c] sm:$0xf]
        %v691 = vld [vmem:[%s674 + $0x60] sm:$0xff]
        %v692 = vld [vmem:[%s674 + $0x68] sm:$0xf]
        %v693 = vld [vmem:[%s674 + $0x6c] sm:$0xff]
        %v694 = vld [vmem:[%s674 + $0x74] sm:$0xf]
        %v695 = vld [vmem:[%s674 + $0x78] sm:$0xff]
        %v696 = vld [vmem:[%s674 + $0x80] sm:$0xf]
        %v697 = vld [vmem:[%s674 + $0x84] sm:$0xff]
        %v698 = vld [vmem:[%s674 + $0x8c] sm:$0xf]
        %v699 = vld [vmem:[%s674 + $0x90] sm:$0xff]
        %v700 = vld [vmem:[%s674 + $0x98] sm:$0xf]
        %v701 = vld [vmem:[%s674 + $0x9c] sm:$0xff]
        %v702 = vld [vmem:[%s674 + $0xa4] sm:$0xf]
        %v703 = vld [vmem:[%s674 + $0xa8] sm:$0xff]
        %v704 = vld [vmem:[%s674 + $0xb0] sm:$0xf]
        %v705 = vld [vmem:[%s674 + $0xb4] sm:$0xff]
        %v706 = vld [vmem:[%s674 + $0xbc] sm:$0xf]
        %s707 = scalar_lea.vmem [#allocation10], 1
        %v708 = vld [vmem:[%s707] ss:$4 sm:$0x7]
        %v710 = vperm.slane %v708, 0
        %v711 = vperm.slane %v708, 1
        %v712 = vperm.slane %v708, 2
        %v748 = vunpack.c.l.b16 %v675
        %v749 = vunpack.c.h.b16 %v675
        %v750 = vunpack.c.l.b16 %v676
        %v751 = vunpack.c.l.b16 %v677
        %v752 = vunpack.c.h.b16 %v677
        %v753 = vunpack.c.l.b16 %v678
        %v754 = vunpack.c.l.b16 %v679
        %v755 = vunpack.c.h.b16 %v679
        %v756 = vunpack.c.l.b16 %v680
        %v757 = vunpack.c.l.b16 %v681
        %v758 = vunpack.c.h.b16 %v681
        %v759 = vunpack.c.l.b16 %v682
        %v760 = vunpack.c.l.b16 %v683
        %v761 = vunpack.c.h.b16 %v683
        %v762 = vunpack.c.l.b16 %v684
        %v763 = vunpack.c.l.b16 %v685
        %v764 = vunpack.c.h.b16 %v685
        %v765 = vunpack.c.l.b16 %v686
        %v766 = vunpack.c.l.b16 %v687
        %v767 = vunpack.c.h.b16 %v687
        %v768 = vunpack.c.l.b16 %v688
        %v769 = vunpack.c.l.b16 %v689
        %v770 = vunpack.c.h.b16 %v689
        %v771 = vunpack.c.l.b16 %v690
        %v772 = vunpack.c.l.b16 %v691
        %v773 = vunpack.c.h.b16 %v691
        %v774 = vunpack.c.l.b16 %v692
        %v775 = vunpack.c.l.b16 %v693
        %v776 = vunpack.c.h.b16 %v693
        %v777 = vunpack.c.l.b16 %v694
        %v778 = vunpack.c.l.b16 %v695
        %v779 = vunpack.c.h.b16 %v695
        %v780 = vunpack.c.l.b16 %v696
        %v781 = vunpack.c.l.b16 %v697
        %v782 = vunpack.c.h.b16 %v697
        %v783 = vunpack.c.l.b16 %v698
        %v784 = vunpack.c.l.b16 %v699
        %v785 = vunpack.c.h.b16 %v699
        %v786 = vunpack.c.l.b16 %v700
        %v787 = vunpack.c.l.b16 %v701
        %v788 = vunpack.c.h.b16 %v701
        %v789 = vunpack.c.l.b16 %v702
        %v790 = vunpack.c.l.b16 %v703
        %v791 = vunpack.c.h.b16 %v703
        %v792 = vunpack.c.l.b16 %v704
        %v793 = vunpack.c.l.b16 %v705
        %v794 = vunpack.c.h.b16 %v705
        %v795 = vunpack.c.l.b16 %v706
        %v796 = vpack.c.b16 %v751, %v748
        %v797 = vpack.c.b16 %v752, %v749
        %v798 = vpack.c.b16 %v753, %v750
        %v799 = vpack.c.b16 %v757, %v754
        %v800 = vpack.c.b16 %v758, %v755
        %v801 = vpack.c.b16 %v759, %v756
        %v802 = vpack.c.b16 %v763, %v760
        %v803 = vpack.c.b16 %v764, %v761
        %v804 = vpack.c.b16 %v765, %v762
        %v805 = vpack.c.b16 %v769, %v766
        %v806 = vpack.c.b16 %v770, %v767
        %v807 = vpack.c.b16 %v771, %v768
        %v808 = vpack.c.b16 %v775, %v772
        %v809 = vpack.c.b16 %v776, %v773
        %v810 = vpack.c.b16 %v777, %v774
        %v811 = vpack.c.b16 %v781, %v778
        %v812 = vpack.c.b16 %v782, %v779
        %v813 = vpack.c.b16 %v783, %v780
        %v814 = vpack.c.b16 %v787, %v784
        %v815 = vpack.c.b16 %v788, %v785
        %v816 = vpack.c.b16 %v789, %v786
        %v817 = vpack.c.b16 %v793, %v790
        %v818 = vpack.c.b16 %v794, %v791
        %v819 = vpack.c.b16 %v795, %v792
        %844 = vmatpush.bf16.msra.mxu0 %v817
        %845 = vmatpush.bf16.msra.mxu0 %v814
        %846 = vmatpush.bf16.msra.mxu0 %v811
        %847 = vmatpush.bf16.msra.mxu0 %v808
        %848 = vmatpush.bf16.msra.mxu0 %v805
        %849 = vmatpush.bf16.msra.mxu0 %v802
        %850 = vmatpush.bf16.msra.mxu0 %v799
        %851 = vmatpush.bf16.msra.mxu0 %v796
        %852 = vmatmul.bf16.gmra.mxu0 %v673
        %v853 = vpop.f32.mrf.mxu0
        %v854 = vadd.f32 %v710, %v853
        %v855 = vpop.f32.mrf.mxu0
        %856 = vdwg.mxu0
        %857 = vmatpush.bf16.msra.mxu0 %v818
        %858 = vmatpush.bf16.msra.mxu0 %v815
        %859 = vmatpush.bf16.msra.mxu0 %v812
        %860 = vmatpush.bf16.msra.mxu0 %v809
        %861 = vmatpush.bf16.msra.mxu0 %v806
        %862 = vmatpush.bf16.msra.mxu0 %v803
        %863 = vmatpush.bf16.msra.mxu0 %v800
        %864 = vmatpush.bf16.msra.mxu0 %v797
        %865 = vmatmul.bf16.gmra.mxu0 %v673
        %v866 = vpop.f32.mrf.mxu0
        %v867 = vadd.f32 %v711, %v866
        %v868 = vpop.f32.mrf.mxu0
        %869 = vdwg.mxu0
        %870 = vmatpush.bf16.msra.mxu0 %v819
        %871 = vmatpush.bf16.msra.mxu0 %v816
        %872 = vmatpush.bf16.msra.mxu0 %v813
        %873 = vmatpush.bf16.msra.mxu0 %v810
        %874 = vmatpush.bf16.msra.mxu0 %v807
        %875 = vmatpush.bf16.msra.mxu0 %v804
        %876 = vmatpush.bf16.msra.mxu0 %v801
        %877 = vmatpush.bf16.msra.mxu0 %v798
        %878 = vmatmul.bf16.gmra.mxu0 %v673
        %v879 = vpop.f32.mrf.mxu0
        %v880 = vadd.f32 %v712, %v879
        %v881 = vpop.f32.mrf.mxu0
        %882 = vdwg.mxu0
        %v883 = vld [vmem:[%s398] sm:$0xff]
        %v884 = vpack.c.bf16 %v883, %v883
        %s885 = scalar_lea.vmem [#allocation8], 384
        %v886 = vld [vmem:[%s885] sm:$0xff]
        %v887 = vld [vmem:[%s885 + $0x8] sm:$0xf]
        %v888 = vld [vmem:[%s885 + $0xc] sm:$0xff]
        %v889 = vld [vmem:[%s885 + $0x14] sm:$0xf]
        %v890 = vld [vmem:[%s885 + $0x18] sm:$0xff]
        %v891 = vld [vmem:[%s885 + $0x20] sm:$0xf]
        %v892 = vld [vmem:[%s885 + $0x24] sm:$0xff]
        %v893 = vld [vmem:[%s885 + $0x2c] sm:$0xf]
        %v894 = vld [vmem:[%s885 + $0x30] sm:$0xff]
        %v895 = vld [vmem:[%s885 + $0x38] sm:$0xf]
        %v896 = vld [vmem:[%s885 + $0x3c] sm:$0xff]
        %v897 = vld [vmem:[%s885 + $0x44] sm:$0xf]
        %v898 = vld [vmem:[%s885 + $0x48] sm:$0xff]
        %v899 = vld [vmem:[%s885 + $0x50] sm:$0xf]
        %v900 = vld [vmem:[%s885 + $0x54] sm:$0xff]
        %v901 = vld [vmem:[%s885 + $0x5c] sm:$0xf]
        %v902 = vld [vmem:[%s885 + $0x60] sm:$0xff]
        %v903 = vld [vmem:[%s885 + $0x68] sm:$0xf]
        %v904 = vld [vmem:[%s885 + $0x6c] sm:$0xff]
        %v905 = vld [vmem:[%s885 + $0x74] sm:$0xf]
        %v906 = vld [vmem:[%s885 + $0x78] sm:$0xff]
        %v907 = vld [vmem:[%s885 + $0x80] sm:$0xf]
        %v908 = vld [vmem:[%s885 + $0x84] sm:$0xff]
        %v909 = vld [vmem:[%s885 + $0x8c] sm:$0xf]
        %v910 = vld [vmem:[%s885 + $0x90] sm:$0xff]
        %v911 = vld [vmem:[%s885 + $0x98] sm:$0xf]
        %v912 = vld [vmem:[%s885 + $0x9c] sm:$0xff]
        %v913 = vld [vmem:[%s885 + $0xa4] sm:$0xf]
        %v914 = vld [vmem:[%s885 + $0xa8] sm:$0xff]
        %v915 = vld [vmem:[%s885 + $0xb0] sm:$0xf]
        %v916 = vld [vmem:[%s885 + $0xb4] sm:$0xff]
        %v917 = vld [vmem:[%s885 + $0xbc] sm:$0xf]
        %s918 = scalar_lea.vmem [#allocation10], 2
        %v919 = vld [vmem:[%s918] ss:$4 sm:$0x7]
        %v921 = vperm.slane %v919, 0
        %v922 = vperm.slane %v919, 1
        %v923 = vperm.slane %v919, 2
        %v959 = vunpack.c.l.b16 %v886
        %v960 = vunpack.c.h.b16 %v886
        %v961 = vunpack.c.l.b16 %v887
        %v962 = vunpack.c.l.b16 %v888
        %v963 = vunpack.c.h.b16 %v888
        %v964 = vunpack.c.l.b16 %v889
        %v965 = vunpack.c.l.b16 %v890
        %v966 = vunpack.c.h.b16 %v890
        %v967 = vunpack.c.l.b16 %v891
        %v968 = vunpack.c.l.b16 %v892
        %v969 = vunpack.c.h.b16 %v892
        %v970 = vunpack.c.l.b16 %v893
        %v971 = vunpack.c.l.b16 %v894
        %v972 = vunpack.c.h.b16 %v894
        %v973 = vunpack.c.l.b16 %v895
        %v974 = vunpack.c.l.b16 %v896
        %v975 = vunpack.c.h.b16 %v896
        %v976 = vunpack.c.l.b16 %v897
        %v977 = vunpack.c.l.b16 %v898
        %v978 = vunpack.c.h.b16 %v898
        %v979 = vunpack.c.l.b16 %v899
        %v980 = vunpack.c.l.b16 %v900
        %v981 = vunpack.c.h.b16 %v900
        %v982 = vunpack.c.l.b16 %v901
        %v983 = vunpack.c.l.b16 %v902
        %v984 = vunpack.c.h.b16 %v902
        %v985 = vunpack.c.l.b16 %v903
        %v986 = vunpack.c.l.b16 %v904
        %v987 = vunpack.c.h.b16 %v904
        %v988 = vunpack.c.l.b16 %v905
        %v989 = vunpack.c.l.b16 %v906
        %v990 = vunpack.c.h.b16 %v906
        %v991 = vunpack.c.l.b16 %v907
        %v992 = vunpack.c.l.b16 %v908
        %v993 = vunpack.c.h.b16 %v908
        %v994 = vunpack.c.l.b16 %v909
        %v995 = vunpack.c.l.b16 %v910
        %v996 = vunpack.c.h.b16 %v910
        %v997 = vunpack.c.l.b16 %v911
        %v998 = vunpack.c.l.b16 %v912
        %v999 = vunpack.c.h.b16 %v912
        %v1000 = vunpack.c.l.b16 %v913
        %v1001 = vunpack.c.l.b16 %v914
        %v1002 = vunpack.c.h.b16 %v914
        %v1003 = vunpack.c.l.b16 %v915
        %v1004 = vunpack.c.l.b16 %v916
        %v1005 = vunpack.c.h.b16 %v916
        %v1006 = vunpack.c.l.b16 %v917
        %v1007 = vpack.c.b16 %v962, %v959
        %v1008 = vpack.c.b16 %v963, %v960
        %v1009 = vpack.c.b16 %v964, %v961
        %v1010 = vpack.c.b16 %v968, %v965
        %v1011 = vpack.c.b16 %v969, %v966
        %v1012 = vpack.c.b16 %v970, %v967
        %v1013 = vpack.c.b16 %v974, %v971
        %v1014 = vpack.c.b16 %v975, %v972
        %v1015 = vpack.c.b16 %v976, %v973
        %v1016 = vpack.c.b16 %v980, %v977
        %v1017 = vpack.c.b16 %v981, %v978
        %v1018 = vpack.c.b16 %v982, %v979
        %v1019 = vpack.c.b16 %v986, %v983
        %v1020 = vpack.c.b16 %v987, %v984
        %v1021 = vpack.c.b16 %v988, %v985
        %v1022 = vpack.c.b16 %v992, %v989
        %v1023 = vpack.c.b16 %v993, %v990
        %v1024 = vpack.c.b16 %v994, %v991
        %v1025 = vpack.c.b16 %v998, %v995
        %v1026 = vpack.c.b16 %v999, %v996
        %v1027 = vpack.c.b16 %v1000, %v997
        %v1028 = vpack.c.b16 %v1004, %v1001
        %v1029 = vpack.c.b16 %v1005, %v1002
        %v1030 = vpack.c.b16 %v1006, %v1003
        %1055 = vmatpush.bf16.msra.mxu0 %v1028
        %1056 = vmatpush.bf16.msra.mxu0 %v1025
        %1057 = vmatpush.bf16.msra.mxu0 %v1022
        %1058 = vmatpush.bf16.msra.mxu0 %v1019
        %1059 = vmatpush.bf16.msra.mxu0 %v1016
        %1060 = vmatpush.bf16.msra.mxu0 %v1013
        %1061 = vmatpush.bf16.msra.mxu0 %v1010
        %1062 = vmatpush.bf16.msra.mxu0 %v1007
        %1063 = vmatmul.bf16.gmra.mxu0 %v884
        %v1064 = vpop.f32.mrf.mxu0
        %v1065 = vadd.f32 %v921, %v1064
        %v1066 = vpop.f32.mrf.mxu0
        %1067 = vdwg.mxu0
        %1068 = vmatpush.bf16.msra.mxu0 %v1029
        %1069 = vmatpush.bf16.msra.mxu0 %v1026
        %1070 = vmatpush.bf16.msra.mxu0 %v1023
        %1071 = vmatpush.bf16.msra.mxu0 %v1020
        %1072 = vmatpush.bf16.msra.mxu0 %v1017
        %1073 = vmatpush.bf16.msra.mxu0 %v1014
        %1074 = vmatpush.bf16.msra.mxu0 %v1011
        %1075 = vmatpush.bf16.msra.mxu0 %v1008
        %1076 = vmatmul.bf16.gmra.mxu0 %v884
        %v1077 = vpop.f32.mrf.mxu0
        %v1078 = vadd.f32 %v922, %v1077
        %v1079 = vpop.f32.mrf.mxu0
        %1080 = vdwg.mxu0
        %1081 = vmatpush.bf16.msra.mxu0 %v1030
        %1082 = vmatpush.bf16.msra.mxu0 %v1027
        %1083 = vmatpush.bf16.msra.mxu0 %v1024
        %1084 = vmatpush.bf16.msra.mxu0 %v1021
        %1085 = vmatpush.bf16.msra.mxu0 %v1018
        %1086 = vmatpush.bf16.msra.mxu0 %v1015
        %1087 = vmatpush.bf16.msra.mxu0 %v1012
        %1088 = vmatpush.bf16.msra.mxu0 %v1009
        %1089 = vmatmul.bf16.gmra.mxu0 %v884
        %v1090 = vpop.f32.mrf.mxu0
        %v1091 = vadd.f32 %v923, %v1090
        %v1092 = vpop.f32.mrf.mxu0
        %1093 = vdwg.mxu0
        %v1094 = vpack.c.bf16 %v643, %v643
        %v1095 = vpack.c.bf16 %v867, %v867
        %1096 = vmatpush.bf16.xpose.msra.mxu0 0
        %1097 = vmatpush.bf16.xpose.msra.mxu0 0
        %1098 = vmatpush.bf16.xpose.msra.mxu0 0
        %1099 = vmatpush.bf16.xpose.msra.mxu0 0
        %1100 = vmatpush.bf16.xpose.msra.mxu0 0
        %1101 = vmatpush.bf16.xpose.msra.mxu0 0
        %1102 = vmatpush.bf16.xpose.msra.mxu0 0
        %1103 = vmatpush.bf16.xpose.msra.mxu0 %v1095
        %1104 = vmatmul.bf16.gmra.mxu0 %v1094
        %v1105 = vpop.f32.mrf.mxu0
        %v1106 = vadd.f32 0.0, %v1105
        %v1107 = vpop.f32.mrf.mxu0
        %1108 = vdwg.mxu0
        %vm1109 = vcmask 64512
        %v1110 = vsel %vm1109, %v1106, -inf
        %1111 = vmax.xlane.f32.xlu0 %v1110
        %v1112 = vpop.xlane.xlu0 %1111
        %v1113 = vsub.f32 %v1106, %v1112
        %v1114 = vmul.f32 %v1113, 1.442695
        %v1115 = vpow.pop %v1114
        %v1116 = vsel %vm1109, %v1115, 0.0
        %1117 = vadd.xlane.f32.xlu0 %v1116
        %v1118 = vpop.xlane.xlu0 %1117
        %v1119 = vrcp.pop %v1118
        %v1120 = vmul.f32 %v1115, %v1119
        %v1121 = vpack.c.bf16 %v1120, %v1120
        %v1122 = vpack.c.bf16 %v880, %v880
        %v1124 = vsel %vm1109, %v1121, 0
        %vm1126 = vcmask 1043456
        %v1128 = vsel %vm1126, %v1122, 0
        %1130 = vmatpush.bf16.msra.mxu0 0
        %1131 = vmatpush.bf16.msra.mxu0 0
        %1132 = vmatpush.bf16.msra.mxu0 0
        %1133 = vmatpush.bf16.msra.mxu0 0
        %1134 = vmatpush.bf16.msra.mxu0 0
        %1135 = vmatpush.bf16.msra.mxu0 0
        %1136 = vmatpush.bf16.msra.mxu0 0
        %1137 = vmatpush.bf16.msra.mxu0 %v1128
        %1138 = vmatmul.bf16.gmra.mxu0 %v1124
        %v1139 = vpop.f32.mrf.mxu0
        %v1140 = vadd.f32 0.0, %v1139
        %v1141 = vpop.f32.mrf.mxu0
        %1142 = vdwg.mxu0
        %v1143 = vpack.c.bf16 %v854, %v854
        %v1144 = vpack.c.bf16 %v1078, %v1078
        %1145 = vmatpush.bf16.xpose.msra.mxu0 0
        %1146 = vmatpush.bf16.xpose.msra.mxu0 0
        %1147 = vmatpush.bf16.xpose.msra.mxu0 0
        %1148 = vmatpush.bf16.xpose.msra.mxu0 0
        %1149 = vmatpush.bf16.xpose.msra.mxu0 0
        %1150 = vmatpush.bf16.xpose.msra.mxu0 0
        %1151 = vmatpush.bf16.xpose.msra.mxu0 0
        %1152 = vmatpush.bf16.xpose.msra.mxu0 %v1144
        %1153 = vmatmul.bf16.gmra.mxu0 %v1143
        %v1154 = vpop.f32.mrf.mxu0
        %v1155 = vadd.f32 0.0, %v1154
        %v1156 = vpop.f32.mrf.mxu0
        %1157 = vdwg.mxu0
        %v1158 = vsel %vm1109, %v1155, -inf
        %1159 = vmax.xlane.f32.xlu0 %v1158
        %v1160 = vpop.xlane.xlu0 %1159
        %v1161 = vsub.f32 %v1155, %v1160
        %v1162 = vmul.f32 %v1161, 1.442695
        %v1163 = vpow.pop %v1162
        %v1164 = vsel %vm1109, %v1163, 0.0
        %1165 = vadd.xlane.f32.xlu0 %v1164
        %v1166 = vpop.xlane.xlu0 %1165
        %v1167 = vrcp.pop %v1166
        %v1168 = vmul.f32 %v1163, %v1167
        %v1169 = vpack.c.bf16 %v1168, %v1168
        %v1170 = vpack.c.bf16 %v1091, %v1091
        %v1172 = vsel %vm1109, %v1169, 0
        %v1175 = vsel %vm1126, %v1170, 0
        %1177 = vmatpush.bf16.msra.mxu0 0
        %1178 = vmatpush.bf16.msra.mxu0 0
        %1179 = vmatpush.bf16.msra.mxu0 0
        %1180 = vmatpush.bf16.msra.mxu0 0
        %1181 = vmatpush.bf16.msra.mxu0 0
        %1182 = vmatpush.bf16.msra.mxu0 0
        %1183 = vmatpush.bf16.msra.mxu0 0
        %1184 = vmatpush.bf16.msra.mxu0 %v1175
        %1185 = vmatmul.bf16.gmra.mxu0 %v1172
        %v1186 = vpop.f32.mrf.mxu0
        %v1187 = vadd.f32 0.0, %v1186
        %v1188 = vpop.f32.mrf.mxu0
        %1189 = vdwg.mxu0
        %v1190 = vpack.c.bf16 %v1065, %v1065
        %v1191 = vpack.c.bf16 %v656, %v656
        %1192 = vmatpush.bf16.xpose.msra.mxu0 0
        %1193 = vmatpush.bf16.xpose.msra.mxu0 0
        %1194 = vmatpush.bf16.xpose.msra.mxu0 0
        %1195 = vmatpush.bf16.xpose.msra.mxu0 0
        %1196 = vmatpush.bf16.xpose.msra.mxu0 0
        %1197 = vmatpush.bf16.xpose.msra.mxu0 0
        %1198 = vmatpush.bf16.xpose.msra.mxu0 0
        %1199 = vmatpush.bf16.xpose.msra.mxu0 %v1191
        %1200 = vmatmul.bf16.gmra.mxu0 %v1190
        %v1201 = vpop.f32.mrf.mxu0
        %v1202 = vadd.f32 0.0, %v1201
        %v1203 = vpop.f32.mrf.mxu0
        %1204 = vdwg.mxu0
        %v1205 = vsel %vm1109, %v1202, -inf
        %1206 = vmax.xlane.f32.xlu0 %v1205
        %v1207 = vpop.xlane.xlu0 %1206
        %v1208 = vsub.f32 %v1202, %v1207
        %v1209 = vmul.f32 %v1208, 1.442695
        %v1210 = vpow.pop %v1209
        %v1211 = vsel %vm1109, %v1210, 0.0
        %1212 = vadd.xlane.f32.xlu0 %v1211
        %v1213 = vpop.xlane.xlu0 %1212
        %v1214 = vrcp.pop %v1213
        %v1215 = vmul.f32 %v1210, %v1214
        %v1216 = vpack.c.bf16 %v1215, %v1215
        %v1217 = vpack.c.bf16 %v669, %v669
        %v1219 = vsel %vm1109, %v1216, 0
        %v1222 = vsel %vm1126, %v1217, 0
        %1224 = vmatpush.bf16.msra.mxu0 0
        %1225 = vmatpush.bf16.msra.mxu0 0
        %1226 = vmatpush.bf16.msra.mxu0 0
        %1227 = vmatpush.bf16.msra.mxu0 0
        %1228 = vmatpush.bf16.msra.mxu0 0
        %1229 = vmatpush.bf16.msra.mxu0 0
        %1230 = vmatpush.bf16.msra.mxu0 0
        %1231 = vmatpush.bf16.msra.mxu0 %v1222
        %1232 = vmatmul.bf16.gmra.mxu0 %v1219
        %v1233 = vpop.f32.mrf.mxu0
        %v1234 = vadd.f32 0.0, %v1233
        %v1235 = vpop.f32.mrf.mxu0
        %1236 = vdwg.mxu0
        %v1237 = vld [vmem:[#allocation11] sm:$0xf]
        %v1238 = vld [vmem:[#allocation11 + $0x4] sm:$0xf]
        %v1239 = vld [vmem:[#allocation11 + $0x8] sm:$0xf]
        %v1240 = vld [vmem:[#allocation11 + $0xc] sm:$0xf]
        %v1241 = vld [vmem:[#allocation11 + $0x10] sm:$0xf]
        %v1242 = vld [vmem:[#allocation11 + $0x14] sm:$0xf]
        %v1243 = vld [vmem:[#allocation11 + $0x18] sm:$0xf]
        %v1244 = vld [vmem:[#allocation11 + $0x1c] sm:$0xf]
        %v1245 = vld [vmem:[#allocation11 + $0x20] sm:$0xf]
        %v1246 = vld [vmem:[#allocation11 + $0x24] sm:$0xf]
        %v1247 = vld [vmem:[#allocation11 + $0x28] sm:$0xf]
        %v1248 = vld [vmem:[#allocation11 + $0x2c] sm:$0xf]
        %v1249 = vld [vmem:[#allocation11 + $0x30] sm:$0xf]
        %v1250 = vld [vmem:[#allocation11 + $0x34] sm:$0xf]
        %v1251 = vld [vmem:[#allocation11 + $0x38] sm:$0xf]
        %v1252 = vld [vmem:[#allocation11 + $0x3c] sm:$0xf]
        %v1253 = vpack.c.bf16 %v1140, %v1140
        %v1254 = vld [vmem:[#allocation13] sm:$0xf]
        %v1255 = vld [vmem:[#allocation13 + $0x4] sm:$0xf]
        %v1256 = vld [vmem:[#allocation13 + $0x8] sm:$0xf]
        %v1257 = vld [vmem:[#allocation13 + $0xc] sm:$0xf]
        %v1258 = vld [vmem:[#allocation13 + $0x10] sm:$0xf]
        %v1259 = vld [vmem:[#allocation13 + $0x14] sm:$0xf]
        %v1260 = vld [vmem:[#allocation13 + $0x18] sm:$0xf]
        %v1261 = vld [vmem:[#allocation13 + $0x1c] sm:$0xf]
        %v1262 = vld [vmem:[#allocation13 + $0x20] sm:$0xf]
        %v1263 = vld [vmem:[#allocation13 + $0x24] sm:$0xf]
        %v1264 = vld [vmem:[#allocation13 + $0x28] sm:$0xf]
        %v1265 = vld [vmem:[#allocation13 + $0x2c] sm:$0xf]
        %v1266 = vld [vmem:[#allocation13 + $0x30] sm:$0xf]
        %v1267 = vld [vmem:[#allocation13 + $0x34] sm:$0xf]
        %v1268 = vld [vmem:[#allocation13 + $0x38] sm:$0xf]
        %v1269 = vld [vmem:[#allocation13 + $0x3c] sm:$0xf]
        %v1286 = vunpack.c.l.b16 %v1254
        %v1287 = vunpack.c.l.b16 %v1255
        %v1288 = vunpack.c.l.b16 %v1256
        %v1289 = vunpack.c.l.b16 %v1257
        %v1290 = vunpack.c.l.b16 %v1258
        %v1291 = vunpack.c.l.b16 %v1259
        %v1292 = vunpack.c.l.b16 %v1260
        %v1293 = vunpack.c.l.b16 %v1261
        %v1294 = vunpack.c.l.b16 %v1262
        %v1295 = vunpack.c.l.b16 %v1263
        %v1296 = vunpack.c.l.b16 %v1264
        %v1297 = vunpack.c.l.b16 %v1265
        %v1298 = vunpack.c.l.b16 %v1266
        %v1299 = vunpack.c.l.b16 %v1267
        %v1300 = vunpack.c.l.b16 %v1268
        %v1301 = vunpack.c.l.b16 %v1269
        %v1302 = vpack.c.b16 %v1287, %v1286
        %v1303 = vpack.c.b16 %v1289, %v1288
        %v1304 = vpack.c.b16 %v1291, %v1290
        %v1305 = vpack.c.b16 %v1293, %v1292
        %v1306 = vpack.c.b16 %v1295, %v1294
        %v1307 = vpack.c.b16 %v1297, %v1296
        %v1308 = vpack.c.b16 %v1299, %v1298
        %v1309 = vpack.c.b16 %v1301, %v1300
        %1318 = vmatpush.bf16.msra.mxu0 %v1309
        %1319 = vmatpush.bf16.msra.mxu0 %v1308
        %1320 = vmatpush.bf16.msra.mxu0 %v1307
        %1321 = vmatpush.bf16.msra.mxu0 %v1306
        %1322 = vmatpush.bf16.msra.mxu0 %v1305
        %1323 = vmatpush.bf16.msra.mxu0 %v1304
        %1324 = vmatpush.bf16.msra.mxu0 %v1303
        %1325 = vmatpush.bf16.msra.mxu0 %v1302
        %1326 = vmatmul.bf16.gmra.mxu0 %v1253
        %v1327 = vpop.f32.mrf.mxu0
        %v1328 = vadd.f32 0.0, %v1327
        %v1329 = vpop.f32.mrf.mxu0
        %1330 = vdwg.mxu0
        %v1347 = vunpack.c.l.b16 %v1237
        %v1348 = vunpack.c.l.b16 %v1238
        %v1349 = vunpack.c.l.b16 %v1239
        %v1350 = vunpack.c.l.b16 %v1240
        %v1351 = vunpack.c.l.b16 %v1241
        %v1352 = vunpack.c.l.b16 %v1242
        %v1353 = vunpack.c.l.b16 %v1243
        %v1354 = vunpack.c.l.b16 %v1244
        %v1355 = vunpack.c.l.b16 %v1245
        %v1356 = vunpack.c.l.b16 %v1246
        %v1357 = vunpack.c.l.b16 %v1247
        %v1358 = vunpack.c.l.b16 %v1248
        %v1359 = vunpack.c.l.b16 %v1249
        %v1360 = vunpack.c.l.b16 %v1250
        %v1361 = vunpack.c.l.b16 %v1251
        %v1362 = vunpack.c.l.b16 %v1252
        %v1363 = vpack.c.b16 %v1348, %v1347
        %v1364 = vpack.c.b16 %v1350, %v1349
        %v1365 = vpack.c.b16 %v1352, %v1351
        %v1366 = vpack.c.b16 %v1354, %v1353
        %v1367 = vpack.c.b16 %v1356, %v1355
        %v1368 = vpack.c.b16 %v1358, %v1357
        %v1369 = vpack.c.b16 %v1360, %v1359
        %v1370 = vpack.c.b16 %v1362, %v1361
        %1379 = vmatpush.bf16.msra.mxu0 %v1370
        %1380 = vmatpush.bf16.msra.mxu0 %v1369
        %1381 = vmatpush.bf16.msra.mxu0 %v1368
        %1382 = vmatpush.bf16.msra.mxu0 %v1367
        %1383 = vmatpush.bf16.msra.mxu0 %v1366
        %1384 = vmatpush.bf16.msra.mxu0 %v1365
        %1385 = vmatpush.bf16.msra.mxu0 %v1364
        %1386 = vmatpush.bf16.msra.mxu0 %v1363
        %1387 = vmatmul.bf16.gmra.mxu0 %v464
        %v1388 = vpop.f32.mrf.mxu0
        %v1389 = vadd.f32 %v1328, %v1388
        %v1390 = vpop.f32.mrf.mxu0
        %1391 = vdwg.mxu0
        %v1392 = vld [vmem:[%s7] sm:$0x1]
        %v1393 = vperm.slane %v1392, 0
        %v1394 = vadd.f32 %v1389, %v1393
        %1395 = vst [vmem:[%s461] sm:$0xff] %v1394
        %s1396 = scalar_lea.vmem [#allocation11], 64
        %v1397 = vld [vmem:[%s1396] sm:$0xf]
        %v1398 = vld [vmem:[%s1396 + $0x4] sm:$0xf]
        %v1399 = vld [vmem:[%s1396 + $0x8] sm:$0xf]
        %v1400 = vld [vmem:[%s1396 + $0xc] sm:$0xf]
        %v1401 = vld [vmem:[%s1396 + $0x10] sm:$0xf]
        %v1402 = vld [vmem:[%s1396 + $0x14] sm:$0xf]
        %v1403 = vld [vmem:[%s1396 + $0x18] sm:$0xf]
        %v1404 = vld [vmem:[%s1396 + $0x1c] sm:$0xf]
        %v1405 = vld [vmem:[%s1396 + $0x20] sm:$0xf]
        %v1406 = vld [vmem:[%s1396 + $0x24] sm:$0xf]
        %v1407 = vld [vmem:[%s1396 + $0x28] sm:$0xf]
        %v1408 = vld [vmem:[%s1396 + $0x2c] sm:$0xf]
        %v1409 = vld [vmem:[%s1396 + $0x30] sm:$0xf]
        %v1410 = vld [vmem:[%s1396 + $0x34] sm:$0xf]
        %v1411 = vld [vmem:[%s1396 + $0x38] sm:$0xf]
        %v1412 = vld [vmem:[%s1396 + $0x3c] sm:$0xf]
        %v1413 = vpack.c.bf16 %v1187, %v1187
        %s1414 = scalar_lea.vmem [#allocation13], 64
        %v1415 = vld [vmem:[%s1414] sm:$0xf]
        %v1416 = vld [vmem:[%s1414 + $0x4] sm:$0xf]
        %v1417 = vld [vmem:[%s1414 + $0x8] sm:$0xf]
        %v1418 = vld [vmem:[%s1414 + $0xc] sm:$0xf]
        %v1419 = vld [vmem:[%s1414 + $0x10] sm:$0xf]
        %v1420 = vld [vmem:[%s1414 + $0x14] sm:$0xf]
        %v1421 = vld [vmem:[%s1414 + $0x18] sm:$0xf]
        %v1422 = vld [vmem:[%s1414 + $0x1c] sm:$0xf]
        %v1423 = vld [vmem:[%s1414 + $0x20] sm:$0xf]
        %v1424 = vld [vmem:[%s1414 + $0x24] sm:$0xf]
        %v1425 = vld [vmem:[%s1414 + $0x28] sm:$0xf]
        %v1426 = vld [vmem:[%s1414 + $0x2c] sm:$0xf]
        %v1427 = vld [vmem:[%s1414 + $0x30] sm:$0xf]
        %v1428 = vld [vmem:[%s1414 + $0x34] sm:$0xf]
        %v1429 = vld [vmem:[%s1414 + $0x38] sm:$0xf]
        %v1430 = vld [vmem:[%s1414 + $0x3c] sm:$0xf]
        %v1447 = vunpack.c.l.b16 %v1415
        %v1448 = vunpack.c.l.b16 %v1416
        %v1449 = vunpack.c.l.b16 %v1417
        %v1450 = vunpack.c.l.b16 %v1418
        %v1451 = vunpack.c.l.b16 %v1419
        %v1452 = vunpack.c.l.b16 %v1420
        %v1453 = vunpack.c.l.b16 %v1421
        %v1454 = vunpack.c.l.b16 %v1422
        %v1455 = vunpack.c.l.b16 %v1423
        %v1456 = vunpack.c.l.b16 %v1424
        %v1457 = vunpack.c.l.b16 %v1425
        %v1458 = vunpack.c.l.b16 %v1426
        %v1459 = vunpack.c.l.b16 %v1427
        %v1460 = vunpack.c.l.b16 %v1428
        %v1461 = vunpack.c.l.b16 %v1429
        %v1462 = vunpack.c.l.b16 %v1430
        %v1463 = vpack.c.b16 %v1448, %v1447
        %v1464 = vpack.c.b16 %v1450, %v1449
        %v1465 = vpack.c.b16 %v1452, %v1451
        %v1466 = vpack.c.b16 %v1454, %v1453
        %v1467 = vpack.c.b16 %v1456, %v1455
        %v1468 = vpack.c.b16 %v1458, %v1457
        %v1469 = vpack.c.b16 %v1460, %v1459
        %v1470 = vpack.c.b16 %v1462, %v1461
        %1479 = vmatpush.bf16.msra.mxu0 %v1470
        %1480 = vmatpush.bf16.msra.mxu0 %v1469
        %1481 = vmatpush.bf16.msra.mxu0 %v1468
        %1482 = vmatpush.bf16.msra.mxu0 %v1467
        %1483 = vmatpush.bf16.msra.mxu0 %v1466
        %1484 = vmatpush.bf16.msra.mxu0 %v1465
        %1485 = vmatpush.bf16.msra.mxu0 %v1464
        %1486 = vmatpush.bf16.msra.mxu0 %v1463
        %1487 = vmatmul.bf16.gmra.mxu0 %v1413
        %v1488 = vpop.f32.mrf.mxu0
        %v1489 = vadd.f32 0.0, %v1488
        %v1490 = vpop.f32.mrf.mxu0
        %1491 = vdwg.mxu0
        %v1508 = vunpack.c.l.b16 %v1397
        %v1509 = vunpack.c.l.b16 %v1398
        %v1510 = vunpack.c.l.b16 %v1399
        %v1511 = vunpack.c.l.b16 %v1400
        %v1512 = vunpack.c.l.b16 %v1401
        %v1513 = vunpack.c.l.b16 %v1402
        %v1514 = vunpack.c.l.b16 %v1403
        %v1515 = vunpack.c.l.b16 %v1404
        %v1516 = vunpack.c.l.b16 %v1405
        %v1517 = vunpack.c.l.b16 %v1406
        %v1518 = vunpack.c.l.b16 %v1407
        %v1519 = vunpack.c.l.b16 %v1408
        %v1520 = vunpack.c.l.b16 %v1409
        %v1521 = vunpack.c.l.b16 %v1410
        %v1522 = vunpack.c.l.b16 %v1411
        %v1523 = vunpack.c.l.b16 %v1412
        %v1524 = vpack.c.b16 %v1509, %v1508
        %v1525 = vpack.c.b16 %v1511, %v1510
        %v1526 = vpack.c.b16 %v1513, %v1512
        %v1527 = vpack.c.b16 %v1515, %v1514
        %v1528 = vpack.c.b16 %v1517, %v1516
        %v1529 = vpack.c.b16 %v1519, %v1518
        %v1530 = vpack.c.b16 %v1521, %v1520
        %v1531 = vpack.c.b16 %v1523, %v1522
        %1540 = vmatpush.bf16.msra.mxu0 %v1531
        %1541 = vmatpush.bf16.msra.mxu0 %v1530
        %1542 = vmatpush.bf16.msra.mxu0 %v1529
        %1543 = vmatpush.bf16.msra.mxu0 %v1528
        %1544 = vmatpush.bf16.msra.mxu0 %v1527
        %1545 = vmatpush.bf16.msra.mxu0 %v1526
        %1546 = vmatpush.bf16.msra.mxu0 %v1525
        %1547 = vmatpush.bf16.msra.mxu0 %v1524
        %1548 = vmatmul.bf16.gmra.mxu0 %v673
        %v1549 = vpop.f32.mrf.mxu0
        %v1550 = vadd.f32 %v1489, %v1549
        %v1551 = vpop.f32.mrf.mxu0
        %1552 = vdwg.mxu0
        %v1553 = vld [vmem:[%s7 + $0x1] sm:$0x1]
        %v1554 = vperm.slane %v1553, 0
        %v1555 = vadd.f32 %v1550, %v1554
        %1556 = vst [vmem:[%s461 + $0x8] sm:$0xff] %v1555
        %s1557 = scalar_lea.vmem [#allocation11], 128
        %v1558 = vld [vmem:[%s1557] sm:$0xf]
        %v1559 = vld [vmem:[%s1557 + $0x4] sm:$0xf]
        %v1560 = vld [vmem:[%s1557 + $0x8] sm:$0xf]
        %v1561 = vld [vmem:[%s1557 + $0xc] sm:$0xf]
        %v1562 = vld [vmem:[%s1557 + $0x10] sm:$0xf]
        %v1563 = vld [vmem:[%s1557 + $0x14] sm:$0xf]
        %v1564 = vld [vmem:[%s1557 + $0x18] sm:$0xf]
        %v1565 = vld [vmem:[%s1557 + $0x1c] sm:$0xf]
        %v1566 = vld [vmem:[%s1557 + $0x20] sm:$0xf]
        %v1567 = vld [vmem:[%s1557 + $0x24] sm:$0xf]
        %v1568 = vld [vmem:[%s1557 + $0x28] sm:$0xf]
        %v1569 = vld [vmem:[%s1557 + $0x2c] sm:$0xf]
        %v1570 = vld [vmem:[%s1557 + $0x30] sm:$0xf]
        %v1571 = vld [vmem:[%s1557 + $0x34] sm:$0xf]
        %v1572 = vld [vmem:[%s1557 + $0x38] sm:$0xf]
        %v1573 = vld [vmem:[%s1557 + $0x3c] sm:$0xf]
        %v1574 = vpack.c.bf16 %v1234, %v1234
        %s1575 = scalar_lea.vmem [#allocation13], 128
        %v1576 = vld [vmem:[%s1575] sm:$0xf]
        %v1577 = vld [vmem:[%s1575 + $0x4] sm:$0xf]
        %v1578 = vld [vmem:[%s1575 + $0x8] sm:$0xf]
        %v1579 = vld [vmem:[%s1575 + $0xc] sm:$0xf]
        %v1580 = vld [vmem:[%s1575 + $0x10] sm:$0xf]
        %v1581 = vld [vmem:[%s1575 + $0x14] sm:$0xf]
        %v1582 = vld [vmem:[%s1575 + $0x18] sm:$0xf]
        %v1583 = vld [vmem:[%s1575 + $0x1c] sm:$0xf]
        %v1584 = vld [vmem:[%s1575 + $0x20] sm:$0xf]
        %v1585 = vld [vmem:[%s1575 + $0x24] sm:$0xf]
        %v1586 = vld [vmem:[%s1575 + $0x28] sm:$0xf]
        %v1587 = vld [vmem:[%s1575 + $0x2c] sm:$0xf]
        %v1588 = vld [vmem:[%s1575 + $0x30] sm:$0xf]
        %v1589 = vld [vmem:[%s1575 + $0x34] sm:$0xf]
        %v1590 = vld [vmem:[%s1575 + $0x38] sm:$0xf]
        %v1591 = vld [vmem:[%s1575 + $0x3c] sm:$0xf]
        %v1608 = vunpack.c.l.b16 %v1576
        %v1609 = vunpack.c.l.b16 %v1577
        %v1610 = vunpack.c.l.b16 %v1578
        %v1611 = vunpack.c.l.b16 %v1579
        %v1612 = vunpack.c.l.b16 %v1580
        %v1613 = vunpack.c.l.b16 %v1581
        %v1614 = vunpack.c.l.b16 %v1582
        %v1615 = vunpack.c.l.b16 %v1583
        %v1616 = vunpack.c.l.b16 %v1584
        %v1617 = vunpack.c.l.b16 %v1585
        %v1618 = vunpack.c.l.b16 %v1586
        %v1619 = vunpack.c.l.b16 %v1587
        %v1620 = vunpack.c.l.b16 %v1588
        %v1621 = vunpack.c.l.b16 %v1589
        %v1622 = vunpack.c.l.b16 %v1590
        %v1623 = vunpack.c.l.b16 %v1591
        %v1624 = vpack.c.b16 %v1609, %v1608
        %v1625 = vpack.c.b16 %v1611, %v1610
        %v1626 = vpack.c.b16 %v1613, %v1612
        %v1627 = vpack.c.b16 %v1615, %v1614
        %v1628 = vpack.c.b16 %v1617, %v1616
        %v1629 = vpack.c.b16 %v1619, %v1618
        %v1630 = vpack.c.b16 %v1621, %v1620
        %v1631 = vpack.c.b16 %v1623, %v1622
        %1640 = vmatpush.bf16.msra.mxu0 %v1631
        %1641 = vmatpush.bf16.msra.mxu0 %v1630
        %1642 = vmatpush.bf16.msra.mxu0 %v1629
        %1643 = vmatpush.bf16.msra.mxu0 %v1628
        %1644 = vmatpush.bf16.msra.mxu0 %v1627
        %1645 = vmatpush.bf16.msra.mxu0 %v1626
        %1646 = vmatpush.bf16.msra.mxu0 %v1625
        %1647 = vmatpush.bf16.msra.mxu0 %v1624
        %1648 = vmatmul.bf16.gmra.mxu0 %v1574
        %v1649 = vpop.f32.mrf.mxu0
        %v1650 = vadd.f32 0.0, %v1649
        %v1651 = vpop.f32.mrf.mxu0
        %1652 = vdwg.mxu0
        %v1669 = vunpack.c.l.b16 %v1558
        %v1670 = vunpack.c.l.b16 %v1559
        %v1671 = vunpack.c.l.b16 %v1560
        %v1672 = vunpack.c.l.b16 %v1561
        %v1673 = vunpack.c.l.b16 %v1562
        %v1674 = vunpack.c.l.b16 %v1563
        %v1675 = vunpack.c.l.b16 %v1564
        %v1676 = vunpack.c.l.b16 %v1565
        %v1677 = vunpack.c.l.b16 %v1566
        %v1678 = vunpack.c.l.b16 %v1567
        %v1679 = vunpack.c.l.b16 %v1568
        %v1680 = vunpack.c.l.b16 %v1569
        %v1681 = vunpack.c.l.b16 %v1570
        %v1682 = vunpack.c.l.b16 %v1571
        %v1683 = vunpack.c.l.b16 %v1572
        %v1684 = vunpack.c.l.b16 %v1573
        %v1685 = vpack.c.b16 %v1670, %v1669
        %v1686 = vpack.c.b16 %v1672, %v1671
        %v1687 = vpack.c.b16 %v1674, %v1673
        %v1688 = vpack.c.b16 %v1676, %v1675
        %v1689 = vpack.c.b16 %v1678, %v1677
        %v1690 = vpack.c.b16 %v1680, %v1679
        %v1691 = vpack.c.b16 %v1682, %v1681
        %v1692 = vpack.c.b16 %v1684, %v1683
        %1701 = vmatpush.bf16.msra.mxu0 %v1692
        %1702 = vmatpush.bf16.msra.mxu0 %v1691
        %1703 = vmatpush.bf16.msra.mxu0 %v1690
        %1704 = vmatpush.bf16.msra.mxu0 %v1689
        %1705 = vmatpush.bf16.msra.mxu0 %v1688
        %1706 = vmatpush.bf16.msra.mxu0 %v1687
        %1707 = vmatpush.bf16.msra.mxu0 %v1686
        %1708 = vmatpush.bf16.msra.mxu0 %v1685
        %1709 = vmatmul.bf16.gmra.mxu0 %v884
        %v1710 = vpop.f32.mrf.mxu0
        %v1711 = vadd.f32 %v1650, %v1710
        %v1712 = vpop.f32.mrf.mxu0
        %1713 = vdwg.mxu0
        %v1714 = vld [vmem:[%s7 + $0x2] sm:$0x1]
        %v1715 = vperm.slane %v1714, 0
        %v1716 = vadd.f32 %v1711, %v1715
        %1717 = vst [vmem:[%s461 + $0x10] sm:$0xff] %v1716
        %s1718 = sand.u32 %s221, 1
        %s1719 = scalar_lea.sflag [#allocation4], %s1718
        %s1720 = sand.u32 %s221, 1
        %s1721 = smul.addr %s1720, 24
        %s1722 = scalar_lea.vmem [#allocation14], %s1721
        // Predicated region
        $region81: #{tpu_custom_call.1} parent=51 // pred_check
          %p1723 = pneg %p231
        $region82: #{tpu_custom_call.1} parent=51 // pred_check_branch
          %1725 = sbr.rel (%p1723) target = $region84
        $region83: #{tpu_custom_call.1} parent=51 // pred_region
          %1727 = vsyncadd %s1719, 0
          %s1728 = smul.addr %s30, 3
          %s1729 = smul.addr %s1728, 8
          %s1730 = scalar_lea.hbm %s8, %s1729
          %s1731 = sshll.u32 %s1722, 4
          %s1732 = int_to_ptr.vmem [resolvable:$true] %s1731
          %s1733 = sshll.u32 %s1730, 4
          %s1734 = int_to_ptr.hbm [resolvable:$true] %s1733
          %1739 = dma.vmem_to_hbm [thread:$0]  %s1732, 384, %s1734, %s1719, 128, 128, 8
        $region84: #{tpu_custom_call.1} parent=51 // pred_fallthru
          _
      $region52: #{tpu_custom_call.1} parent=5 // pred_fallthru
        _
      %p1740 = scmp.le.s32.totalorder 2, %s25
      // Predicated region
      $region85: #{tpu_custom_call.1} parent=5 // pred_check
        %p1741 = pneg %p1740
      $region86: #{tpu_custom_call.1} parent=5 // pred_check_branch
        %1743 = sbr.rel (%p1741) target = $region88
      $region87: #{tpu_custom_call.1} parent=5 // pred_region
        %s1744 = ssub.s32 %s25, 2
        // Predicated region
        $region89: #{tpu_custom_call.1} parent=87 // pred_check
          %p1745 = pneg %p237
        $region90: #{tpu_custom_call.1} parent=87 // pred_check_branch
          %1747 = sbr.rel (%p1745) target = $region92
        $region91: #{tpu_custom_call.1} parent=87 // pred_region
          %s1748 = sand.u32 %s222, 1
          %s1749 = scalar_lea.sflag [#allocation4], %s1748
          %s1750 = sand.u32 %s222, 1
          %s1751 = smul.addr %s1750, 24
          %s1752 = scalar_lea.vmem [#allocation14], %s1751
          %1754 = dma.done %s1749, 384
        $region92: #{tpu_custom_call.1} parent=87 // pred_fallthru
          _
      $region88: #{tpu_custom_call.1} parent=5 // pred_fallthru
        _
    $region6: #{tpu_custom_call.1} parent=1 // loop_footer
      %s29 = sadd.s32 1, %s25
    $region7: #{tpu_custom_call.1} parent=1 // loop_footer_branch
      %24 = sbr.rel target = $region3
    $region8: #{tpu_custom_call.1} parent=1 // loop_exit
      _
    %1755 = vsyncpa [#allocation3], 1
    %s1756 = scalar_lea.sflag [#allocation3], 1
    %1757 = vsyncpa %s1756, 1
    %1758 = vsyncpa [#allocation6], 1
    %s1759 = scalar_lea.sflag [#allocation6], 1
    %1760 = vsyncpa %s1759, 1
    %1761 = vsyncpa [#allocation9], 1
    %1762 = vsyncpa [#allocation12], 1
    %1763 = vsyncpa [#allocation4], 1
    %s1764 = scalar_lea.sflag [#allocation4], 1
    %1765 = vsyncpa %s1764, 1

</llo_original>
